<compile_context>
chip_gen: v7x
topology: tpu7x:2x2x1
jax: 0.10.0
libtpu: 0.0.40
codegen_flags: <defaults>
</compile_context>

<pallas_src>
import math

import numpy as np
import jax
import jax.numpy as jnp
from jax import lax
from jax.experimental import pallas as pl
from jax.experimental.pallas import tpu as pltpu  # noqa: F401  (scaling path, see TODO)

# ----------------------------- configuration --------------------------------
B = 2            # batch
P = 4            # points
D = 3            # n_dims
S = P * (D + 1)  # interleaved sequence length = 16
BS = B * S       # batch folded into sublane axis = 32
E = 128          # n_embd
H = 4            # n_head
HD = E // H      # head_dim = 32
L = 2            # n_layer (kept small for the demo)
N_POS = S        # n_positions (GPT2 config gets 2 * n_positions)

EPS = 1e-5
CONST = -0.5 * math.log(2.0 * math.pi)
ATTN_SCALE = 1.0 / math.sqrt(HD)
GELU_C = math.sqrt(2.0 / math.pi)
NEG_INF = -1e30
OUT_W = 128      # lane-padded read_out width (col 0 = mean, col 1 = log_std)


# ------------------------------ in-kernel math -------------------------------
def _ln(x, w, b):
    mu = jnp.mean(x, axis=-1, keepdims=True)
    xc = x - mu
    var = jnp.mean(xc * xc, axis=-1, keepdims=True)
    return xc * lax.rsqrt(var + EPS) * w + b


def _gelu_new(x):
    return 0.5 * x * (1.0 + jnp.tanh(GELU_C * (x + 0.044715 * x * x * x)))


# ------------------------------- fused kernel --------------------------------
def fused_kernel(zs_ref, w_in_ref, embed_ref, mask_ref,
                 ln1w_ref, ln1b_ref, wqkv_ref, bqkv_ref, wo_ref, bo_ref,
                 ln2w_ref, ln2b_ref, wfc_ref, bfc_ref, wproj_ref, bproj_ref,
                 lnfw_ref, lnfb_ref, wout_ref, bout_ref,
                 out_ref):
    bf = jnp.bfloat16

    # ---- embed: read_in Linear(1, E);  (b_in + wpe) pre-tiled host-side -----
    h = zs_ref[...] * w_in_ref[...] + embed_ref[...]            # (BS, E) f32
    mask_bias = mask_ref[...]                                   # (BS, BS) 0 / -1e30

    # ---- transformer blocks --------------------------------------------------
    for l in range(L):
        # --- attention ---
        x = _ln(h, ln1w_ref[l], ln1b_ref[l]).astype(bf)         # (BS, E)
        qkv = jnp.dot(x, wqkv_ref[l],
                      preferred_element_type=jnp.float32) + bqkv_ref[l]   # (BS, 3E) f32
        heads = []
        for hh in range(H):
            q = qkv[:, hh * HD:(hh + 1) * HD].astype(bf)               # (BS, HD)
            k = qkv[:, E + hh * HD:E + (hh + 1) * HD].astype(bf)
            v = qkv[:, 2 * E + hh * HD:2 * E + (hh + 1) * HD].astype(bf)
            # q @ k^T without materializing the transpose
            s = lax.dot_general(q, k, (((1,), (1,)), ((), ())),
                                preferred_element_type=jnp.float32)
            s = s * ATTN_SCALE + mask_bias
            s = s - jnp.max(s, axis=-1, keepdims=True)
            p = jnp.exp(s)
            p = p * pl.reciprocal(jnp.sum(p, axis=-1, keepdims=True), approx=True)
            heads.append(jnp.dot(p.astype(bf), v,
                                 preferred_element_type=jnp.float32))   # (BS, HD)
        o_cat = jnp.concatenate(heads, axis=1).astype(bf)               # (BS, E)
        h = h + jnp.dot(o_cat, wo_ref[l],
                        preferred_element_type=jnp.float32) + bo_ref[l]

        # --- MLP ---
        x = _ln(h, ln2w_ref[l], ln2b_ref[l]).astype(bf)
        ff = jnp.dot(x, wfc_ref[l],
                     preferred_element_type=jnp.float32) + bfc_ref[l]   # (BS, 4E) f32
        ff = _gelu_new(ff).astype(bf)
        h = h + jnp.dot(ff, wproj_ref[l],
                        preferred_element_type=jnp.float32) + bproj_ref[l]

    # ---- head: final LN + read_out (lane-padded to OUT_W -> dense store) ----
    x = _ln(h, lnfw_ref[...], lnfb_ref[...]).astype(bf)
    out_ref[...] = (jnp.dot(x, wout_ref[...], preferred_element_type=jnp.float32)
                    + bout_ref[...])


def pallas_forward(zs_col, pp):
    return pl.pallas_call(
        fused_kernel,
        out_shape=jax.ShapeDtypeStruct((BS, OUT_W), jnp.float32),
    )(zs_col, pp["w_in"], pp["embed_const"], pp["mask_bias"],
      pp["ln1w"], pp["ln1b"], pp["wqkv"], pp["bqkv"], pp["wo"], pp["bo"],
      pp["ln2w"], pp["ln2b"], pp["wfc"], pp["bfc"], pp["wproj"], pp["bproj"],
      pp["lnf_w"], pp["lnf_b"], pp["w_out_pad"], pp["b_out_pad"])


# ----------------------- host-side parameter repacking ------------------------
def pack_params(params):
    layers = params["layers"]
    bf = jnp.bfloat16

    def stack(i):
        return jnp.stack([p[i] for p in layers])

    ln1w, ln1b = stack(0), stack(1)                  # (L, 1, E) f32
    wqkv, bqkv = stack(2).astype(bf), stack(3)       # (L, E, 3E) bf16, (L, 1, 3E) f32
    wo, bo = stack(4).astype(bf), stack(5)           # (L, E, E)  bf16, (L, 1, E)  f32
    ln2w, ln2b = stack(6), stack(7)                  # (L, 1, E) f32
    wfc, bfc = stack(8).astype(bf), stack(9)         # (L, E, 4E) bf16, (L, 1, 4E) f32
    wproj, bproj = stack(10).astype(bf), stack(11)   # (L, 4E, E) bf16, (L, 1, E)  f32

    # embed constant (b_in + wpe[:S]) tiled per batch element -> (BS, E), f32
    embed_const = jnp.tile(params["b_in"] + params["wpe"][:S], (B, 1))

    # block-diagonal causal mask as an additive bias (0 where allowed, -1e30 else)
    row = np.arange(BS)[:, None]
    col = np.arange(BS)[None, :]
    allowed = (row // S == col // S) & (row >= col)
    mask_bias = jnp.asarray(np.where(allowed, 0.0, NEG_INF), jnp.float32)  # (BS, BS)

    # lane-padded read_out: cols 0/1 hold Linear(E, 2), rest are zero
    w_out_pad = jnp.zeros((E, OUT_W), jnp.float32).at[:, :2].set(
        params["w_out"].T).astype(bf)
    b_out_pad = jnp.zeros((1, OUT_W), jnp.float32).at[:, :2].set(params["b_out"])

    return dict(
        w_in=params["w_in"], embed_const=embed_const, mask_bias=mask_bias,
        ln1w=ln1w, ln1b=ln1b, wqkv=wqkv, bqkv=bqkv, wo=wo, bo=bo,
        ln2w=ln2w, ln2b=ln2b, wfc=wfc, bfc=bfc, wproj=wproj, bproj=bproj,
        lnf_w=params["lnf_w"], lnf_b=params["lnf_b"],
        w_out_pad=w_out_pad, b_out_pad=b_out_pad,
    )


# ------------------------------- full forward ---------------------------------
def combine(xs, ys):
    # interleave x coords and y per point -> (B, S) flat sequence of scalars
    zs = jnp.concatenate([xs, ys[:, :, None]], axis=2)   # (B, P, D+1)
    return zs.reshape(B, S)


def forward(xs, ys, params):
    zs = combine(xs, ys)                              # (B, S)
    pp = pack_params(params)

    ms = pallas_forward(zs.reshape(BS, 1), pp)        # (BS, OUT_W)
    ms = ms.reshape(B, S, OUT_W)
    mean = ms[..., 0]                                 # (B, S)
    log_std = ms[..., 1]                              # (B, S)
    # log_ppd in the wrapper (the outputs are sliced here anyway)
    log_ppd = -0.5 * ((zs - mean) / jnp.exp(log_std)) ** 2 - log_std + CONST

    idx = np.arange(S)
    y_idx = np.nonzero(idx % (D + 1) == D - 1)[0]     # x2y_prediction
    x_idx = np.nonzero(idx % (D + 1) != D)[0]         # x2x_prediction
    return mean[:, y_idx], log_std[:, y_idx], log_ppd[:, x_idx]


# --------------------------- pure-JAX reference -------------------------------
def reference(xs, ys, params):
    hp = lax.Precision.HIGHEST
    zs = combine(xs, ys)
    h = (zs[:, :, None] * params["w_in"][0][None, None, :]
         + params["b_in"][0][None, None, :] + params["wpe"][:S][None])

    def ln(x, w, b):
        mu = x.mean(-1, keepdims=True)
        var = ((x - mu) ** 2).mean(-1, keepdims=True)
        return (x - mu) * lax.rsqrt(var + EPS) * w[0] + b[0]

    row = np.arange(S)[:, None]
    col = np.arange(S)[None, :]
    causal = jnp.asarray(row >= col)

    for (ln1w, ln1b, wqkv, bqkv, wo, bo, ln2w, ln2b, wfc, bfc, wproj,
         bproj) in params["layers"]:
        x = ln(h, ln1w, ln1b)
        qkv = jnp.einsum("bse,ef->bsf", x, wqkv, precision=hp) + bqkv[0]
        q, k, v = jnp.split(qkv, 3, axis=-1)
        q = q.reshape(B, S, H, HD).transpose(0, 2, 1, 3)
        k = k.reshape(B, S, H, HD).transpose(0, 2, 1, 3)
        v = v.reshape(B, S, H, HD).transpose(0, 2, 1, 3)
        s = jnp.einsum("bhqd,bhkd->bhqk", q, k, precision=hp) * ATTN_SCALE
        s = jnp.where(causal, s, NEG_INF)
        s = s - jnp.max(s, axis=-1, keepdims=True)
        p = jnp.exp(s)
        p = p / jnp.sum(p, axis=-1, keepdims=True)
        a = jnp.einsum("bhqk,bhkd->bhqd", p, v, precision=hp)
        a = a.transpose(0, 2, 1, 3).reshape(B, S, E)
        h = h + jnp.einsum("bse,ef->bsf", a, wo, precision=hp) + bo[0]
        x = ln(h, ln2w, ln2b)
        ff = jnp.einsum("bse,ef->bsf", x, wfc, precision=hp) + bfc[0]
        ff = _gelu_new(ff)
        h = h + jnp.einsum("bsf,fe->bse", ff, wproj, precision=hp) + bproj[0]

    x = ln(h, params["lnf_w"], params["lnf_b"])
    mean = jnp.sum(x * params["w_out"][0][None, None, :], -1) + params["b_out"][0, 0]
    log_std = jnp.sum(x * params["w_out"][1][None, None, :], -1) + params["b_out"][0, 1]
    log_ppd = -0.5 * ((zs - mean) / jnp.exp(log_std)) ** 2 - log_std + CONST

    idx = np.arange(S)
    y_idx = np.nonzero(idx % (D + 1) == D - 1)[0]
    x_idx = np.nonzero(idx % (D + 1) != D)[0]
    return mean[:, y_idx], log_std[:, y_idx], log_ppd[:, x_idx]


# ------------------------------ parameter init --------------------------------
def init_params(key):
    keys = jax.random.split(key, 4 + 4 * L)
    kit = iter(keys)
    nrm = lambda shape: 0.02 * jax.random.normal(next(kit), shape, jnp.float32)
    ones = lambda shape: jnp.ones(shape, jnp.float32)
    zeros = lambda shape: jnp.zeros(shape, jnp.float32)

    params = {
        "w_in": nrm((1, E)),                  # Linear(1, E).weight (squeezed)
        "b_in": zeros((1, E)),
        "wpe": nrm((2 * N_POS, E)),           # GPT2 positional table
        "lnf_w": ones((1, E)),
        "lnf_b": zeros((1, E)),
        "w_out": nrm((2, E)),                 # Linear(E, 2).weight (out, in)
        "b_out": nrm((1, 2)),
        "layers": [],
    }
    for _ in range(L):
        params["layers"].append((
            ones((1, E)), zeros((1, E)),                       # ln_1
            nrm((E, 3 * E)), zeros((1, 3 * E)),                # c_attn
            nrm((E, E)), zeros((1, E)),                        # c_proj (attn)
            ones((1, E)), zeros((1, E)),                       # ln_2
            nrm((E, 4 * E)), zeros((1, 4 * E)),                # mlp c_fc
            nrm((4 * E, E)), zeros((1, E)),                    # mlp c_proj
        ))
    return params


# ----------------------------------- main --------------------------------------
if __name__ == "__main__":
    key = jax.random.PRNGKey(0)
    kp, kx, ky = jax.random.split(key, 3)
    params = init_params(kp)

    xs = jax.random.normal(kx, (B, P, D), jnp.float32)
    ys = jax.random.normal(ky, (B, P), jnp.float32)

    outs = forward(xs, ys, params)
    outs = jax.block_until_ready(outs)

    refs = reference(xs, ys, params)
    # Tolerance widened vs the f32 Precision.HIGHEST reference because the
    # kernel uses bf16 matmul operands (f32 accumulation) per the perf review.
    for o, r in zip(outs, refs):
        np.testing.assert_allclose(np.asarray(o), np.asarray(r),
                                   rtol=2e-2, atol=2e-2)

    # shapes: mean/log_std -> (B, P), log_ppd -> (B, P * D)
    assert outs[0].shape == (B, P) and outs[1].shape == (B, P)
    assert outs[2].shape == (B, P * D)
    print("KERNEL_OK")
</pallas_src>

<mosaic_0001>
module attributes {stable_mosaic.version = 11 : i64} {
  func.func @fused_kernel(%arg0: memref<32x1xf32, #tpu.memory_space<vmem>>, %arg1: memref<1x128xf32, #tpu.memory_space<vmem>>, %arg2: memref<32x128xf32, #tpu.memory_space<vmem>>, %arg3: memref<32x32xf32, #tpu.memory_space<vmem>>, %arg4: memref<2x1x128xf32, #tpu.memory_space<vmem>>, %arg5: memref<2x1x128xf32, #tpu.memory_space<vmem>>, %arg6: memref<2x128x384xbf16, #tpu.memory_space<vmem>>, %arg7: memref<2x1x384xf32, #tpu.memory_space<vmem>>, %arg8: memref<2x128x128xbf16, #tpu.memory_space<vmem>>, %arg9: memref<2x1x128xf32, #tpu.memory_space<vmem>>, %arg10: memref<2x1x128xf32, #tpu.memory_space<vmem>>, %arg11: memref<2x1x128xf32, #tpu.memory_space<vmem>>, %arg12: memref<2x128x512xbf16, #tpu.memory_space<vmem>>, %arg13: memref<2x1x512xf32, #tpu.memory_space<vmem>>, %arg14: memref<2x512x128xbf16, #tpu.memory_space<vmem>>, %arg15: memref<2x1x128xf32, #tpu.memory_space<vmem>>, %arg16: memref<1x128xf32, #tpu.memory_space<vmem>>, %arg17: memref<1x128xf32, #tpu.memory_space<vmem>>, %arg18: memref<128x128xbf16, #tpu.memory_space<vmem>>, %arg19: memref<1x128xf32, #tpu.memory_space<vmem>>, %arg20: memref<32x128xf32, #tpu.memory_space<vmem>>) attributes {dimension_semantics = [], scalar_prefetch = 0 : i64, scratch_operands = 0 : i64, tpu.core_type = #tpu.core_type<tc>} {
    %c0 = arith.constant 0 : index
    %c0_0 = arith.constant 0 : index
    %0 = vector.load %arg0[%c0, %c0_0] : memref<32x1xf32, #tpu.memory_space<vmem>>, vector<32x1xf32>
    %c0_1 = arith.constant 0 : index
    %c0_2 = arith.constant 0 : index
    %1 = vector.load %arg1[%c0_1, %c0_2] : memref<1x128xf32, #tpu.memory_space<vmem>>, vector<1x128xf32>
    %2 = vector.broadcast %0 : vector<32x1xf32> to vector<32x128xf32>
    %3 = vector.broadcast %1 : vector<1x128xf32> to vector<32x128xf32>
    %4 = arith.mulf %2, %3 : vector<32x128xf32>
    %c0_3 = arith.constant 0 : index
    %c0_4 = arith.constant 0 : index
    %5 = vector.load %arg2[%c0_3, %c0_4] : memref<32x128xf32, #tpu.memory_space<vmem>>, vector<32x128xf32>
    %6 = arith.addf %4, %5 : vector<32x128xf32>
    %c0_5 = arith.constant 0 : index
    %c0_6 = arith.constant 0 : index
    %7 = vector.load %arg3[%c0_5, %c0_6] : memref<32x32xf32, #tpu.memory_space<vmem>>, vector<32x32xf32>
    %c0_7 = arith.constant 0 : index
    %c0_8 = arith.constant 0 : index
    %c0_9 = arith.constant 0 : index
    %8 = vector.load %arg4[%c0_7, %c0_8, %c0_9] : memref<2x1x128xf32, #tpu.memory_space<vmem>>, vector<1x1x128xf32>
    %9 = vector.shape_cast %8 : vector<1x1x128xf32> to vector<1x128xf32>
    %c0_10 = arith.constant 0 : index
    %c0_11 = arith.constant 0 : index
    %c0_12 = arith.constant 0 : index
    %10 = vector.load %arg5[%c0_10, %c0_11, %c0_12] : memref<2x1x128xf32, #tpu.memory_space<vmem>>, vector<1x1x128xf32>
    %11 = vector.shape_cast %10 : vector<1x1x128xf32> to vector<1x128xf32>
    %cst = arith.constant dense<0.000000e+00> : vector<32xf32>
    %12 = vector.multi_reduction <add>, %6, %cst [1] : vector<32x128xf32> to vector<32xf32>
    %13 = vector.shape_cast %12 : vector<32xf32> to vector<32x1xf32>
    %cst_13 = arith.constant 1.280000e+02 : f32
    %14 = vector.broadcast %cst_13 : f32 to vector<32x1xf32>
    %15 = arith.divf %13, %14 : vector<32x1xf32>
    %16 = vector.broadcast %15 : vector<32x1xf32> to vector<32x128xf32>
    %17 = arith.subf %6, %16 : vector<32x128xf32>
    %18 = arith.mulf %17, %17 : vector<32x128xf32>
    %cst_14 = arith.constant dense<0.000000e+00> : vector<32xf32>
    %19 = vector.multi_reduction <add>, %18, %cst_14 [1] : vector<32x128xf32> to vector<32xf32>
    %20 = vector.shape_cast %19 : vector<32xf32> to vector<32x1xf32>
    %cst_15 = arith.constant 1.280000e+02 : f32
    %21 = vector.broadcast %cst_15 : f32 to vector<32x1xf32>
    %22 = arith.divf %20, %21 : vector<32x1xf32>
    %cst_16 = arith.constant 9.99999974E-6 : f32
    %23 = vector.broadcast %cst_16 : f32 to vector<32x1xf32>
    %24 = arith.addf %22, %23 : vector<32x1xf32>
    %25 = math.rsqrt %24 : vector<32x1xf32>
    %26 = vector.broadcast %25 : vector<32x1xf32> to vector<32x128xf32>
    %27 = arith.mulf %17, %26 : vector<32x128xf32>
    %28 = vector.broadcast %9 : vector<1x128xf32> to vector<32x128xf32>
    %29 = arith.mulf %27, %28 : vector<32x128xf32>
    %30 = vector.broadcast %11 : vector<1x128xf32> to vector<32x128xf32>
    %31 = arith.addf %29, %30 : vector<32x128xf32>
    %32 = arith.truncf %31 : vector<32x128xf32> to vector<32x128xbf16>
    %c0_17 = arith.constant 0 : index
    %c0_18 = arith.constant 0 : index
    %c0_19 = arith.constant 0 : index
    %33 = vector.load %arg6[%c0_17, %c0_18, %c0_19] : memref<2x128x384xbf16, #tpu.memory_space<vmem>>, vector<1x128x384xbf16>
    %34 = vector.shape_cast %33 : vector<1x128x384xbf16> to vector<128x384xbf16>
    %cst_20 = arith.constant dense<0.000000e+00> : vector<32x384xf32>
    %35 = tpu.matmul %32, %34, %cst_20 {dimension_numbers = #tpu.dot_dimension_numbers<[1], [0], [0], [1], [0, 0, 1, 1], [], []>} : vector<32x128xbf16>, vector<128x384xbf16>, vector<32x384xf32> -> vector<32x384xf32>
    %c0_21 = arith.constant 0 : index
    %c0_22 = arith.constant 0 : index
    %c0_23 = arith.constant 0 : index
    %36 = vector.load %arg7[%c0_21, %c0_22, %c0_23] : memref<2x1x384xf32, #tpu.memory_space<vmem>>, vector<1x1x384xf32>
    %37 = vector.shape_cast %36 : vector<1x1x384xf32> to vector<1x384xf32>
    %38 = vector.broadcast %37 : vector<1x384xf32> to vector<32x384xf32>
    %39 = arith.addf %35, %38 : vector<32x384xf32>
    %40 = vector.extract_strided_slice %39 {offsets = [0, 0], sizes = [32, 32], strides = [1, 1]} : vector<32x384xf32> to vector<32x32xf32>
    %41 = arith.truncf %40 : vector<32x32xf32> to vector<32x32xbf16>
    %42 = vector.extract_strided_slice %39 {offsets = [0, 128], sizes = [32, 32], strides = [1, 1]} : vector<32x384xf32> to vector<32x32xf32>
    %43 = arith.truncf %42 : vector<32x32xf32> to vector<32x32xbf16>
    %44 = vector.extract_strided_slice %39 {offsets = [0, 256], sizes = [32, 32], strides = [1, 1]} : vector<32x384xf32> to vector<32x32xf32>
    %45 = arith.truncf %44 : vector<32x32xf32> to vector<32x32xbf16>
    %cst_24 = arith.constant dense<0.000000e+00> : vector<32x32xf32>
    %46 = tpu.matmul %41, %43, %cst_24 {dimension_numbers = #tpu.dot_dimension_numbers<[1], [1], [0], [0], [0, 0, 1, 0], [], []>} : vector<32x32xbf16>, vector<32x32xbf16>, vector<32x32xf32> -> vector<32x32xf32>
    %cst_25 = arith.constant 0.176776692 : f32
    %47 = vector.broadcast %cst_25 : f32 to vector<32x32xf32>
    %48 = arith.mulf %46, %47 : vector<32x32xf32>
    %49 = arith.addf %48, %7 : vector<32x32xf32>
    %cst_26 = arith.constant dense<0xFF800000> : vector<32xf32>
    %50 = vector.multi_reduction <maximumf>, %49, %cst_26 [1] : vector<32x32xf32> to vector<32xf32>
    %51 = vector.shape_cast %50 : vector<32xf32> to vector<32x1xf32>
    %52 = vector.broadcast %51 : vector<32x1xf32> to vector<32x32xf32>
    %53 = arith.subf %49, %52 : vector<32x32xf32>
    %54 = math.exp %53 : vector<32x32xf32>
    %cst_27 = arith.constant dense<0.000000e+00> : vector<32xf32>
    %55 = vector.multi_reduction <add>, %54, %cst_27 [1] : vector<32x32xf32> to vector<32xf32>
    %56 = vector.shape_cast %55 : vector<32xf32> to vector<32x1xf32>
    %57 = tpu.reciprocal %56 {approx = true} : vector<32x1xf32> -> vector<32x1xf32>
    %58 = vector.broadcast %57 : vector<32x1xf32> to vector<32x32xf32>
    %59 = arith.mulf %54, %58 : vector<32x32xf32>
    %60 = arith.truncf %59 : vector<32x32xf32> to vector<32x32xbf16>
    %cst_28 = arith.constant dense<0.000000e+00> : vector<32x32xf32>
    %61 = tpu.matmul %60, %45, %cst_28 {dimension_numbers = #tpu.dot_dimension_numbers<[1], [0], [0], [1], [0, 0, 1, 1], [], []>} : vector<32x32xbf16>, vector<32x32xbf16>, vector<32x32xf32> -> vector<32x32xf32>
    %62 = vector.extract_strided_slice %39 {offsets = [0, 32], sizes = [32, 32], strides = [1, 1]} : vector<32x384xf32> to vector<32x32xf32>
    %63 = arith.truncf %62 : vector<32x32xf32> to vector<32x32xbf16>
    %64 = vector.extract_strided_slice %39 {offsets = [0, 160], sizes = [32, 32], strides = [1, 1]} : vector<32x384xf32> to vector<32x32xf32>
    %65 = arith.truncf %64 : vector<32x32xf32> to vector<32x32xbf16>
    %66 = vector.extract_strided_slice %39 {offsets = [0, 288], sizes = [32, 32], strides = [1, 1]} : vector<32x384xf32> to vector<32x32xf32>
    %67 = arith.truncf %66 : vector<32x32xf32> to vector<32x32xbf16>
    %cst_29 = arith.constant dense<0.000000e+00> : vector<32x32xf32>
    %68 = tpu.matmul %63, %65, %cst_29 {dimension_numbers = #tpu.dot_dimension_numbers<[1], [1], [0], [0], [0, 0, 1, 0], [], []>} : vector<32x32xbf16>, vector<32x32xbf16>, vector<32x32xf32> -> vector<32x32xf32>
    %cst_30 = arith.constant 0.176776692 : f32
    %69 = vector.broadcast %cst_30 : f32 to vector<32x32xf32>
    %70 = arith.mulf %68, %69 : vector<32x32xf32>
    %71 = arith.addf %70, %7 : vector<32x32xf32>
    %cst_31 = arith.constant dense<0xFF800000> : vector<32xf32>
    %72 = vector.multi_reduction <maximumf>, %71, %cst_31 [1] : vector<32x32xf32> to vector<32xf32>
    %73 = vector.shape_cast %72 : vector<32xf32> to vector<32x1xf32>
    %74 = vector.broadcast %73 : vector<32x1xf32> to vector<32x32xf32>
    %75 = arith.subf %71, %74 : vector<32x32xf32>
    %76 = math.exp %75 : vector<32x32xf32>
    %cst_32 = arith.constant dense<0.000000e+00> : vector<32xf32>
    %77 = vector.multi_reduction <add>, %76, %cst_32 [1] : vector<32x32xf32> to vector<32xf32>
    %78 = vector.shape_cast %77 : vector<32xf32> to vector<32x1xf32>
    %79 = tpu.reciprocal %78 {approx = true} : vector<32x1xf32> -> vector<32x1xf32>
    %80 = vector.broadcast %79 : vector<32x1xf32> to vector<32x32xf32>
    %81 = arith.mulf %76, %80 : vector<32x32xf32>
    %82 = arith.truncf %81 : vector<32x32xf32> to vector<32x32xbf16>
    %cst_33 = arith.constant dense<0.000000e+00> : vector<32x32xf32>
    %83 = tpu.matmul %82, %67, %cst_33 {dimension_numbers = #tpu.dot_dimension_numbers<[1], [0], [0], [1], [0, 0, 1, 1], [], []>} : vector<32x32xbf16>, vector<32x32xbf16>, vector<32x32xf32> -> vector<32x32xf32>
    %84 = vector.extract_strided_slice %39 {offsets = [0, 64], sizes = [32, 32], strides = [1, 1]} : vector<32x384xf32> to vector<32x32xf32>
    %85 = arith.truncf %84 : vector<32x32xf32> to vector<32x32xbf16>
    %86 = vector.extract_strided_slice %39 {offsets = [0, 192], sizes = [32, 32], strides = [1, 1]} : vector<32x384xf32> to vector<32x32xf32>
    %87 = arith.truncf %86 : vector<32x32xf32> to vector<32x32xbf16>
    %88 = vector.extract_strided_slice %39 {offsets = [0, 320], sizes = [32, 32], strides = [1, 1]} : vector<32x384xf32> to vector<32x32xf32>
    %89 = arith.truncf %88 : vector<32x32xf32> to vector<32x32xbf16>
    %cst_34 = arith.constant dense<0.000000e+00> : vector<32x32xf32>
    %90 = tpu.matmul %85, %87, %cst_34 {dimension_numbers = #tpu.dot_dimension_numbers<[1], [1], [0], [0], [0, 0, 1, 0], [], []>} : vector<32x32xbf16>, vector<32x32xbf16>, vector<32x32xf32> -> vector<32x32xf32>
    %cst_35 = arith.constant 0.176776692 : f32
    %91 = vector.broadcast %cst_35 : f32 to vector<32x32xf32>
    %92 = arith.mulf %90, %91 : vector<32x32xf32>
    %93 = arith.addf %92, %7 : vector<32x32xf32>
    %cst_36 = arith.constant dense<0xFF800000> : vector<32xf32>
    %94 = vector.multi_reduction <maximumf>, %93, %cst_36 [1] : vector<32x32xf32> to vector<32xf32>
    %95 = vector.shape_cast %94 : vector<32xf32> to vector<32x1xf32>
    %96 = vector.broadcast %95 : vector<32x1xf32> to vector<32x32xf32>
    %97 = arith.subf %93, %96 : vector<32x32xf32>
    %98 = math.exp %97 : vector<32x32xf32>
    %cst_37 = arith.constant dense<0.000000e+00> : vector<32xf32>
    %99 = vector.multi_reduction <add>, %98, %cst_37 [1] : vector<32x32xf32> to vector<32xf32>
    %100 = vector.shape_cast %99 : vector<32xf32> to vector<32x1xf32>
    %101 = tpu.reciprocal %100 {approx = true} : vector<32x1xf32> -> vector<32x1xf32>
    %102 = vector.broadcast %101 : vector<32x1xf32> to vector<32x32xf32>
    %103 = arith.mulf %98, %102 : vector<32x32xf32>
    %104 = arith.truncf %103 : vector<32x32xf32> to vector<32x32xbf16>
    %cst_38 = arith.constant dense<0.000000e+00> : vector<32x32xf32>
    %105 = tpu.matmul %104, %89, %cst_38 {dimension_numbers = #tpu.dot_dimension_numbers<[1], [0], [0], [1], [0, 0, 1, 1], [], []>} : vector<32x32xbf16>, vector<32x32xbf16>, vector<32x32xf32> -> vector<32x32xf32>
    %106 = vector.extract_strided_slice %39 {offsets = [0, 96], sizes = [32, 32], strides = [1, 1]} : vector<32x384xf32> to vector<32x32xf32>
    %107 = arith.truncf %106 : vector<32x32xf32> to vector<32x32xbf16>
    %108 = vector.extract_strided_slice %39 {offsets = [0, 224], sizes = [32, 32], strides = [1, 1]} : vector<32x384xf32> to vector<32x32xf32>
    %109 = arith.truncf %108 : vector<32x32xf32> to vector<32x32xbf16>
    %110 = vector.extract_strided_slice %39 {offsets = [0, 352], sizes = [32, 32], strides = [1, 1]} : vector<32x384xf32> to vector<32x32xf32>
    %111 = arith.truncf %110 : vector<32x32xf32> to vector<32x32xbf16>
    %cst_39 = arith.constant dense<0.000000e+00> : vector<32x32xf32>
    %112 = tpu.matmul %107, %109, %cst_39 {dimension_numbers = #tpu.dot_dimension_numbers<[1], [1], [0], [0], [0, 0, 1, 0], [], []>} : vector<32x32xbf16>, vector<32x32xbf16>, vector<32x32xf32> -> vector<32x32xf32>
    %cst_40 = arith.constant 0.176776692 : f32
    %113 = vector.broadcast %cst_40 : f32 to vector<32x32xf32>
    %114 = arith.mulf %112, %113 : vector<32x32xf32>
    %115 = arith.addf %114, %7 : vector<32x32xf32>
    %cst_41 = arith.constant dense<0xFF800000> : vector<32xf32>
    %116 = vector.multi_reduction <maximumf>, %115, %cst_41 [1] : vector<32x32xf32> to vector<32xf32>
    %117 = vector.shape_cast %116 : vector<32xf32> to vector<32x1xf32>
    %118 = vector.broadcast %117 : vector<32x1xf32> to vector<32x32xf32>
    %119 = arith.subf %115, %118 : vector<32x32xf32>
    %120 = math.exp %119 : vector<32x32xf32>
    %cst_42 = arith.constant dense<0.000000e+00> : vector<32xf32>
    %121 = vector.multi_reduction <add>, %120, %cst_42 [1] : vector<32x32xf32> to vector<32xf32>
    %122 = vector.shape_cast %121 : vector<32xf32> to vector<32x1xf32>
    %123 = tpu.reciprocal %122 {approx = true} : vector<32x1xf32> -> vector<32x1xf32>
    %124 = vector.broadcast %123 : vector<32x1xf32> to vector<32x32xf32>
    %125 = arith.mulf %120, %124 : vector<32x32xf32>
    %126 = arith.truncf %125 : vector<32x32xf32> to vector<32x32xbf16>
    %cst_43 = arith.constant dense<0.000000e+00> : vector<32x32xf32>
    %127 = tpu.matmul %126, %111, %cst_43 {dimension_numbers = #tpu.dot_dimension_numbers<[1], [0], [0], [1], [0, 0, 1, 1], [], []>} : vector<32x32xbf16>, vector<32x32xbf16>, vector<32x32xf32> -> vector<32x32xf32>
    %128 = tpu.concatenate %61, %83, %105, %127 in 1 : vector<32x32xf32>, vector<32x32xf32>, vector<32x32xf32>, vector<32x32xf32> -> vector<32x128xf32>
    %129 = arith.truncf %128 : vector<32x128xf32> to vector<32x128xbf16>
    %c0_44 = arith.constant 0 : index
    %c0_45 = arith.constant 0 : index
    %c0_46 = arith.constant 0 : index
    %130 = vector.load %arg8[%c0_44, %c0_45, %c0_46] : memref<2x128x128xbf16, #tpu.memory_space<vmem>>, vector<1x128x128xbf16>
    %131 = vector.shape_cast %130 : vector<1x128x128xbf16> to vector<128x128xbf16>
    %cst_47 = arith.constant dense<0.000000e+00> : vector<32x128xf32>
    %132 = tpu.matmul %129, %131, %cst_47 {dimension_numbers = #tpu.dot_dimension_numbers<[1], [0], [0], [1], [0, 0, 1, 1], [], []>} : vector<32x128xbf16>, vector<128x128xbf16>, vector<32x128xf32> -> vector<32x128xf32>
    %133 = arith.addf %6, %132 : vector<32x128xf32>
    %c0_48 = arith.constant 0 : index
    %c0_49 = arith.constant 0 : index
    %c0_50 = arith.constant 0 : index
    %134 = vector.load %arg9[%c0_48, %c0_49, %c0_50] : memref<2x1x128xf32, #tpu.memory_space<vmem>>, vector<1x1x128xf32>
    %135 = vector.shape_cast %134 : vector<1x1x128xf32> to vector<1x128xf32>
    %136 = vector.broadcast %135 : vector<1x128xf32> to vector<32x128xf32>
    %137 = arith.addf %133, %136 : vector<32x128xf32>
    %c0_51 = arith.constant 0 : index
    %c0_52 = arith.constant 0 : index
    %c0_53 = arith.constant 0 : index
    %138 = vector.load %arg10[%c0_51, %c0_52, %c0_53] : memref<2x1x128xf32, #tpu.memory_space<vmem>>, vector<1x1x128xf32>
    %139 = vector.shape_cast %138 : vector<1x1x128xf32> to vector<1x128xf32>
    %c0_54 = arith.constant 0 : index
    %c0_55 = arith.constant 0 : index
    %c0_56 = arith.constant 0 : index
    %140 = vector.load %arg11[%c0_54, %c0_55, %c0_56] : memref<2x1x128xf32, #tpu.memory_space<vmem>>, vector<1x1x128xf32>
    %141 = vector.shape_cast %140 : vector<1x1x128xf32> to vector<1x128xf32>
    %cst_57 = arith.constant dense<0.000000e+00> : vector<32xf32>
    %142 = vector.multi_reduction <add>, %137, %cst_57 [1] : vector<32x128xf32> to vector<32xf32>
    %143 = vector.shape_cast %142 : vector<32xf32> to vector<32x1xf32>
    %cst_58 = arith.constant 1.280000e+02 : f32
    %144 = vector.broadcast %cst_58 : f32 to vector<32x1xf32>
    %145 = arith.divf %143, %144 : vector<32x1xf32>
    %146 = vector.broadcast %145 : vector<32x1xf32> to vector<32x128xf32>
    %147 = arith.subf %137, %146 : vector<32x128xf32>
    %148 = arith.mulf %147, %147 : vector<32x128xf32>
    %cst_59 = arith.constant dense<0.000000e+00> : vector<32xf32>
    %149 = vector.multi_reduction <add>, %148, %cst_59 [1] : vector<32x128xf32> to vector<32xf32>
    %150 = vector.shape_cast %149 : vector<32xf32> to vector<32x1xf32>
    %cst_60 = arith.constant 1.280000e+02 : f32
    %151 = vector.broadcast %cst_60 : f32 to vector<32x1xf32>
    %152 = arith.divf %150, %151 : vector<32x1xf32>
    %cst_61 = arith.constant 9.99999974E-6 : f32
    %153 = vector.broadcast %cst_61 : f32 to vector<32x1xf32>
    %154 = arith.addf %152, %153 : vector<32x1xf32>
    %155 = math.rsqrt %154 : vector<32x1xf32>
    %156 = vector.broadcast %155 : vector<32x1xf32> to vector<32x128xf32>
    %157 = arith.mulf %147, %156 : vector<32x128xf32>
    %158 = vector.broadcast %139 : vector<1x128xf32> to vector<32x128xf32>
    %159 = arith.mulf %157, %158 : vector<32x128xf32>
    %160 = vector.broadcast %141 : vector<1x128xf32> to vector<32x128xf32>
    %161 = arith.addf %159, %160 : vector<32x128xf32>
    %162 = arith.truncf %161 : vector<32x128xf32> to vector<32x128xbf16>
    %c0_62 = arith.constant 0 : index
    %c0_63 = arith.constant 0 : index
    %c0_64 = arith.constant 0 : index
    %163 = vector.load %arg12[%c0_62, %c0_63, %c0_64] : memref<2x128x512xbf16, #tpu.memory_space<vmem>>, vector<1x128x512xbf16>
    %164 = vector.shape_cast %163 : vector<1x128x512xbf16> to vector<128x512xbf16>
    %cst_65 = arith.constant dense<0.000000e+00> : vector<32x512xf32>
    %165 = tpu.matmul %162, %164, %cst_65 {dimension_numbers = #tpu.dot_dimension_numbers<[1], [0], [0], [1], [0, 0, 1, 1], [], []>} : vector<32x128xbf16>, vector<128x512xbf16>, vector<32x512xf32> -> vector<32x512xf32>
    %c0_66 = arith.constant 0 : index
    %c0_67 = arith.constant 0 : index
    %c0_68 = arith.constant 0 : index
    %166 = vector.load %arg13[%c0_66, %c0_67, %c0_68] : memref<2x1x512xf32, #tpu.memory_space<vmem>>, vector<1x1x512xf32>
    %167 = vector.shape_cast %166 : vector<1x1x512xf32> to vector<1x512xf32>
    %168 = vector.broadcast %167 : vector<1x512xf32> to vector<32x512xf32>
    %169 = arith.addf %165, %168 : vector<32x512xf32>
    %cst_69 = arith.constant 5.000000e-01 : f32
    %170 = vector.broadcast %cst_69 : f32 to vector<32x512xf32>
    %171 = arith.mulf %170, %169 : vector<32x512xf32>
    %cst_70 = arith.constant 4.471500e-02 : f32
    %172 = vector.broadcast %cst_70 : f32 to vector<32x512xf32>
    %173 = arith.mulf %172, %169 : vector<32x512xf32>
    %174 = arith.mulf %173, %169 : vector<32x512xf32>
    %175 = arith.mulf %174, %169 : vector<32x512xf32>
    %176 = arith.addf %169, %175 : vector<32x512xf32>
    %cst_71 = arith.constant 0.797884583 : f32
    %177 = vector.broadcast %cst_71 : f32 to vector<32x512xf32>
    %178 = arith.mulf %177, %176 : vector<32x512xf32>
    %179 = math.tanh %178 : vector<32x512xf32>
    %cst_72 = arith.constant 1.000000e+00 : f32
    %180 = vector.broadcast %cst_72 : f32 to vector<32x512xf32>
    %181 = arith.addf %180, %179 : vector<32x512xf32>
    %182 = arith.mulf %171, %181 : vector<32x512xf32>
    %183 = arith.truncf %182 : vector<32x512xf32> to vector<32x512xbf16>
    %c0_73 = arith.constant 0 : index
    %c0_74 = arith.constant 0 : index
    %c0_75 = arith.constant 0 : index
    %184 = vector.load %arg14[%c0_73, %c0_74, %c0_75] : memref<2x512x128xbf16, #tpu.memory_space<vmem>>, vector<1x512x128xbf16>
    %185 = vector.shape_cast %184 : vector<1x512x128xbf16> to vector<512x128xbf16>
    %cst_76 = arith.constant dense<0.000000e+00> : vector<32x128xf32>
    %186 = tpu.matmul %183, %185, %cst_76 {dimension_numbers = #tpu.dot_dimension_numbers<[1], [0], [0], [1], [0, 0, 1, 1], [], []>} : vector<32x512xbf16>, vector<512x128xbf16>, vector<32x128xf32> -> vector<32x128xf32>
    %187 = arith.addf %137, %186 : vector<32x128xf32>
    %c0_77 = arith.constant 0 : index
    %c0_78 = arith.constant 0 : index
    %c0_79 = arith.constant 0 : index
    %188 = vector.load %arg15[%c0_77, %c0_78, %c0_79] : memref<2x1x128xf32, #tpu.memory_space<vmem>>, vector<1x1x128xf32>
    %189 = vector.shape_cast %188 : vector<1x1x128xf32> to vector<1x128xf32>
    %190 = vector.broadcast %189 : vector<1x128xf32> to vector<32x128xf32>
    %191 = arith.addf %187, %190 : vector<32x128xf32>
    %c1 = arith.constant 1 : index
    %c0_80 = arith.constant 0 : index
    %c0_81 = arith.constant 0 : index
    %192 = vector.load %arg4[%c1, %c0_80, %c0_81] : memref<2x1x128xf32, #tpu.memory_space<vmem>>, vector<1x1x128xf32>
    %193 = vector.shape_cast %192 : vector<1x1x128xf32> to vector<1x128xf32>
    %c1_82 = arith.constant 1 : index
    %c0_83 = arith.constant 0 : index
    %c0_84 = arith.constant 0 : index
    %194 = vector.load %arg5[%c1_82, %c0_83, %c0_84] : memref<2x1x128xf32, #tpu.memory_space<vmem>>, vector<1x1x128xf32>
    %195 = vector.shape_cast %194 : vector<1x1x128xf32> to vector<1x128xf32>
    %cst_85 = arith.constant dense<0.000000e+00> : vector<32xf32>
    %196 = vector.multi_reduction <add>, %191, %cst_85 [1] : vector<32x128xf32> to vector<32xf32>
    %197 = vector.shape_cast %196 : vector<32xf32> to vector<32x1xf32>
    %cst_86 = arith.constant 1.280000e+02 : f32
    %198 = vector.broadcast %cst_86 : f32 to vector<32x1xf32>
    %199 = arith.divf %197, %198 : vector<32x1xf32>
    %200 = vector.broadcast %199 : vector<32x1xf32> to vector<32x128xf32>
    %201 = arith.subf %191, %200 : vector<32x128xf32>
    %202 = arith.mulf %201, %201 : vector<32x128xf32>
    %cst_87 = arith.constant dense<0.000000e+00> : vector<32xf32>
    %203 = vector.multi_reduction <add>, %202, %cst_87 [1] : vector<32x128xf32> to vector<32xf32>
    %204 = vector.shape_cast %203 : vector<32xf32> to vector<32x1xf32>
    %cst_88 = arith.constant 1.280000e+02 : f32
    %205 = vector.broadcast %cst_88 : f32 to vector<32x1xf32>
    %206 = arith.divf %204, %205 : vector<32x1xf32>
    %cst_89 = arith.constant 9.99999974E-6 : f32
    %207 = vector.broadcast %cst_89 : f32 to vector<32x1xf32>
    %208 = arith.addf %206, %207 : vector<32x1xf32>
    %209 = math.rsqrt %208 : vector<32x1xf32>
    %210 = vector.broadcast %209 : vector<32x1xf32> to vector<32x128xf32>
    %211 = arith.mulf %201, %210 : vector<32x128xf32>
    %212 = vector.broadcast %193 : vector<1x128xf32> to vector<32x128xf32>
    %213 = arith.mulf %211, %212 : vector<32x128xf32>
    %214 = vector.broadcast %195 : vector<1x128xf32> to vector<32x128xf32>
    %215 = arith.addf %213, %214 : vector<32x128xf32>
    %216 = arith.truncf %215 : vector<32x128xf32> to vector<32x128xbf16>
    %c1_90 = arith.constant 1 : index
    %c0_91 = arith.constant 0 : index
    %c0_92 = arith.constant 0 : index
    %217 = vector.load %arg6[%c1_90, %c0_91, %c0_92] : memref<2x128x384xbf16, #tpu.memory_space<vmem>>, vector<1x128x384xbf16>
    %218 = vector.shape_cast %217 : vector<1x128x384xbf16> to vector<128x384xbf16>
    %cst_93 = arith.constant dense<0.000000e+00> : vector<32x384xf32>
    %219 = tpu.matmul %216, %218, %cst_93 {dimension_numbers = #tpu.dot_dimension_numbers<[1], [0], [0], [1], [0, 0, 1, 1], [], []>} : vector<32x128xbf16>, vector<128x384xbf16>, vector<32x384xf32> -> vector<32x384xf32>
    %c1_94 = arith.constant 1 : index
    %c0_95 = arith.constant 0 : index
    %c0_96 = arith.constant 0 : index
    %220 = vector.load %arg7[%c1_94, %c0_95, %c0_96] : memref<2x1x384xf32, #tpu.memory_space<vmem>>, vector<1x1x384xf32>
    %221 = vector.shape_cast %220 : vector<1x1x384xf32> to vector<1x384xf32>
    %222 = vector.broadcast %221 : vector<1x384xf32> to vector<32x384xf32>
    %223 = arith.addf %219, %222 : vector<32x384xf32>
    %224 = vector.extract_strided_slice %223 {offsets = [0, 0], sizes = [32, 32], strides = [1, 1]} : vector<32x384xf32> to vector<32x32xf32>
    %225 = arith.truncf %224 : vector<32x32xf32> to vector<32x32xbf16>
    %226 = vector.extract_strided_slice %223 {offsets = [0, 128], sizes = [32, 32], strides = [1, 1]} : vector<32x384xf32> to vector<32x32xf32>
    %227 = arith.truncf %226 : vector<32x32xf32> to vector<32x32xbf16>
    %228 = vector.extract_strided_slice %223 {offsets = [0, 256], sizes = [32, 32], strides = [1, 1]} : vector<32x384xf32> to vector<32x32xf32>
    %229 = arith.truncf %228 : vector<32x32xf32> to vector<32x32xbf16>
    %cst_97 = arith.constant dense<0.000000e+00> : vector<32x32xf32>
    %230 = tpu.matmul %225, %227, %cst_97 {dimension_numbers = #tpu.dot_dimension_numbers<[1], [1], [0], [0], [0, 0, 1, 0], [], []>} : vector<32x32xbf16>, vector<32x32xbf16>, vector<32x32xf32> -> vector<32x32xf32>
    %cst_98 = arith.constant 0.176776692 : f32
    %231 = vector.broadcast %cst_98 : f32 to vector<32x32xf32>
    %232 = arith.mulf %230, %231 : vector<32x32xf32>
    %233 = arith.addf %232, %7 : vector<32x32xf32>
    %cst_99 = arith.constant dense<0xFF800000> : vector<32xf32>
    %234 = vector.multi_reduction <maximumf>, %233, %cst_99 [1] : vector<32x32xf32> to vector<32xf32>
    %235 = vector.shape_cast %234 : vector<32xf32> to vector<32x1xf32>
    %236 = vector.broadcast %235 : vector<32x1xf32> to vector<32x32xf32>
    %237 = arith.subf %233, %236 : vector<32x32xf32>
    %238 = math.exp %237 : vector<32x32xf32>
    %cst_100 = arith.constant dense<0.000000e+00> : vector<32xf32>
    %239 = vector.multi_reduction <add>, %238, %cst_100 [1] : vector<32x32xf32> to vector<32xf32>
    %240 = vector.shape_cast %239 : vector<32xf32> to vector<32x1xf32>
    %241 = tpu.reciprocal %240 {approx = true} : vector<32x1xf32> -> vector<32x1xf32>
    %242 = vector.broadcast %241 : vector<32x1xf32> to vector<32x32xf32>
    %243 = arith.mulf %238, %242 : vector<32x32xf32>
    %244 = arith.truncf %243 : vector<32x32xf32> to vector<32x32xbf16>
    %cst_101 = arith.constant dense<0.000000e+00> : vector<32x32xf32>
    %245 = tpu.matmul %244, %229, %cst_101 {dimension_numbers = #tpu.dot_dimension_numbers<[1], [0], [0], [1], [0, 0, 1, 1], [], []>} : vector<32x32xbf16>, vector<32x32xbf16>, vector<32x32xf32> -> vector<32x32xf32>
    %246 = vector.extract_strided_slice %223 {offsets = [0, 32], sizes = [32, 32], strides = [1, 1]} : vector<32x384xf32> to vector<32x32xf32>
    %247 = arith.truncf %246 : vector<32x32xf32> to vector<32x32xbf16>
    %248 = vector.extract_strided_slice %223 {offsets = [0, 160], sizes = [32, 32], strides = [1, 1]} : vector<32x384xf32> to vector<32x32xf32>
    %249 = arith.truncf %248 : vector<32x32xf32> to vector<32x32xbf16>
    %250 = vector.extract_strided_slice %223 {offsets = [0, 288], sizes = [32, 32], strides = [1, 1]} : vector<32x384xf32> to vector<32x32xf32>
    %251 = arith.truncf %250 : vector<32x32xf32> to vector<32x32xbf16>
    %cst_102 = arith.constant dense<0.000000e+00> : vector<32x32xf32>
    %252 = tpu.matmul %247, %249, %cst_102 {dimension_numbers = #tpu.dot_dimension_numbers<[1], [1], [0], [0], [0, 0, 1, 0], [], []>} : vector<32x32xbf16>, vector<32x32xbf16>, vector<32x32xf32> -> vector<32x32xf32>
    %cst_103 = arith.constant 0.176776692 : f32
    %253 = vector.broadcast %cst_103 : f32 to vector<32x32xf32>
    %254 = arith.mulf %252, %253 : vector<32x32xf32>
    %255 = arith.addf %254, %7 : vector<32x32xf32>
    %cst_104 = arith.constant dense<0xFF800000> : vector<32xf32>
    %256 = vector.multi_reduction <maximumf>, %255, %cst_104 [1] : vector<32x32xf32> to vector<32xf32>
    %257 = vector.shape_cast %256 : vector<32xf32> to vector<32x1xf32>
    %258 = vector.broadcast %257 : vector<32x1xf32> to vector<32x32xf32>
    %259 = arith.subf %255, %258 : vector<32x32xf32>
    %260 = math.exp %259 : vector<32x32xf32>
    %cst_105 = arith.constant dense<0.000000e+00> : vector<32xf32>
    %261 = vector.multi_reduction <add>, %260, %cst_105 [1] : vector<32x32xf32> to vector<32xf32>
    %262 = vector.shape_cast %261 : vector<32xf32> to vector<32x1xf32>
    %263 = tpu.reciprocal %262 {approx = true} : vector<32x1xf32> -> vector<32x1xf32>
    %264 = vector.broadcast %263 : vector<32x1xf32> to vector<32x32xf32>
    %265 = arith.mulf %260, %264 : vector<32x32xf32>
    %266 = arith.truncf %265 : vector<32x32xf32> to vector<32x32xbf16>
    %cst_106 = arith.constant dense<0.000000e+00> : vector<32x32xf32>
    %267 = tpu.matmul %266, %251, %cst_106 {dimension_numbers = #tpu.dot_dimension_numbers<[1], [0], [0], [1], [0, 0, 1, 1], [], []>} : vector<32x32xbf16>, vector<32x32xbf16>, vector<32x32xf32> -> vector<32x32xf32>
    %268 = vector.extract_strided_slice %223 {offsets = [0, 64], sizes = [32, 32], strides = [1, 1]} : vector<32x384xf32> to vector<32x32xf32>
    %269 = arith.truncf %268 : vector<32x32xf32> to vector<32x32xbf16>
    %270 = vector.extract_strided_slice %223 {offsets = [0, 192], sizes = [32, 32], strides = [1, 1]} : vector<32x384xf32> to vector<32x32xf32>
    %271 = arith.truncf %270 : vector<32x32xf32> to vector<32x32xbf16>
    %272 = vector.extract_strided_slice %223 {offsets = [0, 320], sizes = [32, 32], strides = [1, 1]} : vector<32x384xf32> to vector<32x32xf32>
    %273 = arith.truncf %272 : vector<32x32xf32> to vector<32x32xbf16>
    %cst_107 = arith.constant dense<0.000000e+00> : vector<32x32xf32>
    %274 = tpu.matmul %269, %271, %cst_107 {dimension_numbers = #tpu.dot_dimension_numbers<[1], [1], [0], [0], [0, 0, 1, 0], [], []>} : vector<32x32xbf16>, vector<32x32xbf16>, vector<32x32xf32> -> vector<32x32xf32>
    %cst_108 = arith.constant 0.176776692 : f32
    %275 = vector.broadcast %cst_108 : f32 to vector<32x32xf32>
    %276 = arith.mulf %274, %275 : vector<32x32xf32>
    %277 = arith.addf %276, %7 : vector<32x32xf32>
    %cst_109 = arith.constant dense<0xFF800000> : vector<32xf32>
    %278 = vector.multi_reduction <maximumf>, %277, %cst_109 [1] : vector<32x32xf32> to vector<32xf32>
    %279 = vector.shape_cast %278 : vector<32xf32> to vector<32x1xf32>
    %280 = vector.broadcast %279 : vector<32x1xf32> to vector<32x32xf32>
    %281 = arith.subf %277, %280 : vector<32x32xf32>
    %282 = math.exp %281 : vector<32x32xf32>
    %cst_110 = arith.constant dense<0.000000e+00> : vector<32xf32>
    %283 = vector.multi_reduction <add>, %282, %cst_110 [1] : vector<32x32xf32> to vector<32xf32>
    %284 = vector.shape_cast %283 : vector<32xf32> to vector<32x1xf32>
    %285 = tpu.reciprocal %284 {approx = true} : vector<32x1xf32> -> vector<32x1xf32>
    %286 = vector.broadcast %285 : vector<32x1xf32> to vector<32x32xf32>
    %287 = arith.mulf %282, %286 : vector<32x32xf32>
    %288 = arith.truncf %287 : vector<32x32xf32> to vector<32x32xbf16>
    %cst_111 = arith.constant dense<0.000000e+00> : vector<32x32xf32>
    %289 = tpu.matmul %288, %273, %cst_111 {dimension_numbers = #tpu.dot_dimension_numbers<[1], [0], [0], [1], [0, 0, 1, 1], [], []>} : vector<32x32xbf16>, vector<32x32xbf16>, vector<32x32xf32> -> vector<32x32xf32>
    %290 = vector.extract_strided_slice %223 {offsets = [0, 96], sizes = [32, 32], strides = [1, 1]} : vector<32x384xf32> to vector<32x32xf32>
    %291 = arith.truncf %290 : vector<32x32xf32> to vector<32x32xbf16>
    %292 = vector.extract_strided_slice %223 {offsets = [0, 224], sizes = [32, 32], strides = [1, 1]} : vector<32x384xf32> to vector<32x32xf32>
    %293 = arith.truncf %292 : vector<32x32xf32> to vector<32x32xbf16>
    %294 = vector.extract_strided_slice %223 {offsets = [0, 352], sizes = [32, 32], strides = [1, 1]} : vector<32x384xf32> to vector<32x32xf32>
    %295 = arith.truncf %294 : vector<32x32xf32> to vector<32x32xbf16>
    %cst_112 = arith.constant dense<0.000000e+00> : vector<32x32xf32>
    %296 = tpu.matmul %291, %293, %cst_112 {dimension_numbers = #tpu.dot_dimension_numbers<[1], [1], [0], [0], [0, 0, 1, 0], [], []>} : vector<32x32xbf16>, vector<32x32xbf16>, vector<32x32xf32> -> vector<32x32xf32>
    %cst_113 = arith.constant 0.176776692 : f32
    %297 = vector.broadcast %cst_113 : f32 to vector<32x32xf32>
    %298 = arith.mulf %296, %297 : vector<32x32xf32>
    %299 = arith.addf %298, %7 : vector<32x32xf32>
    %cst_114 = arith.constant dense<0xFF800000> : vector<32xf32>
    %300 = vector.multi_reduction <maximumf>, %299, %cst_114 [1] : vector<32x32xf32> to vector<32xf32>
    %301 = vector.shape_cast %300 : vector<32xf32> to vector<32x1xf32>
    %302 = vector.broadcast %301 : vector<32x1xf32> to vector<32x32xf32>
    %303 = arith.subf %299, %302 : vector<32x32xf32>
    %304 = math.exp %303 : vector<32x32xf32>
    %cst_115 = arith.constant dense<0.000000e+00> : vector<32xf32>
    %305 = vector.multi_reduction <add>, %304, %cst_115 [1] : vector<32x32xf32> to vector<32xf32>
    %306 = vector.shape_cast %305 : vector<32xf32> to vector<32x1xf32>
    %307 = tpu.reciprocal %306 {approx = true} : vector<32x1xf32> -> vector<32x1xf32>
    %308 = vector.broadcast %307 : vector<32x1xf32> to vector<32x32xf32>
    %309 = arith.mulf %304, %308 : vector<32x32xf32>
    %310 = arith.truncf %309 : vector<32x32xf32> to vector<32x32xbf16>
    %cst_116 = arith.constant dense<0.000000e+00> : vector<32x32xf32>
    %311 = tpu.matmul %310, %295, %cst_116 {dimension_numbers = #tpu.dot_dimension_numbers<[1], [0], [0], [1], [0, 0, 1, 1], [], []>} : vector<32x32xbf16>, vector<32x32xbf16>, vector<32x32xf32> -> vector<32x32xf32>
    %312 = tpu.concatenate %245, %267, %289, %311 in 1 : vector<32x32xf32>, vector<32x32xf32>, vector<32x32xf32>, vector<32x32xf32> -> vector<32x128xf32>
    %313 = arith.truncf %312 : vector<32x128xf32> to vector<32x128xbf16>
    %c1_117 = arith.constant 1 : index
    %c0_118 = arith.constant 0 : index
    %c0_119 = arith.constant 0 : index
    %314 = vector.load %arg8[%c1_117, %c0_118, %c0_119] : memref<2x128x128xbf16, #tpu.memory_space<vmem>>, vector<1x128x128xbf16>
    %315 = vector.shape_cast %314 : vector<1x128x128xbf16> to vector<128x128xbf16>
    %cst_120 = arith.constant dense<0.000000e+00> : vector<32x128xf32>
    %316 = tpu.matmul %313, %315, %cst_120 {dimension_numbers = #tpu.dot_dimension_numbers<[1], [0], [0], [1], [0, 0, 1, 1], [], []>} : vector<32x128xbf16>, vector<128x128xbf16>, vector<32x128xf32> -> vector<32x128xf32>
    %317 = arith.addf %191, %316 : vector<32x128xf32>
    %c1_121 = arith.constant 1 : index
    %c0_122 = arith.constant 0 : index
    %c0_123 = arith.constant 0 : index
    %318 = vector.load %arg9[%c1_121, %c0_122, %c0_123] : memref<2x1x128xf32, #tpu.memory_space<vmem>>, vector<1x1x128xf32>
    %319 = vector.shape_cast %318 : vector<1x1x128xf32> to vector<1x128xf32>
    %320 = vector.broadcast %319 : vector<1x128xf32> to vector<32x128xf32>
    %321 = arith.addf %317, %320 : vector<32x128xf32>
    %c1_124 = arith.constant 1 : index
    %c0_125 = arith.constant 0 : index
    %c0_126 = arith.constant 0 : index
    %322 = vector.load %arg10[%c1_124, %c0_125, %c0_126] : memref<2x1x128xf32, #tpu.memory_space<vmem>>, vector<1x1x128xf32>
    %323 = vector.shape_cast %322 : vector<1x1x128xf32> to vector<1x128xf32>
    %c1_127 = arith.constant 1 : index
    %c0_128 = arith.constant 0 : index
    %c0_129 = arith.constant 0 : index
    %324 = vector.load %arg11[%c1_127, %c0_128, %c0_129] : memref<2x1x128xf32, #tpu.memory_space<vmem>>, vector<1x1x128xf32>
    %325 = vector.shape_cast %324 : vector<1x1x128xf32> to vector<1x128xf32>
    %cst_130 = arith.constant dense<0.000000e+00> : vector<32xf32>
    %326 = vector.multi_reduction <add>, %321, %cst_130 [1] : vector<32x128xf32> to vector<32xf32>
    %327 = vector.shape_cast %326 : vector<32xf32> to vector<32x1xf32>
    %cst_131 = arith.constant 1.280000e+02 : f32
    %328 = vector.broadcast %cst_131 : f32 to vector<32x1xf32>
    %329 = arith.divf %327, %328 : vector<32x1xf32>
    %330 = vector.broadcast %329 : vector<32x1xf32> to vector<32x128xf32>
    %331 = arith.subf %321, %330 : vector<32x128xf32>
    %332 = arith.mulf %331, %331 : vector<32x128xf32>
    %cst_132 = arith.constant dense<0.000000e+00> : vector<32xf32>
    %333 = vector.multi_reduction <add>, %332, %cst_132 [1] : vector<32x128xf32> to vector<32xf32>
    %334 = vector.shape_cast %333 : vector<32xf32> to vector<32x1xf32>
    %cst_133 = arith.constant 1.280000e+02 : f32
    %335 = vector.broadcast %cst_133 : f32 to vector<32x1xf32>
    %336 = arith.divf %334, %335 : vector<32x1xf32>
    %cst_134 = arith.constant 9.99999974E-6 : f32
    %337 = vector.broadcast %cst_134 : f32 to vector<32x1xf32>
    %338 = arith.addf %336, %337 : vector<32x1xf32>
    %339 = math.rsqrt %338 : vector<32x1xf32>
    %340 = vector.broadcast %339 : vector<32x1xf32> to vector<32x128xf32>
    %341 = arith.mulf %331, %340 : vector<32x128xf32>
    %342 = vector.broadcast %323 : vector<1x128xf32> to vector<32x128xf32>
    %343 = arith.mulf %341, %342 : vector<32x128xf32>
    %344 = vector.broadcast %325 : vector<1x128xf32> to vector<32x128xf32>
    %345 = arith.addf %343, %344 : vector<32x128xf32>
    %346 = arith.truncf %345 : vector<32x128xf32> to vector<32x128xbf16>
    %c1_135 = arith.constant 1 : index
    %c0_136 = arith.constant 0 : index
    %c0_137 = arith.constant 0 : index
    %347 = vector.load %arg12[%c1_135, %c0_136, %c0_137] : memref<2x128x512xbf16, #tpu.memory_space<vmem>>, vector<1x128x512xbf16>
    %348 = vector.shape_cast %347 : vector<1x128x512xbf16> to vector<128x512xbf16>
    %cst_138 = arith.constant dense<0.000000e+00> : vector<32x512xf32>
    %349 = tpu.matmul %346, %348, %cst_138 {dimension_numbers = #tpu.dot_dimension_numbers<[1], [0], [0], [1], [0, 0, 1, 1], [], []>} : vector<32x128xbf16>, vector<128x512xbf16>, vector<32x512xf32> -> vector<32x512xf32>
    %c1_139 = arith.constant 1 : index
    %c0_140 = arith.constant 0 : index
    %c0_141 = arith.constant 0 : index
    %350 = vector.load %arg13[%c1_139, %c0_140, %c0_141] : memref<2x1x512xf32, #tpu.memory_space<vmem>>, vector<1x1x512xf32>
    %351 = vector.shape_cast %350 : vector<1x1x512xf32> to vector<1x512xf32>
    %352 = vector.broadcast %351 : vector<1x512xf32> to vector<32x512xf32>
    %353 = arith.addf %349, %352 : vector<32x512xf32>
    %cst_142 = arith.constant 5.000000e-01 : f32
    %354 = vector.broadcast %cst_142 : f32 to vector<32x512xf32>
    %355 = arith.mulf %354, %353 : vector<32x512xf32>
    %cst_143 = arith.constant 4.471500e-02 : f32
    %356 = vector.broadcast %cst_143 : f32 to vector<32x512xf32>
    %357 = arith.mulf %356, %353 : vector<32x512xf32>
    %358 = arith.mulf %357, %353 : vector<32x512xf32>
    %359 = arith.mulf %358, %353 : vector<32x512xf32>
    %360 = arith.addf %353, %359 : vector<32x512xf32>
    %cst_144 = arith.constant 0.797884583 : f32
    %361 = vector.broadcast %cst_144 : f32 to vector<32x512xf32>
    %362 = arith.mulf %361, %360 : vector<32x512xf32>
    %363 = math.tanh %362 : vector<32x512xf32>
    %cst_145 = arith.constant 1.000000e+00 : f32
    %364 = vector.broadcast %cst_145 : f32 to vector<32x512xf32>
    %365 = arith.addf %364, %363 : vector<32x512xf32>
    %366 = arith.mulf %355, %365 : vector<32x512xf32>
    %367 = arith.truncf %366 : vector<32x512xf32> to vector<32x512xbf16>
    %c1_146 = arith.constant 1 : index
    %c0_147 = arith.constant 0 : index
    %c0_148 = arith.constant 0 : index
    %368 = vector.load %arg14[%c1_146, %c0_147, %c0_148] : memref<2x512x128xbf16, #tpu.memory_space<vmem>>, vector<1x512x128xbf16>
    %369 = vector.shape_cast %368 : vector<1x512x128xbf16> to vector<512x128xbf16>
    %cst_149 = arith.constant dense<0.000000e+00> : vector<32x128xf32>
    %370 = tpu.matmul %367, %369, %cst_149 {dimension_numbers = #tpu.dot_dimension_numbers<[1], [0], [0], [1], [0, 0, 1, 1], [], []>} : vector<32x512xbf16>, vector<512x128xbf16>, vector<32x128xf32> -> vector<32x128xf32>
    %371 = arith.addf %321, %370 : vector<32x128xf32>
    %c1_150 = arith.constant 1 : index
    %c0_151 = arith.constant 0 : index
    %c0_152 = arith.constant 0 : index
    %372 = vector.load %arg15[%c1_150, %c0_151, %c0_152] : memref<2x1x128xf32, #tpu.memory_space<vmem>>, vector<1x1x128xf32>
    %373 = vector.shape_cast %372 : vector<1x1x128xf32> to vector<1x128xf32>
    %374 = vector.broadcast %373 : vector<1x128xf32> to vector<32x128xf32>
    %375 = arith.addf %371, %374 : vector<32x128xf32>
    %c0_153 = arith.constant 0 : index
    %c0_154 = arith.constant 0 : index
    %376 = vector.load %arg16[%c0_153, %c0_154] : memref<1x128xf32, #tpu.memory_space<vmem>>, vector<1x128xf32>
    %c0_155 = arith.constant 0 : index
    %c0_156 = arith.constant 0 : index
    %377 = vector.load %arg17[%c0_155, %c0_156] : memref<1x128xf32, #tpu.memory_space<vmem>>, vector<1x128xf32>
    %cst_157 = arith.constant dense<0.000000e+00> : vector<32xf32>
    %378 = vector.multi_reduction <add>, %375, %cst_157 [1] : vector<32x128xf32> to vector<32xf32>
    %379 = vector.shape_cast %378 : vector<32xf32> to vector<32x1xf32>
    %cst_158 = arith.constant 1.280000e+02 : f32
    %380 = vector.broadcast %cst_158 : f32 to vector<32x1xf32>
    %381 = arith.divf %379, %380 : vector<32x1xf32>
    %382 = vector.broadcast %381 : vector<32x1xf32> to vector<32x128xf32>
    %383 = arith.subf %375, %382 : vector<32x128xf32>
    %384 = arith.mulf %383, %383 : vector<32x128xf32>
    %cst_159 = arith.constant dense<0.000000e+00> : vector<32xf32>
    %385 = vector.multi_reduction <add>, %384, %cst_159 [1] : vector<32x128xf32> to vector<32xf32>
    %386 = vector.shape_cast %385 : vector<32xf32> to vector<32x1xf32>
    %cst_160 = arith.constant 1.280000e+02 : f32
    %387 = vector.broadcast %cst_160 : f32 to vector<32x1xf32>
    %388 = arith.divf %386, %387 : vector<32x1xf32>
    %cst_161 = arith.constant 9.99999974E-6 : f32
    %389 = vector.broadcast %cst_161 : f32 to vector<32x1xf32>
    %390 = arith.addf %388, %389 : vector<32x1xf32>
    %391 = math.rsqrt %390 : vector<32x1xf32>
    %392 = vector.broadcast %391 : vector<32x1xf32> to vector<32x128xf32>
    %393 = arith.mulf %383, %392 : vector<32x128xf32>
    %394 = vector.broadcast %376 : vector<1x128xf32> to vector<32x128xf32>
    %395 = arith.mulf %393, %394 : vector<32x128xf32>
    %396 = vector.broadcast %377 : vector<1x128xf32> to vector<32x128xf32>
    %397 = arith.addf %395, %396 : vector<32x128xf32>
    %398 = arith.truncf %397 : vector<32x128xf32> to vector<32x128xbf16>
    %c0_162 = arith.constant 0 : index
    %c0_163 = arith.constant 0 : index
    %399 = vector.load %arg18[%c0_162, %c0_163] : memref<128x128xbf16, #tpu.memory_space<vmem>>, vector<128x128xbf16>
    %cst_164 = arith.constant dense<0.000000e+00> : vector<32x128xf32>
    %400 = tpu.matmul %398, %399, %cst_164 {dimension_numbers = #tpu.dot_dimension_numbers<[1], [0], [0], [1], [0, 0, 1, 1], [], []>} : vector<32x128xbf16>, vector<128x128xbf16>, vector<32x128xf32> -> vector<32x128xf32>
    %c0_165 = arith.constant 0 : index
    %c0_166 = arith.constant 0 : index
    %401 = vector.load %arg19[%c0_165, %c0_166] : memref<1x128xf32, #tpu.memory_space<vmem>>, vector<1x128xf32>
    %402 = vector.broadcast %401 : vector<1x128xf32> to vector<32x128xf32>
    %403 = arith.addf %400, %402 : vector<32x128xf32>
    %c0_167 = arith.constant 0 : index
    %c0_168 = arith.constant 0 : index
    %404 = vector.load %arg20[%c0_167, %c0_168] : memref<32x128xf32, #tpu.memory_space<vmem>>, vector<32x128xf32>
    tpu.vector_store %arg20[%c0_167, %c0_168], %403 {strides = array<i32>} : memref<32x128xf32, #tpu.memory_space<vmem>>, vector<32x128xf32>,
    return
  }
}

</mosaic_0001>

<llo_original>
// kernel: tpu_custom_call.1
$region0: #{tpu_custom_call.1}
  #allocation0 [shape = 'u32[]', space=smem, size = 0x4, offset = 0x4, fixed_abs, tag = 'smem constant byte address 0x4 - core index']
  #allocation1 [shape = 'u32[144,128]{1,0:T(1,128)}', space=vmem, size = 0x12000, scoped, tag = 'internal scratch']
  %s0 = inlined_call_operand.vmem [shape: f32[32,1], index: 0, kind: input, shape index: {}]
  %s1 = inlined_call_operand.vmem [shape: f32[1,128], index: 1, kind: input, shape index: {}]
  %s2 = inlined_call_operand.vmem [shape: f32[32,128], index: 2, kind: input, shape index: {}]
  %s3 = inlined_call_operand.hbm [shape: f32[32,32], index: 3, kind: input, shape index: {}]
  %s4 = inlined_call_operand.vmem [shape: f32[2,1,128], index: 4, kind: input, shape index: {}]
  %s5 = inlined_call_operand.vmem [shape: f32[2,1,128], index: 5, kind: input, shape index: {}]
  %s6 = inlined_call_operand.hbm [shape: bf16[2,128,384], index: 6, kind: input, shape index: {}]
  %s7 = inlined_call_operand.hbm [shape: f32[2,1,384], index: 7, kind: input, shape index: {}]
  %s8 = inlined_call_operand.hbm [shape: bf16[2,128,128], index: 8, kind: input, shape index: {}]
  %s9 = inlined_call_operand.hbm [shape: f32[2,1,128], index: 9, kind: input, shape index: {}]
  %s10 = inlined_call_operand.hbm [shape: f32[2,1,128], index: 10, kind: input, shape index: {}]
  %s11 = inlined_call_operand.hbm [shape: f32[2,1,128], index: 11, kind: input, shape index: {}]
  %s12 = inlined_call_operand.hbm [shape: bf16[2,128,512], index: 12, kind: input, shape index: {}]
  %s13 = inlined_call_operand.hbm [shape: f32[2,1,512], index: 13, kind: input, shape index: {}]
  %s14 = inlined_call_operand.hbm [shape: bf16[2,512,128], index: 14, kind: input, shape index: {}]
  %s15 = inlined_call_operand.hbm [shape: f32[2,1,128], index: 15, kind: input, shape index: {}]
  %s16 = inlined_call_operand.hbm [shape: f32[1,128], index: 16, kind: input, shape index: {}]
  %s17 = inlined_call_operand.hbm [shape: f32[1,128], index: 17, kind: input, shape index: {}]
  %s18 = inlined_call_operand.vmem [shape: bf16[128,128], index: 18, kind: input, shape index: {}]
  %s19 = inlined_call_operand.vmem [shape: f32[1,128], index: 19, kind: input, shape index: {}]
  %s20 = inlined_call_operand.hbm [shape: f32[32,128], index: 20, kind: output, shape index: {}]
  %s21 = sld [smem:[#allocation0]]
  $region142: #{tpu_custom_call.1} parent=0
    _
  %s23 = ssub.s32 1, %s21
  %s24 = scalar_select 0, %s23, %s21
  $region1: #{tpu_custom_call.1} parent=0
    #allocation2 [shape = 'u8[16384]{0}', space=vmem, size = 0x4000, scoped, tag = 'input window, operand 3, single buffered']
    #allocation3 [shape = 's32[1]{0}', space=sflag, size = 0x4, scoped, tag = 'scoped memory for tpu_custom_call.1']
    #allocation4 [shape = 's32[1]{0}', space=sflag, size = 0x4, scoped, tag = 'scoped memory for tpu_custom_call.1']
    #allocation5 [shape = 'u8[196608]{0}', space=vmem, size = 0x30000, scoped, tag = 'input window, operand 6, single buffered']
    #allocation6 [shape = 's32[1]{0}', space=sflag, size = 0x4, scoped, tag = 'scoped memory for tpu_custom_call.1']
    #allocation7 [shape = 'u8[3072]{0}', space=vmem, size = 0xc00, scoped, tag = 'input window, operand 7, single buffered']
    #allocation8 [shape = 'u8[65536]{0}', space=vmem, size = 0x10000, scoped, tag = 'input window, operand 8, single buffered']
    #allocation9 [shape = 's32[1]{0}', space=sflag, size = 0x4, scoped, tag = 'scoped memory for tpu_custom_call.1']
    #allocation10 [shape = 'u8[1024]{0}', space=vmem, size = 0x400, scoped, tag = 'input window, operand 9, single buffered']
    #allocation11 [shape = 'u8[1024]{0}', space=vmem, size = 0x400, scoped, tag = 'input window, operand 10, single buffered']
    #allocation12 [shape = 's32[1]{0}', space=sflag, size = 0x4, scoped, tag = 'scoped memory for tpu_custom_call.1']
    #allocation13 [shape = 'u8[1024]{0}', space=vmem, size = 0x400, scoped, tag = 'input window, operand 11, single buffered']
    #allocation14 [shape = 'u8[262144]{0}', space=vmem, size = 0x40000, scoped, tag = 'input window, operand 12, single buffered']
    #allocation15 [shape = 's32[1]{0}', space=sflag, size = 0x4, scoped, tag = 'scoped memory for tpu_custom_call.1']
    #allocation16 [shape = 'u8[4096]{0}', space=vmem, size = 0x1000, scoped, tag = 'input window, operand 13, single buffered']
    #allocation17 [shape = 'u8[262144]{0}', space=vmem, size = 0x40000, scoped, tag = 'input window, operand 14, single buffered']
    #allocation18 [shape = 's32[1]{0}', space=sflag, size = 0x4, scoped, tag = 'scoped memory for tpu_custom_call.1']
    #allocation19 [shape = 'u8[1024]{0}', space=vmem, size = 0x400, scoped, tag = 'input window, operand 15, single buffered']
    #allocation20 [shape = 'u8[512]{0}', space=vmem, size = 0x400, scoped, tag = 'input window, operand 16, single buffered']
    #allocation21 [shape = 's32[1]{0}', space=sflag, size = 0x4, scoped, tag = 'scoped memory for tpu_custom_call.1']
    #allocation22 [shape = 'u8[512]{0}', space=vmem, size = 0x400, scoped, tag = 'input window, operand 17, single buffered']
    #allocation23 [shape = 'u8[16384]{0}', space=vmem, size = 0x4000, scoped, tag = 'output window, operand 0, single buffered']
    %25 = vsyncpa [#allocation3], 0
    %26 = vsyncpa [#allocation6], 0
    %27 = vsyncpa [#allocation9], 0
    %28 = vsyncpa [#allocation12], 0
    %29 = vsyncpa [#allocation15], 0
    %30 = vsyncpa [#allocation18], 0
    %31 = vsyncpa [#allocation21], 0
    %32 = vsyncpa [#allocation4], 0
    // Predicated region
    $region2: #{tpu_custom_call.1} parent=1 // pred_check
      _
    $region3: #{tpu_custom_call.1} parent=1 // pred_check_branch
      %34 = sbr.rel (0) target = $region5
    $region4: #{tpu_custom_call.1} parent=1 // pred_region
      _
    $region5: #{tpu_custom_call.1} parent=1 // pred_fallthru
      _
    // Predicated region
    $region6: #{tpu_custom_call.1} parent=1 // pred_check
      _
    $region7: #{tpu_custom_call.1} parent=1 // pred_check_branch
      %36 = sbr.rel (0) target = $region9
    $region8: #{tpu_custom_call.1} parent=1 // pred_region
      _
    $region9: #{tpu_custom_call.1} parent=1 // pred_fallthru
      _
    // Predicated region
    $region10: #{tpu_custom_call.1} parent=1 // pred_check
      _
    $region11: #{tpu_custom_call.1} parent=1 // pred_check_branch
      %38 = sbr.rel (0) target = $region13
    $region12: #{tpu_custom_call.1} parent=1 // pred_region
      _
    $region13: #{tpu_custom_call.1} parent=1 // pred_fallthru
      _
    // Predicated region
    $region14: #{tpu_custom_call.1} parent=1 // pred_check
      _
    $region15: #{tpu_custom_call.1} parent=1 // pred_check_branch
      %40 = sbr.rel (0) target = $region17
    $region16: #{tpu_custom_call.1} parent=1 // pred_region
      %s42 = ssub.s32 512, 512
      %43 = vsyncadd [#allocation3], %s42
      %s44 = sshll.u32 [#allocation2], 4
      %s45 = int_to_ptr.vmem [resolvable:$true] %s44
      %50 = dma.hbm_to_vmem [thread:$0]  %s3, 512, %s45, [#allocation3], 128, 128, 8
    $region17: #{tpu_custom_call.1} parent=1 // pred_fallthru
      _
    // Predicated region
    $region18: #{tpu_custom_call.1} parent=1 // pred_check
      _
    $region19: #{tpu_custom_call.1} parent=1 // pred_check_branch
      %52 = sbr.rel (0) target = $region21
    $region20: #{tpu_custom_call.1} parent=1 // pred_region
      _
    $region21: #{tpu_custom_call.1} parent=1 // pred_fallthru
      _
    // Predicated region
    $region22: #{tpu_custom_call.1} parent=1 // pred_check
      _
    $region23: #{tpu_custom_call.1} parent=1 // pred_check_branch
      %54 = sbr.rel (0) target = $region25
    $region24: #{tpu_custom_call.1} parent=1 // pred_region
      _
    $region25: #{tpu_custom_call.1} parent=1 // pred_fallthru
      _
    // Predicated region
    $region26: #{tpu_custom_call.1} parent=1 // pred_check
      _
    $region27: #{tpu_custom_call.1} parent=1 // pred_check_branch
      %56 = sbr.rel (0) target = $region29
    $region28: #{tpu_custom_call.1} parent=1 // pred_region
      %s58 = ssub.s32 6144, 6144
      %59 = vsyncadd [#allocation6], %s58
      %s60 = sshll.u32 [#allocation5], 4
      %s61 = int_to_ptr.vmem [resolvable:$true] %s60
      %66 = dma.hbm_to_vmem [thread:$0]  %s6, 6144, %s61, [#allocation6], 192, 192, 12
    $region29: #{tpu_custom_call.1} parent=1 // pred_fallthru
      _
    // Predicated region
    $region30: #{tpu_custom_call.1} parent=1 // pred_check
      _
    $region31: #{tpu_custom_call.1} parent=1 // pred_check_branch
      %68 = sbr.rel (0) target = $region33
    $region32: #{tpu_custom_call.1} parent=1 // pred_region
      %s70 = ssub.s32 96, 96
      %71 = vsyncadd [#allocation6], %s70
      %s72 = sshll.u32 [#allocation7], 4
      %s73 = int_to_ptr.vmem [resolvable:$true] %s72
      %78 = dma.hbm_to_vmem [thread:$0]  %s7, 96, %s73, [#allocation6], 48, 48, 3
    $region33: #{tpu_custom_call.1} parent=1 // pred_fallthru
      _
    // Predicated region
    $region34: #{tpu_custom_call.1} parent=1 // pred_check
      _
    $region35: #{tpu_custom_call.1} parent=1 // pred_check_branch
      %80 = sbr.rel (0) target = $region37
    $region36: #{tpu_custom_call.1} parent=1 // pred_region
      %s82 = ssub.s32 2048, 2048
      %83 = vsyncadd [#allocation9], %s82
      %s84 = sshll.u32 [#allocation8], 4
      %s85 = int_to_ptr.vmem [resolvable:$true] %s84
      %90 = dma.hbm_to_vmem [thread:$0]  %s8, 2048, %s85, [#allocation9], 64, 64, 4
    $region37: #{tpu_custom_call.1} parent=1 // pred_fallthru
      _
    // Predicated region
    $region38: #{tpu_custom_call.1} parent=1 // pred_check
      _
    $region39: #{tpu_custom_call.1} parent=1 // pred_check_branch
      %92 = sbr.rel (0) target = $region41
    $region40: #{tpu_custom_call.1} parent=1 // pred_region
      %s94 = ssub.s32 32, 32
      %95 = vsyncadd [#allocation9], %s94
      %s96 = sshll.u32 [#allocation10], 4
      %s97 = int_to_ptr.vmem [resolvable:$true] %s96
      %102 = dma.hbm_to_vmem [thread:$0]  %s9, 32, %s97, [#allocation9], 16, 16, 1
    $region41: #{tpu_custom_call.1} parent=1 // pred_fallthru
      _
    // Predicated region
    $region42: #{tpu_custom_call.1} parent=1 // pred_check
      _
    $region43: #{tpu_custom_call.1} parent=1 // pred_check_branch
      %104 = sbr.rel (0) target = $region45
    $region44: #{tpu_custom_call.1} parent=1 // pred_region
      %s106 = ssub.s32 32, 32
      %107 = vsyncadd [#allocation12], %s106
      %s108 = sshll.u32 [#allocation11], 4
      %s109 = int_to_ptr.vmem [resolvable:$true] %s108
      %114 = dma.hbm_to_vmem [thread:$0]  %s10, 32, %s109, [#allocation12], 16, 16, 1
    $region45: #{tpu_custom_call.1} parent=1 // pred_fallthru
      _
    // Predicated region
    $region46: #{tpu_custom_call.1} parent=1 // pred_check
      _
    $region47: #{tpu_custom_call.1} parent=1 // pred_check_branch
      %116 = sbr.rel (0) target = $region49
    $region48: #{tpu_custom_call.1} parent=1 // pred_region
      %s118 = ssub.s32 32, 32
      %119 = vsyncadd [#allocation12], %s118
      %s120 = sshll.u32 [#allocation13], 4
      %s121 = int_to_ptr.vmem [resolvable:$true] %s120
      %126 = dma.hbm_to_vmem [thread:$0]  %s11, 32, %s121, [#allocation12], 16, 16, 1
    $region49: #{tpu_custom_call.1} parent=1 // pred_fallthru
      _
    // Predicated region
    $region50: #{tpu_custom_call.1} parent=1 // pred_check
      _
    $region51: #{tpu_custom_call.1} parent=1 // pred_check_branch
      %128 = sbr.rel (0) target = $region53
    $region52: #{tpu_custom_call.1} parent=1 // pred_region
      %s130 = ssub.s32 8192, 8192
      %131 = vsyncadd [#allocation15], %s130
      %s132 = sshll.u32 [#allocation14], 4
      %s133 = int_to_ptr.vmem [resolvable:$true] %s132
      %138 = dma.hbm_to_vmem [thread:$0]  %s12, 8192, %s133, [#allocation15], 256, 256, 16
    $region53: #{tpu_custom_call.1} parent=1 // pred_fallthru
      _
    // Predicated region
    $region54: #{tpu_custom_call.1} parent=1 // pred_check
      _
    $region55: #{tpu_custom_call.1} parent=1 // pred_check_branch
      %140 = sbr.rel (0) target = $region57
    $region56: #{tpu_custom_call.1} parent=1 // pred_region
      %s142 = ssub.s32 128, 128
      %143 = vsyncadd [#allocation15], %s142
      %s144 = sshll.u32 [#allocation16], 4
      %s145 = int_to_ptr.vmem [resolvable:$true] %s144
      %150 = dma.hbm_to_vmem [thread:$0]  %s13, 128, %s145, [#allocation15], 64, 64, 4
    $region57: #{tpu_custom_call.1} parent=1 // pred_fallthru
      _
    // Predicated region
    $region58: #{tpu_custom_call.1} parent=1 // pred_check
      _
    $region59: #{tpu_custom_call.1} parent=1 // pred_check_branch
      %152 = sbr.rel (0) target = $region61
    $region60: #{tpu_custom_call.1} parent=1 // pred_region
      %s154 = ssub.s32 8192, 8192
      %155 = vsyncadd [#allocation18], %s154
      %s156 = sshll.u32 [#allocation17], 4
      %s157 = int_to_ptr.vmem [resolvable:$true] %s156
      %162 = dma.hbm_to_vmem [thread:$0]  %s14, 8192, %s157, [#allocation18], 64, 64, 4
    $region61: #{tpu_custom_call.1} parent=1 // pred_fallthru
      _
    // Predicated region
    $region62: #{tpu_custom_call.1} parent=1 // pred_check
      _
    $region63: #{tpu_custom_call.1} parent=1 // pred_check_branch
      %164 = sbr.rel (0) target = $region65
    $region64: #{tpu_custom_call.1} parent=1 // pred_region
      %s166 = ssub.s32 32, 32
      %167 = vsyncadd [#allocation18], %s166
      %s168 = sshll.u32 [#allocation19], 4
      %s169 = int_to_ptr.vmem [resolvable:$true] %s168
      %174 = dma.hbm_to_vmem [thread:$0]  %s15, 32, %s169, [#allocation18], 16, 16, 1
    $region65: #{tpu_custom_call.1} parent=1 // pred_fallthru
      _
    // Predicated region
    $region66: #{tpu_custom_call.1} parent=1 // pred_check
      _
    $region67: #{tpu_custom_call.1} parent=1 // pred_check_branch
      %176 = sbr.rel (0) target = $region69
    $region68: #{tpu_custom_call.1} parent=1 // pred_region
      %s178 = ssub.s32 16, 16
      %179 = vsyncadd [#allocation21], %s178
      %s181 = sshll.u32 [#allocation20], 4
      %s182 = int_to_ptr.vmem [resolvable:$true] %s181
      %184 = dma.hbm_to_vmem [thread:$0]  %s16, 16, %s182, [#allocation21]
    $region69: #{tpu_custom_call.1} parent=1 // pred_fallthru
      _
    // Predicated region
    $region70: #{tpu_custom_call.1} parent=1 // pred_check
      _
    $region71: #{tpu_custom_call.1} parent=1 // pred_check_branch
      %186 = sbr.rel (0) target = $region73
    $region72: #{tpu_custom_call.1} parent=1 // pred_region
      %s188 = ssub.s32 16, 16
      %189 = vsyncadd [#allocation21], %s188
      %s191 = sshll.u32 [#allocation22], 4
      %s192 = int_to_ptr.vmem [resolvable:$true] %s191
      %194 = dma.hbm_to_vmem [thread:$0]  %s17, 16, %s192, [#allocation21]
    $region73: #{tpu_custom_call.1} parent=1 // pred_fallthru
      _
    // Predicated region
    $region74: #{tpu_custom_call.1} parent=1 // pred_check
      _
    $region75: #{tpu_custom_call.1} parent=1 // pred_check_branch
      %196 = sbr.rel (0) target = $region77
    $region76: #{tpu_custom_call.1} parent=1 // pred_region
      _
    $region77: #{tpu_custom_call.1} parent=1 // pred_fallthru
      _
    // Predicated region
    $region78: #{tpu_custom_call.1} parent=1 // pred_check
      _
    $region79: #{tpu_custom_call.1} parent=1 // pred_check_branch
      %198 = sbr.rel (0) target = $region81
    $region80: #{tpu_custom_call.1} parent=1 // pred_region
      _
    $region81: #{tpu_custom_call.1} parent=1 // pred_fallthru
      _
    // Predicated region
    $region82: #{tpu_custom_call.1} parent=1 // pred_check
      _
    $region83: #{tpu_custom_call.1} parent=1 // pred_check_branch
      %200 = sbr.rel (0) target = $region85
    $region84: #{tpu_custom_call.1} parent=1 // pred_region
      %201 = dma.done [#allocation3], 512
    $region85: #{tpu_custom_call.1} parent=1 // pred_fallthru
      _
    // Predicated region
    $region86: #{tpu_custom_call.1} parent=1 // pred_check
      _
    $region87: #{tpu_custom_call.1} parent=1 // pred_check_branch
      %203 = sbr.rel (0) target = $region89
    $region88: #{tpu_custom_call.1} parent=1 // pred_region
      %204 = dma.done [#allocation6], 6144
    $region89: #{tpu_custom_call.1} parent=1 // pred_fallthru
      _
    // Predicated region
    $region90: #{tpu_custom_call.1} parent=1 // pred_check
      _
    $region91: #{tpu_custom_call.1} parent=1 // pred_check_branch
      %206 = sbr.rel (0) target = $region93
    $region92: #{tpu_custom_call.1} parent=1 // pred_region
      %207 = dma.done [#allocation6], 96
    $region93: #{tpu_custom_call.1} parent=1 // pred_fallthru
      _
    // Predicated region
    $region94: #{tpu_custom_call.1} parent=1 // pred_check
      _
    $region95: #{tpu_custom_call.1} parent=1 // pred_check_branch
      %209 = sbr.rel (0) target = $region97
    $region96: #{tpu_custom_call.1} parent=1 // pred_region
      %210 = dma.done [#allocation9], 2048
    $region97: #{tpu_custom_call.1} parent=1 // pred_fallthru
      _
    // Predicated region
    $region98: #{tpu_custom_call.1} parent=1 // pred_check
      _
    $region99: #{tpu_custom_call.1} parent=1 // pred_check_branch
      %212 = sbr.rel (0) target = $region101
    $region100: #{tpu_custom_call.1} parent=1 // pred_region
      %213 = dma.done [#allocation9], 32
    $region101: #{tpu_custom_call.1} parent=1 // pred_fallthru
      _
    // Predicated region
    $region102: #{tpu_custom_call.1} parent=1 // pred_check
      _
    $region103: #{tpu_custom_call.1} parent=1 // pred_check_branch
      %215 = sbr.rel (0) target = $region105
    $region104: #{tpu_custom_call.1} parent=1 // pred_region
      %216 = dma.done [#allocation12], 32
    $region105: #{tpu_custom_call.1} parent=1 // pred_fallthru
      _
    // Predicated region
    $region106: #{tpu_custom_call.1} parent=1 // pred_check
      _
    $region107: #{tpu_custom_call.1} parent=1 // pred_check_branch
      %218 = sbr.rel (0) target = $region109
    $region108: #{tpu_custom_call.1} parent=1 // pred_region
      %219 = dma.done [#allocation12], 32
    $region109: #{tpu_custom_call.1} parent=1 // pred_fallthru
      _
    // Predicated region
    $region110: #{tpu_custom_call.1} parent=1 // pred_check
      _
    $region111: #{tpu_custom_call.1} parent=1 // pred_check_branch
      %221 = sbr.rel (0) target = $region113
    $region112: #{tpu_custom_call.1} parent=1 // pred_region
      %222 = dma.done [#allocation15], 8192
    $region113: #{tpu_custom_call.1} parent=1 // pred_fallthru
      _
    // Predicated region
    $region114: #{tpu_custom_call.1} parent=1 // pred_check
      _
    $region115: #{tpu_custom_call.1} parent=1 // pred_check_branch
      %224 = sbr.rel (0) target = $region117
    $region116: #{tpu_custom_call.1} parent=1 // pred_region
      %225 = dma.done [#allocation15], 128
    $region117: #{tpu_custom_call.1} parent=1 // pred_fallthru
      _
    // Predicated region
    $region118: #{tpu_custom_call.1} parent=1 // pred_check
      _
    $region119: #{tpu_custom_call.1} parent=1 // pred_check_branch
      %227 = sbr.rel (0) target = $region121
    $region120: #{tpu_custom_call.1} parent=1 // pred_region
      %228 = dma.done [#allocation18], 8192
    $region121: #{tpu_custom_call.1} parent=1 // pred_fallthru
      _
    // Predicated region
    $region122: #{tpu_custom_call.1} parent=1 // pred_check
      _
    $region123: #{tpu_custom_call.1} parent=1 // pred_check_branch
      %230 = sbr.rel (0) target = $region125
    $region124: #{tpu_custom_call.1} parent=1 // pred_region
      %231 = dma.done [#allocation18], 32
    $region125: #{tpu_custom_call.1} parent=1 // pred_fallthru
      _
    // Predicated region
    $region126: #{tpu_custom_call.1} parent=1 // pred_check
      _
    $region127: #{tpu_custom_call.1} parent=1 // pred_check_branch
      %233 = sbr.rel (0) target = $region129
    $region128: #{tpu_custom_call.1} parent=1 // pred_region
      %234 = dma.done [#allocation21], 16
    $region129: #{tpu_custom_call.1} parent=1 // pred_fallthru
      _
    // Predicated region
    $region130: #{tpu_custom_call.1} parent=1 // pred_check
      _
    $region131: #{tpu_custom_call.1} parent=1 // pred_check_branch
      %236 = sbr.rel (0) target = $region133
    $region132: #{tpu_custom_call.1} parent=1 // pred_region
      %237 = dma.done [#allocation21], 16
    $region133: #{tpu_custom_call.1} parent=1 // pred_fallthru
      _
    %v239 = vld [vmem:[%s0] sm:$0xff]
    %v240 = vld [vmem:[%s0 + $0x8] sm:$0xff]
    %v241 = vld [vmem:[%s0 + $0x10] sm:$0xff]
    %v242 = vld [vmem:[%s0 + $0x18] sm:$0xff]
    %v243 = vld [vmem:[%s1] sm:$0x1]
    %245 = vset.pattern.permute.xlu0 0
    %246 = vperm.xlu0 %245, %v239
    %v247 = vpop.permute.xlu0 %246
    %250 = vset.pattern.permute.xlu0 0
    %251 = vperm.xlu0 %250, %v240
    %v252 = vpop.permute.xlu0 %251
    %255 = vset.pattern.permute.xlu0 0
    %256 = vperm.xlu0 %255, %v241
    %v257 = vpop.permute.xlu0 %256
    %260 = vset.pattern.permute.xlu0 0
    %261 = vperm.xlu0 %260, %v242
    %v262 = vpop.permute.xlu0 %261
    %v265 = vlaneseq
    %v266 = vshrl.u32 %v265, 7
    %v267 = vsub.s32 0, %v266
    %v268 = vrot.slane %v243, %v267
    %v270 = vmul.f32 %v247, %v268
    %v271 = vmul.f32 %v252, %v268
    %v272 = vmul.f32 %v257, %v268
    %v273 = vmul.f32 %v262, %v268
    %v274 = vld [vmem:[%s2] sm:$0xff]
    %v275 = vld [vmem:[%s2 + $0x8] sm:$0xff]
    %v276 = vld [vmem:[%s2 + $0x10] sm:$0xff]
    %v277 = vld [vmem:[%s2 + $0x18] sm:$0xff]
    %v278 = vadd.f32 %v270, %v274
    %v279 = vadd.f32 %v271, %v275
    %v280 = vadd.f32 %v272, %v276
    %v281 = vadd.f32 %v273, %v277
    %v282 = vld [vmem:[#allocation2] sm:$0xff]
    %v283 = vld [vmem:[#allocation2 + $0x8] sm:$0xff]
    %v284 = vld [vmem:[#allocation2 + $0x10] sm:$0xff]
    %v285 = vld [vmem:[#allocation2 + $0x18] sm:$0xff]
    %v286 = vld [vmem:[%s4] sm:$0x1]
    %v287 = vld [vmem:[%s5] sm:$0x1]
    %288 = vadd.xlane.f32.xlu0 %v278
    %v289 = vpop.xlane.xlu0 %288
    %290 = vadd.xlane.f32.xlu0 %v279
    %v291 = vpop.xlane.xlu0 %290
    %292 = vadd.xlane.f32.xlu0 %v280
    %v293 = vpop.xlane.xlu0 %292
    %294 = vadd.xlane.f32.xlu0 %v281
    %v295 = vpop.xlane.xlu0 %294
    %v296 = vrcp.pop 128.0
    %v297 = vmul.f32 %v289, %v296
    %v298 = vmul.f32 %v291, %v296
    %v299 = vmul.f32 %v293, %v296
    %v300 = vmul.f32 %v295, %v296
    %v301 = vsub.f32 %v278, %v297
    %v302 = vsub.f32 %v279, %v298
    %v303 = vsub.f32 %v280, %v299
    %v304 = vsub.f32 %v281, %v300
    %v305 = vmul.f32 %v301, %v301
    %v306 = vmul.f32 %v302, %v302
    %v307 = vmul.f32 %v303, %v303
    %v308 = vmul.f32 %v304, %v304
    %309 = vadd.xlane.f32.xlu0 %v305
    %v310 = vpop.xlane.xlu0 %309
    %311 = vadd.xlane.f32.xlu0 %v306
    %v312 = vpop.xlane.xlu0 %311
    %313 = vadd.xlane.f32.xlu0 %v307
    %v314 = vpop.xlane.xlu0 %313
    %315 = vadd.xlane.f32.xlu0 %v308
    %v316 = vpop.xlane.xlu0 %315
    %v317 = vmul.f32 %v310, %v296
    %v318 = vmul.f32 %v312, %v296
    %v319 = vmul.f32 %v314, %v296
    %v320 = vmul.f32 %v316, %v296
    %v321 = vadd.f32 %v317, 1e-05
    %v322 = vadd.f32 %v318, 1e-05
    %v323 = vadd.f32 %v319, 1e-05
    %v324 = vadd.f32 %v320, 1e-05
    %v325 = vrsqrt.pop %v321
    %v326 = vrsqrt.pop %v322
    %v327 = vrsqrt.pop %v323
    %v328 = vrsqrt.pop %v324
    %v329 = vmul.f32 %v301, %v325
    %v330 = vmul.f32 %v302, %v326
    %v331 = vmul.f32 %v303, %v327
    %v332 = vmul.f32 %v304, %v328
    %v334 = vlaneseq
    %v335 = vshrl.u32 %v334, 7
    %v336 = vsub.s32 0, %v335
    %v337 = vrot.slane %v286, %v336
    %v339 = vmul.f32 %v329, %v337
    %v340 = vmul.f32 %v330, %v337
    %v341 = vmul.f32 %v331, %v337
    %v342 = vmul.f32 %v332, %v337
    %v344 = vlaneseq
    %v345 = vshrl.u32 %v344, 7
    %v346 = vsub.s32 0, %v345
    %v347 = vrot.slane %v287, %v346
    %v349 = vadd.f32 %v339, %v347
    %v350 = vadd.f32 %v340, %v347
    %v351 = vadd.f32 %v341, %v347
    %v352 = vadd.f32 %v342, %v347
    %v353 = vpack.c.bf16 %v350, %v349
    %v354 = vpack.c.bf16 %v352, %v351
    %v355 = vld [vmem:[#allocation5] sm:$0xff]
    %v356 = vld [vmem:[#allocation5 + $0x8] sm:$0xf]
    %v357 = vld [vmem:[#allocation5 + $0xc] sm:$0xff]
    %v358 = vld [vmem:[#allocation5 + $0x14] sm:$0xf]
    %v359 = vld [vmem:[#allocation5 + $0x18] sm:$0xff]
    %v360 = vld [vmem:[#allocation5 + $0x20] sm:$0xf]
    %v361 = vld [vmem:[#allocation5 + $0x24] sm:$0xff]
    %v362 = vld [vmem:[#allocation5 + $0x2c] sm:$0xf]
    %v363 = vld [vmem:[#allocation5 + $0x30] sm:$0xff]
    %v364 = vld [vmem:[#allocation5 + $0x38] sm:$0xf]
    %v365 = vld [vmem:[#allocation5 + $0x3c] sm:$0xff]
    %v366 = vld [vmem:[#allocation5 + $0x44] sm:$0xf]
    %v367 = vld [vmem:[#allocation5 + $0x48] sm:$0xff]
    %v368 = vld [vmem:[#allocation5 + $0x50] sm:$0xf]
    %v369 = vld [vmem:[#allocation5 + $0x54] sm:$0xff]
    %v370 = vld [vmem:[#allocation5 + $0x5c] sm:$0xf]
    %v371 = vld [vmem:[#allocation5 + $0x60] sm:$0xff]
    %v372 = vld [vmem:[#allocation5 + $0x68] sm:$0xf]
    %v373 = vld [vmem:[#allocation5 + $0x6c] sm:$0xff]
    %v374 = vld [vmem:[#allocation5 + $0x74] sm:$0xf]
    %v375 = vld [vmem:[#allocation5 + $0x78] sm:$0xff]
    %v376 = vld [vmem:[#allocation5 + $0x80] sm:$0xf]
    %v377 = vld [vmem:[#allocation5 + $0x84] sm:$0xff]
    %v378 = vld [vmem:[#allocation5 + $0x8c] sm:$0xf]
    %v379 = vld [vmem:[#allocation5 + $0x90] sm:$0xff]
    %v380 = vld [vmem:[#allocation5 + $0x98] sm:$0xf]
    %v381 = vld [vmem:[#allocation5 + $0x9c] sm:$0xff]
    %v382 = vld [vmem:[#allocation5 + $0xa4] sm:$0xf]
    %v383 = vld [vmem:[#allocation5 + $0xa8] sm:$0xff]
    %v384 = vld [vmem:[#allocation5 + $0xb0] sm:$0xf]
    %v385 = vld [vmem:[#allocation5 + $0xb4] sm:$0xff]
    %v386 = vld [vmem:[#allocation5 + $0xbc] sm:$0xf]
    %v387 = vld [vmem:[#allocation7] sm:$0x7]
    %v389 = vlaneseq
    %v390 = vshrl.u32 %v389, 7
    %v391 = vsub.s32 0, %v390
    %v392 = vrot.slane %v387, %v391
    %v393 = vlaneseq
    %v394 = vshrl.u32 %v393, 7
    %v395 = vsub.s32 1, %v394
    %v396 = vrot.slane %v387, %v395
    %v397 = vlaneseq
    %v398 = vshrl.u32 %v397, 7
    %v399 = vsub.s32 2, %v398
    %v400 = vrot.slane %v387, %v399
    %v436 = vunpack.c.l.b16 %v355
    %v437 = vunpack.c.h.b16 %v355
    %v438 = vunpack.c.l.b16 %v356
    %v439 = vunpack.c.l.b16 %v357
    %v440 = vunpack.c.h.b16 %v357
    %v441 = vunpack.c.l.b16 %v358
    %v442 = vunpack.c.l.b16 %v359
    %v443 = vunpack.c.h.b16 %v359
    %v444 = vunpack.c.l.b16 %v360
    %v445 = vunpack.c.l.b16 %v361
    %v446 = vunpack.c.h.b16 %v361
    %v447 = vunpack.c.l.b16 %v362
    %v448 = vunpack.c.l.b16 %v363
    %v449 = vunpack.c.h.b16 %v363
    %v450 = vunpack.c.l.b16 %v364
    %v451 = vunpack.c.l.b16 %v365
    %v452 = vunpack.c.h.b16 %v365
    %v453 = vunpack.c.l.b16 %v366
    %v454 = vunpack.c.l.b16 %v367
    %v455 = vunpack.c.h.b16 %v367
    %v456 = vunpack.c.l.b16 %v368
    %v457 = vunpack.c.l.b16 %v369
    %v458 = vunpack.c.h.b16 %v369
    %v459 = vunpack.c.l.b16 %v370
    %v460 = vunpack.c.l.b16 %v371
    %v461 = vunpack.c.h.b16 %v371
    %v462 = vunpack.c.l.b16 %v372
    %v463 = vunpack.c.l.b16 %v373
    %v464 = vunpack.c.h.b16 %v373
    %v465 = vunpack.c.l.b16 %v374
    %v466 = vunpack.c.l.b16 %v375
    %v467 = vunpack.c.h.b16 %v375
    %v468 = vunpack.c.l.b16 %v376
    %v469 = vunpack.c.l.b16 %v377
    %v470 = vunpack.c.h.b16 %v377
    %v471 = vunpack.c.l.b16 %v378
    %v472 = vunpack.c.l.b16 %v379
    %v473 = vunpack.c.h.b16 %v379
    %v474 = vunpack.c.l.b16 %v380
    %v475 = vunpack.c.l.b16 %v381
    %v476 = vunpack.c.h.b16 %v381
    %v477 = vunpack.c.l.b16 %v382
    %v478 = vunpack.c.l.b16 %v383
    %v479 = vunpack.c.h.b16 %v383
    %v480 = vunpack.c.l.b16 %v384
    %v481 = vunpack.c.l.b16 %v385
    %v482 = vunpack.c.h.b16 %v385
    %v483 = vunpack.c.l.b16 %v386
    %v484 = vpack.c.b16 %v439, %v436
    %v485 = vpack.c.b16 %v440, %v437
    %v486 = vpack.c.b16 %v441, %v438
    %v487 = vpack.c.b16 %v445, %v442
    %v488 = vpack.c.b16 %v446, %v443
    %v489 = vpack.c.b16 %v447, %v444
    %v490 = vpack.c.b16 %v451, %v448
    %v491 = vpack.c.b16 %v452, %v449
    %v492 = vpack.c.b16 %v453, %v450
    %v493 = vpack.c.b16 %v457, %v454
    %v494 = vpack.c.b16 %v458, %v455
    %v495 = vpack.c.b16 %v459, %v456
    %v496 = vpack.c.b16 %v463, %v460
    %v497 = vpack.c.b16 %v464, %v461
    %v498 = vpack.c.b16 %v465, %v462
    %v499 = vpack.c.b16 %v469, %v466
    %v500 = vpack.c.b16 %v470, %v467
    %v501 = vpack.c.b16 %v471, %v468
    %v502 = vpack.c.b16 %v475, %v472
    %v503 = vpack.c.b16 %v476, %v473
    %v504 = vpack.c.b16 %v477, %v474
    %v505 = vpack.c.b16 %v481, %v478
    %v506 = vpack.c.b16 %v482, %v479
    %v507 = vpack.c.b16 %v483, %v480
    %532 = vmatprep.subr.bf16.mxu0 %v485
    %533 = vmatpush1.bf16.msra.mxu0 %v484
    %534 = vmatprep.subr.bf16.mxu0 %v488
    %535 = vmatpush1.bf16.msra.mxu0 %v487
    %536 = vmatprep.subr.bf16.mxu0 %v491
    %537 = vmatpush1.bf16.msra.mxu0 %v490
    %538 = vmatprep.subr.bf16.mxu0 %v494
    %539 = vmatpush1.bf16.msra.mxu0 %v493
    %540 = vmatprep.subr.bf16.mxu0 %v497
    %541 = vmatpush1.bf16.msra.mxu0 %v496
    %542 = vmatprep.subr.bf16.mxu0 %v500
    %543 = vmatpush1.bf16.msra.mxu0 %v499
    %544 = vmatprep.subr.bf16.mxu0 %v503
    %545 = vmatpush1.bf16.msra.mxu0 %v502
    %546 = vmatprep.subr.bf16.mxu0 %v506
    %547 = vmatpush1.bf16.msra.mxu0 %v505
    %548 = vmatprep.subr.bf16.mxu0 0
    %549 = vmatpush1.bf16.msra.mxu0 0
    %550 = vmatprep.subr.bf16.mxu0 0
    %551 = vmatpush1.bf16.msra.mxu0 0
    %552 = vmatprep.subr.bf16.mxu0 0
    %553 = vmatpush1.bf16.msra.mxu0 0
    %554 = vmatprep.subr.bf16.mxu0 0
    %555 = vmatpush1.bf16.msra.mxu0 0
    %556 = vmatprep.subr.bf16.mxu0 0
    %557 = vmatpush1.bf16.msra.mxu0 0
    %558 = vmatprep.subr.bf16.mxu0 0
    %559 = vmatpush1.bf16.msra.mxu0 0
    %560 = vmatprep.subr.bf16.mxu0 0
    %561 = vmatpush1.bf16.msra.mxu0 0
    %562 = vmatprep.subr.bf16.mxu0 0
    %563 = vmatpush1.bf16.msra.mxu0 0
    %564 = vmatprep.mubr.bf16.mxu0 0
    %565 = vmatmul.mubr.bf16.gmra.mrb[0].mxu0 %v353
    %v566 = vpop.f32.mrb[0].mxu0
    %v567 = vadd.f32 %v392, %v566
    %v568 = vpop.f32.mrb[0].mxu0
    %v569 = vadd.f32 %v396, %v568
    %v570 = vpop.f32.mrb[0].mxu0
    %v571 = vadd.f32 %v392, %v570
    %v572 = vpop.f32.mrb[0].mxu0
    %v573 = vadd.f32 %v396, %v572
    %574 = vmatprep.mubr.bf16.mxu0 0
    %575 = vmatmul.mubr.bf16.gmra.mrb[0].mxu0 %v354
    %v576 = vpop.f32.mrb[0].mxu0
    %v577 = vadd.f32 %v392, %v576
    %v578 = vpop.f32.mrb[0].mxu0
    %v579 = vadd.f32 %v396, %v578
    %v580 = vpop.f32.mrb[0].mxu0
    %v581 = vadd.f32 %v392, %v580
    %v582 = vpop.f32.mrb[0].mxu0
    %v583 = vadd.f32 %v396, %v582
    %584 = vdwg.mxu0
    %585 = vmatprep.subr.bf16.mxu0 0
    %586 = vmatpush1.bf16.msra.mxu0 %v486
    %587 = vmatprep.subr.bf16.mxu0 0
    %588 = vmatpush1.bf16.msra.mxu0 %v489
    %589 = vmatprep.subr.bf16.mxu0 0
    %590 = vmatpush1.bf16.msra.mxu0 %v492
    %591 = vmatprep.subr.bf16.mxu0 0
    %592 = vmatpush1.bf16.msra.mxu0 %v495
    %593 = vmatprep.subr.bf16.mxu0 0
    %594 = vmatpush1.bf16.msra.mxu0 %v498
    %595 = vmatprep.subr.bf16.mxu0 0
    %596 = vmatpush1.bf16.msra.mxu0 %v501
    %597 = vmatprep.subr.bf16.mxu0 0
    %598 = vmatpush1.bf16.msra.mxu0 %v504
    %599 = vmatprep.subr.bf16.mxu0 0
    %600 = vmatpush1.bf16.msra.mxu0 %v507
    %601 = vmatprep.subr.bf16.mxu0 0
    %602 = vmatpush1.bf16.msra.mxu0 0
    %603 = vmatprep.subr.bf16.mxu0 0
    %604 = vmatpush1.bf16.msra.mxu0 0
    %605 = vmatprep.subr.bf16.mxu0 0
    %606 = vmatpush1.bf16.msra.mxu0 0
    %607 = vmatprep.subr.bf16.mxu0 0
    %608 = vmatpush1.bf16.msra.mxu0 0
    %609 = vmatprep.subr.bf16.mxu0 0
    %610 = vmatpush1.bf16.msra.mxu0 0
    %611 = vmatprep.subr.bf16.mxu0 0
    %612 = vmatpush1.bf16.msra.mxu0 0
    %613 = vmatprep.subr.bf16.mxu0 0
    %614 = vmatpush1.bf16.msra.mxu0 0
    %615 = vmatprep.subr.bf16.mxu0 0
    %616 = vmatpush1.bf16.msra.mxu0 0
    %617 = vmatprep.mubr.bf16.mxu0 0
    %618 = vmatmul.mubr.bf16.gmra.mrb[0].mxu0 %v353
    %v619 = vpop.f32.mrb[0].mxu0
    %v620 = vadd.f32 %v400, %v619
    %v621 = vpop.f32.mrb[0].mxu0
    %v622 = vpop.f32.mrb[0].mxu0
    %v623 = vadd.f32 %v400, %v622
    %v624 = vpop.f32.mrb[0].mxu0
    %625 = vmatprep.mubr.bf16.mxu0 0
    %626 = vmatmul.mubr.bf16.gmra.mrb[0].mxu0 %v354
    %v627 = vpop.f32.mrb[0].mxu0
    %v628 = vadd.f32 %v400, %v627
    %v629 = vpop.f32.mrb[0].mxu0
    %v630 = vpop.f32.mrb[0].mxu0
    %v631 = vadd.f32 %v400, %v630
    %v632 = vpop.f32.mrb[0].mxu0
    %633 = vdwg.mxu0
    %v634 = vpack.c.bf16 %v571, %v567
    %v635 = vpack.c.bf16 %v581, %v577
    %v636 = vpack.c.bf16 %v573, %v569
    %v637 = vpack.c.bf16 %v583, %v579
    %v638 = vpack.c.bf16 %v623, %v620
    %v639 = vpack.c.bf16 %v631, %v628
    %vm640 = vcmask 261120
    %v642 = vsel %vm640, %v634, 0
    %v645 = vsel %vm640, %v635, 0
    %v648 = vsel %vm640, %v636, 0
    %v651 = vsel %vm640, %v637, 0
    %653 = vmatprep.subr.bf16.mxu0 0
    %654 = vmatpush1.bf16.xpose.msra.mxu0 %v648
    %655 = vmatprep.subr.bf16.mxu0 0
    %656 = vmatpush1.bf16.xpose.msra.mxu0 %v651
    %657 = vmatprep.subr.bf16.mxu0 0
    %658 = vmatpush1.bf16.xpose.msra.mxu0 0
    %659 = vmatprep.subr.bf16.mxu0 0
    %660 = vmatpush1.bf16.xpose.msra.mxu0 0
    %661 = vmatprep.subr.bf16.mxu0 0
    %662 = vmatpush1.bf16.xpose.msra.mxu0 0
    %663 = vmatprep.subr.bf16.mxu0 0
    %664 = vmatpush1.bf16.xpose.msra.mxu0 0
    %665 = vmatprep.subr.bf16.mxu0 0
    %666 = vmatpush1.bf16.xpose.msra.mxu0 0
    %667 = vmatprep.subr.bf16.mxu0 0
    %668 = vmatpush1.bf16.xpose.msra.mxu0 0
    %669 = vmatprep.subr.bf16.mxu0 0
    %670 = vmatpush1.bf16.xpose.msra.mxu0 0
    %671 = vmatprep.subr.bf16.mxu0 0
    %672 = vmatpush1.bf16.xpose.msra.mxu0 0
    %673 = vmatprep.subr.bf16.mxu0 0
    %674 = vmatpush1.bf16.xpose.msra.mxu0 0
    %675 = vmatprep.subr.bf16.mxu0 0
    %676 = vmatpush1.bf16.xpose.msra.mxu0 0
    %677 = vmatprep.subr.bf16.mxu0 0
    %678 = vmatpush1.bf16.xpose.msra.mxu0 0
    %679 = vmatprep.subr.bf16.mxu0 0
    %680 = vmatpush1.bf16.xpose.msra.mxu0 0
    %681 = vmatprep.subr.bf16.mxu0 0
    %682 = vmatpush1.bf16.xpose.msra.mxu0 0
    %683 = vmatprep.subr.bf16.mxu0 0
    %684 = vmatpush1.bf16.xpose.msra.mxu0 0
    %685 = vmatprep.mubr.bf16.mxu0 0
    %686 = vmatmul.mubr.bf16.gmra.mrb[0].mxu0 %v642
    %v687 = vpop.f32.mrb[0].mxu0
    %v688 = vadd.f32 0.0, %v687
    %v689 = vpop.f32.mrb[0].mxu0
    %v690 = vpop.f32.mrb[0].mxu0
    %v691 = vadd.f32 0.0, %v690
    %v692 = vpop.f32.mrb[0].mxu0
    %693 = vmatprep.mubr.bf16.mxu0 0
    %694 = vmatmul.mubr.bf16.gmra.mrb[0].mxu0 %v645
    %v695 = vpop.f32.mrb[0].mxu0
    %v696 = vadd.f32 0.0, %v695
    %v697 = vpop.f32.mrb[0].mxu0
    %v698 = vpop.f32.mrb[0].mxu0
    %v699 = vadd.f32 0.0, %v698
    %v700 = vpop.f32.mrb[0].mxu0
    %701 = vdwg.mxu0
    %v702 = vmul.f32 %v688, 0.17677669
    %v703 = vmul.f32 %v691, 0.17677669
    %v704 = vmul.f32 %v696, 0.17677669
    %v705 = vmul.f32 %v699, 0.17677669
    %v706 = vadd.f32 %v702, %v282
    %v707 = vadd.f32 %v703, %v283
    %v708 = vadd.f32 %v704, %v284
    %v709 = vadd.f32 %v705, %v285
    %v710 = vsel %vm640, %v706, -inf
    %711 = vmax.xlane.f32.xlu0 %v710
    %v712 = vpop.xlane.xlu0 %711
    %v713 = vsel %vm640, %v707, -inf
    %714 = vmax.xlane.f32.xlu0 %v713
    %v715 = vpop.xlane.xlu0 %714
    %v716 = vsel %vm640, %v708, -inf
    %717 = vmax.xlane.f32.xlu0 %v716
    %v718 = vpop.xlane.xlu0 %717
    %v719 = vsel %vm640, %v709, -inf
    %720 = vmax.xlane.f32.xlu0 %v719
    %v721 = vpop.xlane.xlu0 %720
    %v722 = vsub.f32 %v706, %v712
    %v723 = vsub.f32 %v707, %v715
    %v724 = vsub.f32 %v708, %v718
    %v725 = vsub.f32 %v709, %v721
    %v726 = vmul.f32 %v722, 1.442695
    %v727 = vpow.pop %v726
    %v728 = vmul.f32 %v723, 1.442695
    %v729 = vpow.pop %v728
    %v730 = vmul.f32 %v724, 1.442695
    %v731 = vpow.pop %v730
    %v732 = vmul.f32 %v725, 1.442695
    %v733 = vpow.pop %v732
    %v734 = vsel %vm640, %v727, 0.0
    %735 = vadd.xlane.f32.xlu0 %v734
    %v736 = vpop.xlane.xlu0 %735
    %v737 = vsel %vm640, %v729, 0.0
    %738 = vadd.xlane.f32.xlu0 %v737
    %v739 = vpop.xlane.xlu0 %738
    %v740 = vsel %vm640, %v731, 0.0
    %741 = vadd.xlane.f32.xlu0 %v740
    %v742 = vpop.xlane.xlu0 %741
    %v743 = vsel %vm640, %v733, 0.0
    %744 = vadd.xlane.f32.xlu0 %v743
    %v745 = vpop.xlane.xlu0 %744
    %v746 = vrcp.pop %v736
    %v747 = vrcp.pop %v739
    %v748 = vrcp.pop %v742
    %v749 = vrcp.pop %v745
    %v750 = vmul.f32 %v727, %v746
    %v751 = vmul.f32 %v729, %v747
    %v752 = vmul.f32 %v731, %v748
    %v753 = vmul.f32 %v733, %v749
    %v754 = vpack.c.bf16 %v751, %v750
    %v755 = vpack.c.bf16 %v753, %v752
    %v757 = vsel %vm640, %v754, 0
    %v760 = vsel %vm640, %v755, 0
    %762 = vmatprep.subr.bf16.mxu0 0
    %763 = vmatpush1.bf16.msra.mxu0 %v638
    %764 = vmatprep.subr.bf16.mxu0 0
    %765 = vmatpush1.bf16.msra.mxu0 %v639
    %766 = vmatprep.subr.bf16.mxu0 0
    %767 = vmatpush1.bf16.msra.mxu0 0
    %768 = vmatprep.subr.bf16.mxu0 0
    %769 = vmatpush1.bf16.msra.mxu0 0
    %770 = vmatprep.subr.bf16.mxu0 0
    %771 = vmatpush1.bf16.msra.mxu0 0
    %772 = vmatprep.subr.bf16.mxu0 0
    %773 = vmatpush1.bf16.msra.mxu0 0
    %774 = vmatprep.subr.bf16.mxu0 0
    %775 = vmatpush1.bf16.msra.mxu0 0
    %776 = vmatprep.subr.bf16.mxu0 0
    %777 = vmatpush1.bf16.msra.mxu0 0
    %778 = vmatprep.subr.bf16.mxu0 0
    %779 = vmatpush1.bf16.msra.mxu0 0
    %780 = vmatprep.subr.bf16.mxu0 0
    %781 = vmatpush1.bf16.msra.mxu0 0
    %782 = vmatprep.subr.bf16.mxu0 0
    %783 = vmatpush1.bf16.msra.mxu0 0
    %784 = vmatprep.subr.bf16.mxu0 0
    %785 = vmatpush1.bf16.msra.mxu0 0
    %786 = vmatprep.subr.bf16.mxu0 0
    %787 = vmatpush1.bf16.msra.mxu0 0
    %788 = vmatprep.subr.bf16.mxu0 0
    %789 = vmatpush1.bf16.msra.mxu0 0
    %790 = vmatprep.subr.bf16.mxu0 0
    %791 = vmatpush1.bf16.msra.mxu0 0
    %792 = vmatprep.subr.bf16.mxu0 0
    %793 = vmatpush1.bf16.msra.mxu0 0
    %794 = vmatprep.mubr.bf16.mxu0 0
    %795 = vmatmul.mubr.bf16.gmra.mrb[0].mxu0 %v757
    %v796 = vpop.f32.mrb[0].mxu0
    %v797 = vadd.f32 0.0, %v796
    %v798 = vpop.f32.mrb[0].mxu0
    %v799 = vpop.f32.mrb[0].mxu0
    %v800 = vadd.f32 0.0, %v799
    %v801 = vpop.f32.mrb[0].mxu0
    %802 = vmatprep.mubr.bf16.mxu0 0
    %803 = vmatmul.mubr.bf16.gmra.mrb[0].mxu0 %v760
    %v804 = vpop.f32.mrb[0].mxu0
    %v805 = vadd.f32 0.0, %v804
    %v806 = vpop.f32.mrb[0].mxu0
    %v807 = vpop.f32.mrb[0].mxu0
    %v808 = vadd.f32 0.0, %v807
    %v809 = vpop.f32.mrb[0].mxu0
    %810 = vdwg.mxu0
    %813 = vrot.lane.b32.xlu0 %v634, 96
    %v814 = vpop.permute.xlu0 %813
    %815 = vrot.lane.b32.xlu0 %v635, 96
    %v816 = vpop.permute.xlu0 %815
    %819 = vrot.lane.b32.xlu0 %v636, 96
    %v820 = vpop.permute.xlu0 %819
    %821 = vrot.lane.b32.xlu0 %v637, 96
    %v822 = vpop.permute.xlu0 %821
    %v824 = vsel %vm640, %v814, 0
    %v827 = vsel %vm640, %v816, 0
    %v830 = vsel %vm640, %v820, 0
    %v833 = vsel %vm640, %v822, 0
    %835 = vmatprep.subr.bf16.mxu0 0
    %836 = vmatpush1.bf16.xpose.msra.mxu0 %v830
    %837 = vmatprep.subr.bf16.mxu0 0
    %838 = vmatpush1.bf16.xpose.msra.mxu0 %v833
    %839 = vmatprep.subr.bf16.mxu0 0
    %840 = vmatpush1.bf16.xpose.msra.mxu0 0
    %841 = vmatprep.subr.bf16.mxu0 0
    %842 = vmatpush1.bf16.xpose.msra.mxu0 0
    %843 = vmatprep.subr.bf16.mxu0 0
    %844 = vmatpush1.bf16.xpose.msra.mxu0 0
    %845 = vmatprep.subr.bf16.mxu0 0
    %846 = vmatpush1.bf16.xpose.msra.mxu0 0
    %847 = vmatprep.subr.bf16.mxu0 0
    %848 = vmatpush1.bf16.xpose.msra.mxu0 0
    %849 = vmatprep.subr.bf16.mxu0 0
    %850 = vmatpush1.bf16.xpose.msra.mxu0 0
    %851 = vmatprep.subr.bf16.mxu0 0
    %852 = vmatpush1.bf16.xpose.msra.mxu0 0
    %853 = vmatprep.subr.bf16.mxu0 0
    %854 = vmatpush1.bf16.xpose.msra.mxu0 0
    %855 = vmatprep.subr.bf16.mxu0 0
    %856 = vmatpush1.bf16.xpose.msra.mxu0 0
    %857 = vmatprep.subr.bf16.mxu0 0
    %858 = vmatpush1.bf16.xpose.msra.mxu0 0
    %859 = vmatprep.subr.bf16.mxu0 0
    %860 = vmatpush1.bf16.xpose.msra.mxu0 0
    %861 = vmatprep.subr.bf16.mxu0 0
    %862 = vmatpush1.bf16.xpose.msra.mxu0 0
    %863 = vmatprep.subr.bf16.mxu0 0
    %864 = vmatpush1.bf16.xpose.msra.mxu0 0
    %865 = vmatprep.subr.bf16.mxu0 0
    %866 = vmatpush1.bf16.xpose.msra.mxu0 0
    %867 = vmatprep.mubr.bf16.mxu0 0
    %868 = vmatmul.mubr.bf16.gmra.mrb[0].mxu0 %v824
    %v869 = vpop.f32.mrb[0].mxu0
    %v870 = vadd.f32 0.0, %v869
    %v871 = vpop.f32.mrb[0].mxu0
    %v872 = vpop.f32.mrb[0].mxu0
    %v873 = vadd.f32 0.0, %v872
    %v874 = vpop.f32.mrb[0].mxu0
    %875 = vmatprep.mubr.bf16.mxu0 0
    %876 = vmatmul.mubr.bf16.gmra.mrb[0].mxu0 %v827
    %v877 = vpop.f32.mrb[0].mxu0
    %v878 = vadd.f32 0.0, %v877
    %v879 = vpop.f32.mrb[0].mxu0
    %v880 = vpop.f32.mrb[0].mxu0
    %v881 = vadd.f32 0.0, %v880
    %v882 = vpop.f32.mrb[0].mxu0
    %883 = vdwg.mxu0
    %v884 = vmul.f32 %v870, 0.17677669
    %v885 = vmul.f32 %v873, 0.17677669
    %v886 = vmul.f32 %v878, 0.17677669
    %v887 = vmul.f32 %v881, 0.17677669
    %v888 = vadd.f32 %v884, %v282
    %v889 = vadd.f32 %v885, %v283
    %v890 = vadd.f32 %v886, %v284
    %v891 = vadd.f32 %v887, %v285
    %v892 = vsel %vm640, %v888, -inf
    %893 = vmax.xlane.f32.xlu0 %v892
    %v894 = vpop.xlane.xlu0 %893
    %v895 = vsel %vm640, %v889, -inf
    %896 = vmax.xlane.f32.xlu0 %v895
    %v897 = vpop.xlane.xlu0 %896
    %v898 = vsel %vm640, %v890, -inf
    %899 = vmax.xlane.f32.xlu0 %v898
    %v900 = vpop.xlane.xlu0 %899
    %v901 = vsel %vm640, %v891, -inf
    %902 = vmax.xlane.f32.xlu0 %v901
    %v903 = vpop.xlane.xlu0 %902
    %v904 = vsub.f32 %v888, %v894
    %v905 = vsub.f32 %v889, %v897
    %v906 = vsub.f32 %v890, %v900
    %v907 = vsub.f32 %v891, %v903
    %v908 = vmul.f32 %v904, 1.442695
    %v909 = vpow.pop %v908
    %v910 = vmul.f32 %v905, 1.442695
    %v911 = vpow.pop %v910
    %v912 = vmul.f32 %v906, 1.442695
    %v913 = vpow.pop %v912
    %v914 = vmul.f32 %v907, 1.442695
    %v915 = vpow.pop %v914
    %v916 = vsel %vm640, %v909, 0.0
    %917 = vadd.xlane.f32.xlu0 %v916
    %v918 = vpop.xlane.xlu0 %917
    %v919 = vsel %vm640, %v911, 0.0
    %920 = vadd.xlane.f32.xlu0 %v919
    %v921 = vpop.xlane.xlu0 %920
    %v922 = vsel %vm640, %v913, 0.0
    %923 = vadd.xlane.f32.xlu0 %v922
    %v924 = vpop.xlane.xlu0 %923
    %v925 = vsel %vm640, %v915, 0.0
    %926 = vadd.xlane.f32.xlu0 %v925
    %v927 = vpop.xlane.xlu0 %926
    %v928 = vrcp.pop %v918
    %v929 = vrcp.pop %v921
    %v930 = vrcp.pop %v924
    %v931 = vrcp.pop %v927
    %v932 = vmul.f32 %v909, %v928
    %v933 = vmul.f32 %v911, %v929
    %v934 = vmul.f32 %v913, %v930
    %v935 = vmul.f32 %v915, %v931
    %v936 = vpack.c.bf16 %v933, %v932
    %v937 = vpack.c.bf16 %v935, %v934
    %940 = vrot.lane.b32.xlu0 %v638, 96
    %v941 = vpop.permute.xlu0 %940
    %942 = vrot.lane.b32.xlu0 %v639, 96
    %v943 = vpop.permute.xlu0 %942
    %v947 = vsel %vm640, %v936, 0
    %v950 = vsel %vm640, %v937, 0
    %952 = vmatprep.subr.bf16.mxu0 0
    %953 = vmatpush1.bf16.msra.mxu0 %v941
    %954 = vmatprep.subr.bf16.mxu0 0
    %955 = vmatpush1.bf16.msra.mxu0 %v943
    %956 = vmatprep.subr.bf16.mxu0 0
    %957 = vmatpush1.bf16.msra.mxu0 0
    %958 = vmatprep.subr.bf16.mxu0 0
    %959 = vmatpush1.bf16.msra.mxu0 0
    %960 = vmatprep.subr.bf16.mxu0 0
    %961 = vmatpush1.bf16.msra.mxu0 0
    %962 = vmatprep.subr.bf16.mxu0 0
    %963 = vmatpush1.bf16.msra.mxu0 0
    %964 = vmatprep.subr.bf16.mxu0 0
    %965 = vmatpush1.bf16.msra.mxu0 0
    %966 = vmatprep.subr.bf16.mxu0 0
    %967 = vmatpush1.bf16.msra.mxu0 0
    %968 = vmatprep.subr.bf16.mxu0 0
    %969 = vmatpush1.bf16.msra.mxu0 0
    %970 = vmatprep.subr.bf16.mxu0 0
    %971 = vmatpush1.bf16.msra.mxu0 0
    %972 = vmatprep.subr.bf16.mxu0 0
    %973 = vmatpush1.bf16.msra.mxu0 0
    %974 = vmatprep.subr.bf16.mxu0 0
    %975 = vmatpush1.bf16.msra.mxu0 0
    %976 = vmatprep.subr.bf16.mxu0 0
    %977 = vmatpush1.bf16.msra.mxu0 0
    %978 = vmatprep.subr.bf16.mxu0 0
    %979 = vmatpush1.bf16.msra.mxu0 0
    %980 = vmatprep.subr.bf16.mxu0 0
    %981 = vmatpush1.bf16.msra.mxu0 0
    %982 = vmatprep.subr.bf16.mxu0 0
    %983 = vmatpush1.bf16.msra.mxu0 0
    %984 = vmatprep.mubr.bf16.mxu0 0
    %985 = vmatmul.mubr.bf16.gmra.mrb[0].mxu0 %v947
    %v986 = vpop.f32.mrb[0].mxu0
    %v987 = vadd.f32 0.0, %v986
    %v988 = vpop.f32.mrb[0].mxu0
    %v989 = vpop.f32.mrb[0].mxu0
    %v990 = vadd.f32 0.0, %v989
    %v991 = vpop.f32.mrb[0].mxu0
    %992 = vmatprep.mubr.bf16.mxu0 0
    %993 = vmatmul.mubr.bf16.gmra.mrb[0].mxu0 %v950
    %v994 = vpop.f32.mrb[0].mxu0
    %v995 = vadd.f32 0.0, %v994
    %v996 = vpop.f32.mrb[0].mxu0
    %v997 = vpop.f32.mrb[0].mxu0
    %v998 = vadd.f32 0.0, %v997
    %v999 = vpop.f32.mrb[0].mxu0
    %1000 = vdwg.mxu0
    %1001 = vrot.lane.b32.xlu0 %v634, 64
    %v1002 = vpop.permute.xlu0 %1001
    %1003 = vrot.lane.b32.xlu0 %v635, 64
    %v1004 = vpop.permute.xlu0 %1003
    %1005 = vrot.lane.b32.xlu0 %v636, 64
    %v1006 = vpop.permute.xlu0 %1005
    %1007 = vrot.lane.b32.xlu0 %v637, 64
    %v1008 = vpop.permute.xlu0 %1007
    %v1010 = vsel %vm640, %v1002, 0
    %v1013 = vsel %vm640, %v1004, 0
    %v1016 = vsel %vm640, %v1006, 0
    %v1019 = vsel %vm640, %v1008, 0
    %1021 = vmatprep.subr.bf16.mxu0 0
    %1022 = vmatpush1.bf16.xpose.msra.mxu0 %v1016
    %1023 = vmatprep.subr.bf16.mxu0 0
    %1024 = vmatpush1.bf16.xpose.msra.mxu0 %v1019
    %1025 = vmatprep.subr.bf16.mxu0 0
    %1026 = vmatpush1.bf16.xpose.msra.mxu0 0
    %1027 = vmatprep.subr.bf16.mxu0 0
    %1028 = vmatpush1.bf16.xpose.msra.mxu0 0
    %1029 = vmatprep.subr.bf16.mxu0 0
    %1030 = vmatpush1.bf16.xpose.msra.mxu0 0
    %1031 = vmatprep.subr.bf16.mxu0 0
    %1032 = vmatpush1.bf16.xpose.msra.mxu0 0
    %1033 = vmatprep.subr.bf16.mxu0 0
    %1034 = vmatpush1.bf16.xpose.msra.mxu0 0
    %1035 = vmatprep.subr.bf16.mxu0 0
    %1036 = vmatpush1.bf16.xpose.msra.mxu0 0
    %1037 = vmatprep.subr.bf16.mxu0 0
    %1038 = vmatpush1.bf16.xpose.msra.mxu0 0
    %1039 = vmatprep.subr.bf16.mxu0 0
    %1040 = vmatpush1.bf16.xpose.msra.mxu0 0
    %1041 = vmatprep.subr.bf16.mxu0 0
    %1042 = vmatpush1.bf16.xpose.msra.mxu0 0
    %1043 = vmatprep.subr.bf16.mxu0 0
    %1044 = vmatpush1.bf16.xpose.msra.mxu0 0
    %1045 = vmatprep.subr.bf16.mxu0 0
    %1046 = vmatpush1.bf16.xpose.msra.mxu0 0
    %1047 = vmatprep.subr.bf16.mxu0 0
    %1048 = vmatpush1.bf16.xpose.msra.mxu0 0
    %1049 = vmatprep.subr.bf16.mxu0 0
    %1050 = vmatpush1.bf16.xpose.msra.mxu0 0
    %1051 = vmatprep.subr.bf16.mxu0 0
    %1052 = vmatpush1.bf16.xpose.msra.mxu0 0
    %1053 = vmatprep.mubr.bf16.mxu0 0
    %1054 = vmatmul.mubr.bf16.gmra.mrb[0].mxu0 %v1010
    %v1055 = vpop.f32.mrb[0].mxu0
    %v1056 = vadd.f32 0.0, %v1055
    %v1057 = vpop.f32.mrb[0].mxu0
    %v1058 = vpop.f32.mrb[0].mxu0
    %v1059 = vadd.f32 0.0, %v1058
    %v1060 = vpop.f32.mrb[0].mxu0
    %1061 = vmatprep.mubr.bf16.mxu0 0
    %1062 = vmatmul.mubr.bf16.gmra.mrb[0].mxu0 %v1013
    %v1063 = vpop.f32.mrb[0].mxu0
    %v1064 = vadd.f32 0.0, %v1063
    %v1065 = vpop.f32.mrb[0].mxu0
    %v1066 = vpop.f32.mrb[0].mxu0
    %v1067 = vadd.f32 0.0, %v1066
    %v1068 = vpop.f32.mrb[0].mxu0
    %1069 = vdwg.mxu0
    %v1070 = vmul.f32 %v1056, 0.17677669
    %v1071 = vmul.f32 %v1059, 0.17677669
    %v1072 = vmul.f32 %v1064, 0.17677669
    %v1073 = vmul.f32 %v1067, 0.17677669
    %v1074 = vadd.f32 %v1070, %v282
    %v1075 = vadd.f32 %v1071, %v283
    %v1076 = vadd.f32 %v1072, %v284
    %v1077 = vadd.f32 %v1073, %v285
    %v1078 = vsel %vm640, %v1074, -inf
    %1079 = vmax.xlane.f32.xlu0 %v1078
    %v1080 = vpop.xlane.xlu0 %1079
    %v1081 = vsel %vm640, %v1075, -inf
    %1082 = vmax.xlane.f32.xlu0 %v1081
    %v1083 = vpop.xlane.xlu0 %1082
    %v1084 = vsel %vm640, %v1076, -inf
    %1085 = vmax.xlane.f32.xlu0 %v1084
    %v1086 = vpop.xlane.xlu0 %1085
    %v1087 = vsel %vm640, %v1077, -inf
    %1088 = vmax.xlane.f32.xlu0 %v1087
    %v1089 = vpop.xlane.xlu0 %1088
    %v1090 = vsub.f32 %v1074, %v1080
    %v1091 = vsub.f32 %v1075, %v1083
    %v1092 = vsub.f32 %v1076, %v1086
    %v1093 = vsub.f32 %v1077, %v1089
    %v1094 = vmul.f32 %v1090, 1.442695
    %v1095 = vpow.pop %v1094
    %v1096 = vmul.f32 %v1091, 1.442695
    %v1097 = vpow.pop %v1096
    %v1098 = vmul.f32 %v1092, 1.442695
    %v1099 = vpow.pop %v1098
    %v1100 = vmul.f32 %v1093, 1.442695
    %v1101 = vpow.pop %v1100
    %v1102 = vsel %vm640, %v1095, 0.0
    %1103 = vadd.xlane.f32.xlu0 %v1102
    %v1104 = vpop.xlane.xlu0 %1103
    %v1105 = vsel %vm640, %v1097, 0.0
    %1106 = vadd.xlane.f32.xlu0 %v1105
    %v1107 = vpop.xlane.xlu0 %1106
    %v1108 = vsel %vm640, %v1099, 0.0
    %1109 = vadd.xlane.f32.xlu0 %v1108
    %v1110 = vpop.xlane.xlu0 %1109
    %v1111 = vsel %vm640, %v1101, 0.0
    %1112 = vadd.xlane.f32.xlu0 %v1111
    %v1113 = vpop.xlane.xlu0 %1112
    %v1114 = vrcp.pop %v1104
    %v1115 = vrcp.pop %v1107
    %v1116 = vrcp.pop %v1110
    %v1117 = vrcp.pop %v1113
    %v1118 = vmul.f32 %v1095, %v1114
    %v1119 = vmul.f32 %v1097, %v1115
    %v1120 = vmul.f32 %v1099, %v1116
    %v1121 = vmul.f32 %v1101, %v1117
    %v1122 = vpack.c.bf16 %v1119, %v1118
    %v1123 = vpack.c.bf16 %v1121, %v1120
    %1124 = vrot.lane.b32.xlu0 %v638, 64
    %v1125 = vpop.permute.xlu0 %1124
    %1126 = vrot.lane.b32.xlu0 %v639, 64
    %v1127 = vpop.permute.xlu0 %1126
    %v1131 = vsel %vm640, %v1122, 0
    %v1134 = vsel %vm640, %v1123, 0
    %1136 = vmatprep.subr.bf16.mxu0 0
    %1137 = vmatpush1.bf16.msra.mxu0 %v1125
    %1138 = vmatprep.subr.bf16.mxu0 0
    %1139 = vmatpush1.bf16.msra.mxu0 %v1127
    %1140 = vmatprep.subr.bf16.mxu0 0
    %1141 = vmatpush1.bf16.msra.mxu0 0
    %1142 = vmatprep.subr.bf16.mxu0 0
    %1143 = vmatpush1.bf16.msra.mxu0 0
    %1144 = vmatprep.subr.bf16.mxu0 0
    %1145 = vmatpush1.bf16.msra.mxu0 0
    %1146 = vmatprep.subr.bf16.mxu0 0
    %1147 = vmatpush1.bf16.msra.mxu0 0
    %1148 = vmatprep.subr.bf16.mxu0 0
    %1149 = vmatpush1.bf16.msra.mxu0 0
    %1150 = vmatprep.subr.bf16.mxu0 0
    %1151 = vmatpush1.bf16.msra.mxu0 0
    %1152 = vmatprep.subr.bf16.mxu0 0
    %1153 = vmatpush1.bf16.msra.mxu0 0
    %1154 = vmatprep.subr.bf16.mxu0 0
    %1155 = vmatpush1.bf16.msra.mxu0 0
    %1156 = vmatprep.subr.bf16.mxu0 0
    %1157 = vmatpush1.bf16.msra.mxu0 0
    %1158 = vmatprep.subr.bf16.mxu0 0
    %1159 = vmatpush1.bf16.msra.mxu0 0
    %1160 = vmatprep.subr.bf16.mxu0 0
    %1161 = vmatpush1.bf16.msra.mxu0 0
    %1162 = vmatprep.subr.bf16.mxu0 0
    %1163 = vmatpush1.bf16.msra.mxu0 0
    %1164 = vmatprep.subr.bf16.mxu0 0
    %1165 = vmatpush1.bf16.msra.mxu0 0
    %1166 = vmatprep.subr.bf16.mxu0 0
    %1167 = vmatpush1.bf16.msra.mxu0 0
    %1168 = vmatprep.mubr.bf16.mxu0 0
    %1169 = vmatmul.mubr.bf16.gmra.mrb[0].mxu0 %v1131
    %v1170 = vpop.f32.mrb[0].mxu0
    %v1171 = vadd.f32 0.0, %v1170
    %v1172 = vpop.f32.mrb[0].mxu0
    %v1173 = vpop.f32.mrb[0].mxu0
    %v1174 = vadd.f32 0.0, %v1173
    %v1175 = vpop.f32.mrb[0].mxu0
    %1176 = vmatprep.mubr.bf16.mxu0 0
    %1177 = vmatmul.mubr.bf16.gmra.mrb[0].mxu0 %v1134
    %v1178 = vpop.f32.mrb[0].mxu0
    %v1179 = vadd.f32 0.0, %v1178
    %v1180 = vpop.f32.mrb[0].mxu0
    %v1181 = vpop.f32.mrb[0].mxu0
    %v1182 = vadd.f32 0.0, %v1181
    %v1183 = vpop.f32.mrb[0].mxu0
    %1184 = vdwg.mxu0
    %1185 = vrot.lane.b32.xlu0 %v634, 32
    %v1186 = vpop.permute.xlu0 %1185
    %1187 = vrot.lane.b32.xlu0 %v635, 32
    %v1188 = vpop.permute.xlu0 %1187
    %1189 = vrot.lane.b32.xlu0 %v636, 32
    %v1190 = vpop.permute.xlu0 %1189
    %1191 = vrot.lane.b32.xlu0 %v637, 32
    %v1192 = vpop.permute.xlu0 %1191
    %v1194 = vsel %vm640, %v1186, 0
    %v1197 = vsel %vm640, %v1188, 0
    %v1200 = vsel %vm640, %v1190, 0
    %v1203 = vsel %vm640, %v1192, 0
    %1205 = vmatprep.subr.bf16.mxu0 0
    %1206 = vmatpush1.bf16.xpose.msra.mxu0 %v1200
    %1207 = vmatprep.subr.bf16.mxu0 0
    %1208 = vmatpush1.bf16.xpose.msra.mxu0 %v1203
    %1209 = vmatprep.subr.bf16.mxu0 0
    %1210 = vmatpush1.bf16.xpose.msra.mxu0 0
    %1211 = vmatprep.subr.bf16.mxu0 0
    %1212 = vmatpush1.bf16.xpose.msra.mxu0 0
    %1213 = vmatprep.subr.bf16.mxu0 0
    %1214 = vmatpush1.bf16.xpose.msra.mxu0 0
    %1215 = vmatprep.subr.bf16.mxu0 0
    %1216 = vmatpush1.bf16.xpose.msra.mxu0 0
    %1217 = vmatprep.subr.bf16.mxu0 0
    %1218 = vmatpush1.bf16.xpose.msra.mxu0 0
    %1219 = vmatprep.subr.bf16.mxu0 0
    %1220 = vmatpush1.bf16.xpose.msra.mxu0 0
    %1221 = vmatprep.subr.bf16.mxu0 0
    %1222 = vmatpush1.bf16.xpose.msra.mxu0 0
    %1223 = vmatprep.subr.bf16.mxu0 0
    %1224 = vmatpush1.bf16.xpose.msra.mxu0 0
    %1225 = vmatprep.subr.bf16.mxu0 0
    %1226 = vmatpush1.bf16.xpose.msra.mxu0 0
    %1227 = vmatprep.subr.bf16.mxu0 0
    %1228 = vmatpush1.bf16.xpose.msra.mxu0 0
    %1229 = vmatprep.subr.bf16.mxu0 0
    %1230 = vmatpush1.bf16.xpose.msra.mxu0 0
    %1231 = vmatprep.subr.bf16.mxu0 0
    %1232 = vmatpush1.bf16.xpose.msra.mxu0 0
    %1233 = vmatprep.subr.bf16.mxu0 0
    %1234 = vmatpush1.bf16.xpose.msra.mxu0 0
    %1235 = vmatprep.subr.bf16.mxu0 0
    %1236 = vmatpush1.bf16.xpose.msra.mxu0 0
    %1237 = vmatprep.mubr.bf16.mxu0 0
    %1238 = vmatmul.mubr.bf16.gmra.mrb[0].mxu0 %v1194
    %v1239 = vpop.f32.mrb[0].mxu0
    %v1240 = vadd.f32 0.0, %v1239
    %v1241 = vpop.f32.mrb[0].mxu0
    %v1242 = vpop.f32.mrb[0].mxu0
    %v1243 = vadd.f32 0.0, %v1242
    %v1244 = vpop.f32.mrb[0].mxu0
    %1245 = vmatprep.mubr.bf16.mxu0 0
    %1246 = vmatmul.mubr.bf16.gmra.mrb[0].mxu0 %v1197
    %v1247 = vpop.f32.mrb[0].mxu0
    %v1248 = vadd.f32 0.0, %v1247
    %v1249 = vpop.f32.mrb[0].mxu0
    %v1250 = vpop.f32.mrb[0].mxu0
    %v1251 = vadd.f32 0.0, %v1250
    %v1252 = vpop.f32.mrb[0].mxu0
    %1253 = vdwg.mxu0
    %v1254 = vmul.f32 %v1240, 0.17677669
    %v1255 = vmul.f32 %v1243, 0.17677669
    %v1256 = vmul.f32 %v1248, 0.17677669
    %v1257 = vmul.f32 %v1251, 0.17677669
    %v1258 = vadd.f32 %v1254, %v282
    %v1259 = vadd.f32 %v1255, %v283
    %v1260 = vadd.f32 %v1256, %v284
    %v1261 = vadd.f32 %v1257, %v285
    %v1262 = vsel %vm640, %v1258, -inf
    %1263 = vmax.xlane.f32.xlu0 %v1262
    %v1264 = vpop.xlane.xlu0 %1263
    %v1265 = vsel %vm640, %v1259, -inf
    %1266 = vmax.xlane.f32.xlu0 %v1265
    %v1267 = vpop.xlane.xlu0 %1266
    %v1268 = vsel %vm640, %v1260, -inf
    %1269 = vmax.xlane.f32.xlu0 %v1268
    %v1270 = vpop.xlane.xlu0 %1269
    %v1271 = vsel %vm640, %v1261, -inf
    %1272 = vmax.xlane.f32.xlu0 %v1271
    %v1273 = vpop.xlane.xlu0 %1272
    %v1274 = vsub.f32 %v1258, %v1264
    %v1275 = vsub.f32 %v1259, %v1267
    %v1276 = vsub.f32 %v1260, %v1270
    %v1277 = vsub.f32 %v1261, %v1273
    %v1278 = vmul.f32 %v1274, 1.442695
    %v1279 = vpow.pop %v1278
    %v1280 = vmul.f32 %v1275, 1.442695
    %v1281 = vpow.pop %v1280
    %v1282 = vmul.f32 %v1276, 1.442695
    %v1283 = vpow.pop %v1282
    %v1284 = vmul.f32 %v1277, 1.442695
    %v1285 = vpow.pop %v1284
    %v1286 = vsel %vm640, %v1279, 0.0
    %1287 = vadd.xlane.f32.xlu0 %v1286
    %v1288 = vpop.xlane.xlu0 %1287
    %v1289 = vsel %vm640, %v1281, 0.0
    %1290 = vadd.xlane.f32.xlu0 %v1289
    %v1291 = vpop.xlane.xlu0 %1290
    %v1292 = vsel %vm640, %v1283, 0.0
    %1293 = vadd.xlane.f32.xlu0 %v1292
    %v1294 = vpop.xlane.xlu0 %1293
    %v1295 = vsel %vm640, %v1285, 0.0
    %1296 = vadd.xlane.f32.xlu0 %v1295
    %v1297 = vpop.xlane.xlu0 %1296
    %v1298 = vrcp.pop %v1288
    %v1299 = vrcp.pop %v1291
    %v1300 = vrcp.pop %v1294
    %v1301 = vrcp.pop %v1297
    %v1302 = vmul.f32 %v1279, %v1298
    %v1303 = vmul.f32 %v1281, %v1299
    %v1304 = vmul.f32 %v1283, %v1300
    %v1305 = vmul.f32 %v1285, %v1301
    %v1306 = vpack.c.bf16 %v1303, %v1302
    %v1307 = vpack.c.bf16 %v1305, %v1304
    %1308 = vrot.lane.b32.xlu0 %v638, 32
    %v1309 = vpop.permute.xlu0 %1308
    %1310 = vrot.lane.b32.xlu0 %v639, 32
    %v1311 = vpop.permute.xlu0 %1310
    %v1315 = vsel %vm640, %v1306, 0
    %v1318 = vsel %vm640, %v1307, 0
    %1320 = vmatprep.subr.bf16.mxu0 0
    %1321 = vmatpush1.bf16.msra.mxu0 %v1309
    %1322 = vmatprep.subr.bf16.mxu0 0
    %1323 = vmatpush1.bf16.msra.mxu0 %v1311
    %1324 = vmatprep.subr.bf16.mxu0 0
    %1325 = vmatpush1.bf16.msra.mxu0 0
    %1326 = vmatprep.subr.bf16.mxu0 0
    %1327 = vmatpush1.bf16.msra.mxu0 0
    %1328 = vmatprep.subr.bf16.mxu0 0
    %1329 = vmatpush1.bf16.msra.mxu0 0
    %1330 = vmatprep.subr.bf16.mxu0 0
    %1331 = vmatpush1.bf16.msra.mxu0 0
    %1332 = vmatprep.subr.bf16.mxu0 0
    %1333 = vmatpush1.bf16.msra.mxu0 0
    %1334 = vmatprep.subr.bf16.mxu0 0
    %1335 = vmatpush1.bf16.msra.mxu0 0
    %1336 = vmatprep.subr.bf16.mxu0 0
    %1337 = vmatpush1.bf16.msra.mxu0 0
    %1338 = vmatprep.subr.bf16.mxu0 0
    %1339 = vmatpush1.bf16.msra.mxu0 0
    %1340 = vmatprep.subr.bf16.mxu0 0
    %1341 = vmatpush1.bf16.msra.mxu0 0
    %1342 = vmatprep.subr.bf16.mxu0 0
    %1343 = vmatpush1.bf16.msra.mxu0 0
    %1344 = vmatprep.subr.bf16.mxu0 0
    %1345 = vmatpush1.bf16.msra.mxu0 0
    %1346 = vmatprep.subr.bf16.mxu0 0
    %1347 = vmatpush1.bf16.msra.mxu0 0
    %1348 = vmatprep.subr.bf16.mxu0 0
    %1349 = vmatpush1.bf16.msra.mxu0 0
    %1350 = vmatprep.subr.bf16.mxu0 0
    %1351 = vmatpush1.bf16.msra.mxu0 0
    %1352 = vmatprep.mubr.bf16.mxu0 0
    %1353 = vmatmul.mubr.bf16.gmra.mrb[0].mxu0 %v1315
    %v1354 = vpop.f32.mrb[0].mxu0
    %v1355 = vadd.f32 0.0, %v1354
    %v1356 = vpop.f32.mrb[0].mxu0
    %v1357 = vpop.f32.mrb[0].mxu0
    %v1358 = vadd.f32 0.0, %v1357
    %v1359 = vpop.f32.mrb[0].mxu0
    %1360 = vmatprep.mubr.bf16.mxu0 0
    %1361 = vmatmul.mubr.bf16.gmra.mrb[0].mxu0 %v1318
    %v1362 = vpop.f32.mrb[0].mxu0
    %v1363 = vadd.f32 0.0, %v1362
    %v1364 = vpop.f32.mrb[0].mxu0
    %v1365 = vpop.f32.mrb[0].mxu0
    %v1366 = vadd.f32 0.0, %v1365
    %v1367 = vpop.f32.mrb[0].mxu0
    %1368 = vdwg.mxu0
    %1373 = vrot.lane.b32.xlu0 %v987, 32
    %v1374 = vpop.permute.xlu0 %1373
    %1375 = vrot.lane.b32.xlu0 %v990, 32
    %v1376 = vpop.permute.xlu0 %1375
    %1377 = vrot.lane.b32.xlu0 %v995, 32
    %v1378 = vpop.permute.xlu0 %1377
    %1379 = vrot.lane.b32.xlu0 %v998, 32
    %v1380 = vpop.permute.xlu0 %1379
    %1389 = vrot.lane.b32.xlu0 %v1171, 64
    %v1390 = vpop.permute.xlu0 %1389
    %1391 = vrot.lane.b32.xlu0 %v1174, 64
    %v1392 = vpop.permute.xlu0 %1391
    %1393 = vrot.lane.b32.xlu0 %v1179, 64
    %v1394 = vpop.permute.xlu0 %1393
    %1395 = vrot.lane.b32.xlu0 %v1182, 64
    %v1396 = vpop.permute.xlu0 %1395
    %1405 = vrot.lane.b32.xlu0 %v1355, 96
    %v1406 = vpop.permute.xlu0 %1405
    %1407 = vrot.lane.b32.xlu0 %v1358, 96
    %v1408 = vpop.permute.xlu0 %1407
    %1409 = vrot.lane.b32.xlu0 %v1363, 96
    %v1410 = vpop.permute.xlu0 %1409
    %1411 = vrot.lane.b32.xlu0 %v1366, 96
    %v1412 = vpop.permute.xlu0 %1411
    %v1417 = vsel %vm640, %v797, %v1374
    %v1418 = vsel %vm640, %v800, %v1376
    %v1419 = vsel %vm640, %v805, %v1378
    %v1420 = vsel %vm640, %v808, %v1380
    %vm1421 = vcmask 523264
    %v1422 = vsel %vm1421, %v1417, %v1390
    %v1423 = vsel %vm1421, %v1418, %v1392
    %v1424 = vsel %vm1421, %v1419, %v1394
    %v1425 = vsel %vm1421, %v1420, %v1396
    %vm1426 = vcmask 785408
    %v1427 = vsel %vm1426, %v1422, %v1406
    %v1428 = vsel %vm1426, %v1423, %v1408
    %v1429 = vsel %vm1426, %v1424, %v1410
    %v1430 = vsel %vm1426, %v1425, %v1412
    %v1431 = vpack.c.bf16 %v1428, %v1427
    %v1432 = vpack.c.bf16 %v1430, %v1429
    %v1433 = vld [vmem:[#allocation8] sm:$0xf]
    %v1434 = vld [vmem:[#allocation8 + $0x4] sm:$0xf]
    %v1435 = vld [vmem:[#allocation8 + $0x8] sm:$0xf]
    %v1436 = vld [vmem:[#allocation8 + $0xc] sm:$0xf]
    %v1437 = vld [vmem:[#allocation8 + $0x10] sm:$0xf]
    %v1438 = vld [vmem:[#allocation8 + $0x14] sm:$0xf]
    %v1439 = vld [vmem:[#allocation8 + $0x18] sm:$0xf]
    %v1440 = vld [vmem:[#allocation8 + $0x1c] sm:$0xf]
    %v1441 = vld [vmem:[#allocation8 + $0x20] sm:$0xf]
    %v1442 = vld [vmem:[#allocation8 + $0x24] sm:$0xf]
    %v1443 = vld [vmem:[#allocation8 + $0x28] sm:$0xf]
    %v1444 = vld [vmem:[#allocation8 + $0x2c] sm:$0xf]
    %v1445 = vld [vmem:[#allocation8 + $0x30] sm:$0xf]
    %v1446 = vld [vmem:[#allocation8 + $0x34] sm:$0xf]
    %v1447 = vld [vmem:[#allocation8 + $0x38] sm:$0xf]
    %v1448 = vld [vmem:[#allocation8 + $0x3c] sm:$0xf]
    %v1465 = vunpack.c.l.b16 %v1433
    %v1466 = vunpack.c.l.b16 %v1434
    %v1467 = vunpack.c.l.b16 %v1435
    %v1468 = vunpack.c.l.b16 %v1436
    %v1469 = vunpack.c.l.b16 %v1437
    %v1470 = vunpack.c.l.b16 %v1438
    %v1471 = vunpack.c.l.b16 %v1439
    %v1472 = vunpack.c.l.b16 %v1440
    %v1473 = vunpack.c.l.b16 %v1441
    %v1474 = vunpack.c.l.b16 %v1442
    %v1475 = vunpack.c.l.b16 %v1443
    %v1476 = vunpack.c.l.b16 %v1444
    %v1477 = vunpack.c.l.b16 %v1445
    %v1478 = vunpack.c.l.b16 %v1446
    %v1479 = vunpack.c.l.b16 %v1447
    %v1480 = vunpack.c.l.b16 %v1448
    %v1481 = vpack.c.b16 %v1466, %v1465
    %v1482 = vpack.c.b16 %v1468, %v1467
    %v1483 = vpack.c.b16 %v1470, %v1469
    %v1484 = vpack.c.b16 %v1472, %v1471
    %v1485 = vpack.c.b16 %v1474, %v1473
    %v1486 = vpack.c.b16 %v1476, %v1475
    %v1487 = vpack.c.b16 %v1478, %v1477
    %v1488 = vpack.c.b16 %v1480, %v1479
    %1497 = vmatprep.subr.bf16.mxu0 0
    %1498 = vmatpush1.bf16.msra.mxu0 %v1481
    %1499 = vmatprep.subr.bf16.mxu0 0
    %1500 = vmatpush1.bf16.msra.mxu0 %v1482
    %1501 = vmatprep.subr.bf16.mxu0 0
    %1502 = vmatpush1.bf16.msra.mxu0 %v1483
    %1503 = vmatprep.subr.bf16.mxu0 0
    %1504 = vmatpush1.bf16.msra.mxu0 %v1484
    %1505 = vmatprep.subr.bf16.mxu0 0
    %1506 = vmatpush1.bf16.msra.mxu0 %v1485
    %1507 = vmatprep.subr.bf16.mxu0 0
    %1508 = vmatpush1.bf16.msra.mxu0 %v1486
    %1509 = vmatprep.subr.bf16.mxu0 0
    %1510 = vmatpush1.bf16.msra.mxu0 %v1487
    %1511 = vmatprep.subr.bf16.mxu0 0
    %1512 = vmatpush1.bf16.msra.mxu0 %v1488
    %1513 = vmatprep.subr.bf16.mxu0 0
    %1514 = vmatpush1.bf16.msra.mxu0 0
    %1515 = vmatprep.subr.bf16.mxu0 0
    %1516 = vmatpush1.bf16.msra.mxu0 0
    %1517 = vmatprep.subr.bf16.mxu0 0
    %1518 = vmatpush1.bf16.msra.mxu0 0
    %1519 = vmatprep.subr.bf16.mxu0 0
    %1520 = vmatpush1.bf16.msra.mxu0 0
    %1521 = vmatprep.subr.bf16.mxu0 0
    %1522 = vmatpush1.bf16.msra.mxu0 0
    %1523 = vmatprep.subr.bf16.mxu0 0
    %1524 = vmatpush1.bf16.msra.mxu0 0
    %1525 = vmatprep.subr.bf16.mxu0 0
    %1526 = vmatpush1.bf16.msra.mxu0 0
    %1527 = vmatprep.subr.bf16.mxu0 0
    %1528 = vmatpush1.bf16.msra.mxu0 0
    %1529 = vmatprep.mubr.bf16.mxu0 0
    %1530 = vmatmul.mubr.bf16.gmra.mrb[0].mxu0 %v1431
    %v1531 = vpop.f32.mrb[0].mxu0
    %v1532 = vadd.f32 0.0, %v1531
    %v1533 = vpop.f32.mrb[0].mxu0
    %v1534 = vpop.f32.mrb[0].mxu0
    %v1535 = vadd.f32 0.0, %v1534
    %v1536 = vpop.f32.mrb[0].mxu0
    %1537 = vmatprep.mubr.bf16.mxu0 0
    %1538 = vmatmul.mubr.bf16.gmra.mrb[0].mxu0 %v1432
    %v1539 = vpop.f32.mrb[0].mxu0
    %v1540 = vadd.f32 0.0, %v1539
    %v1541 = vpop.f32.mrb[0].mxu0
    %v1542 = vpop.f32.mrb[0].mxu0
    %v1543 = vadd.f32 0.0, %v1542
    %v1544 = vpop.f32.mrb[0].mxu0
    %1545 = vdwg.mxu0
    %v1546 = vadd.f32 %v278, %v1532
    %v1547 = vadd.f32 %v279, %v1535
    %v1548 = vadd.f32 %v280, %v1540
    %v1549 = vadd.f32 %v281, %v1543
    %v1550 = vld [vmem:[#allocation10] sm:$0x1]
    %v1552 = vlaneseq
    %v1553 = vshrl.u32 %v1552, 7
    %v1554 = vsub.s32 0, %v1553
    %v1555 = vrot.slane %v1550, %v1554
    %v1557 = vadd.f32 %v1546, %v1555
    %v1558 = vadd.f32 %v1547, %v1555
    %v1559 = vadd.f32 %v1548, %v1555
    %v1560 = vadd.f32 %v1549, %v1555
    %v1561 = vld [vmem:[#allocation11] sm:$0x1]
    %v1562 = vld [vmem:[#allocation13] sm:$0x1]
    %1563 = vadd.xlane.f32.xlu0 %v1557
    %v1564 = vpop.xlane.xlu0 %1563
    %1565 = vadd.xlane.f32.xlu0 %v1558
    %v1566 = vpop.xlane.xlu0 %1565
    %1567 = vadd.xlane.f32.xlu0 %v1559
    %v1568 = vpop.xlane.xlu0 %1567
    %1569 = vadd.xlane.f32.xlu0 %v1560
    %v1570 = vpop.xlane.xlu0 %1569
    %v1571 = vmul.f32 %v1564, %v296
    %v1572 = vmul.f32 %v1566, %v296
    %v1573 = vmul.f32 %v1568, %v296
    %v1574 = vmul.f32 %v1570, %v296
    %v1575 = vsub.f32 %v1557, %v1571
    %v1576 = vsub.f32 %v1558, %v1572
    %v1577 = vsub.f32 %v1559, %v1573
    %v1578 = vsub.f32 %v1560, %v1574
    %v1579 = vmul.f32 %v1575, %v1575
    %v1580 = vmul.f32 %v1576, %v1576
    %v1581 = vmul.f32 %v1577, %v1577
    %v1582 = vmul.f32 %v1578, %v1578
    %1583 = vadd.xlane.f32.xlu0 %v1579
    %v1584 = vpop.xlane.xlu0 %1583
    %1585 = vadd.xlane.f32.xlu0 %v1580
    %v1586 = vpop.xlane.xlu0 %1585
    %1587 = vadd.xlane.f32.xlu0 %v1581
    %v1588 = vpop.xlane.xlu0 %1587
    %1589 = vadd.xlane.f32.xlu0 %v1582
    %v1590 = vpop.xlane.xlu0 %1589
    %v1591 = vmul.f32 %v1584, %v296
    %v1592 = vmul.f32 %v1586, %v296
    %v1593 = vmul.f32 %v1588, %v296
    %v1594 = vmul.f32 %v1590, %v296
    %v1595 = vadd.f32 %v1591, 1e-05
    %v1596 = vadd.f32 %v1592, 1e-05
    %v1597 = vadd.f32 %v1593, 1e-05
    %v1598 = vadd.f32 %v1594, 1e-05
    %v1599 = vrsqrt.pop %v1595
    %v1600 = vrsqrt.pop %v1596
    %v1601 = vrsqrt.pop %v1597
    %v1602 = vrsqrt.pop %v1598
    %v1603 = vmul.f32 %v1575, %v1599
    %v1604 = vmul.f32 %v1576, %v1600
    %v1605 = vmul.f32 %v1577, %v1601
    %v1606 = vmul.f32 %v1578, %v1602
    %v1608 = vlaneseq
    %v1609 = vshrl.u32 %v1608, 7
    %v1610 = vsub.s32 0, %v1609
    %v1611 = vrot.slane %v1561, %v1610
    %v1613 = vmul.f32 %v1603, %v1611
    %v1614 = vmul.f32 %v1604, %v1611
    %v1615 = vmul.f32 %v1605, %v1611
    %v1616 = vmul.f32 %v1606, %v1611
    %v1618 = vlaneseq
    %v1619 = vshrl.u32 %v1618, 7
    %v1620 = vsub.s32 0, %v1619
    %v1621 = vrot.slane %v1562, %v1620
    %v1623 = vadd.f32 %v1613, %v1621
    %v1624 = vadd.f32 %v1614, %v1621
    %v1625 = vadd.f32 %v1615, %v1621
    %v1626 = vadd.f32 %v1616, %v1621
    %v1627 = vpack.c.bf16 %v1624, %v1623
    %v1628 = vpack.c.bf16 %v1626, %v1625
    %v1629 = vld [vmem:[#allocation14] sm:$0xff]
    %v1630 = vld [vmem:[#allocation14 + $0x8] sm:$0xff]
    %v1631 = vld [vmem:[#allocation14 + $0x10] sm:$0xff]
    %v1632 = vld [vmem:[#allocation14 + $0x18] sm:$0xff]
    %v1633 = vld [vmem:[#allocation14 + $0x20] sm:$0xff]
    %v1634 = vld [vmem:[#allocation14 + $0x28] sm:$0xff]
    %v1635 = vld [vmem:[#allocation14 + $0x30] sm:$0xff]
    %v1636 = vld [vmem:[#allocation14 + $0x38] sm:$0xff]
    %v1637 = vld [vmem:[#allocation14 + $0x40] sm:$0xff]
    %v1638 = vld [vmem:[#allocation14 + $0x48] sm:$0xff]
    %v1639 = vld [vmem:[#allocation14 + $0x50] sm:$0xff]
    %v1640 = vld [vmem:[#allocation14 + $0x58] sm:$0xff]
    %v1641 = vld [vmem:[#allocation14 + $0x60] sm:$0xff]
    %v1642 = vld [vmem:[#allocation14 + $0x68] sm:$0xff]
    %v1643 = vld [vmem:[#allocation14 + $0x70] sm:$0xff]
    %v1644 = vld [vmem:[#allocation14 + $0x78] sm:$0xff]
    %v1645 = vld [vmem:[#allocation14 + $0x80] sm:$0xff]
    %v1646 = vld [vmem:[#allocation14 + $0x88] sm:$0xff]
    %v1647 = vld [vmem:[#allocation14 + $0x90] sm:$0xff]
    %v1648 = vld [vmem:[#allocation14 + $0x98] sm:$0xff]
    %v1649 = vld [vmem:[#allocation14 + $0xa0] sm:$0xff]
    %v1650 = vld [vmem:[#allocation14 + $0xa8] sm:$0xff]
    %v1651 = vld [vmem:[#allocation14 + $0xb0] sm:$0xff]
    %v1652 = vld [vmem:[#allocation14 + $0xb8] sm:$0xff]
    %v1653 = vld [vmem:[#allocation14 + $0xc0] sm:$0xff]
    %v1654 = vld [vmem:[#allocation14 + $0xc8] sm:$0xff]
    %v1655 = vld [vmem:[#allocation14 + $0xd0] sm:$0xff]
    %v1656 = vld [vmem:[#allocation14 + $0xd8] sm:$0xff]
    %v1657 = vld [vmem:[#allocation14 + $0xe0] sm:$0xff]
    %v1658 = vld [vmem:[#allocation14 + $0xe8] sm:$0xff]
    %v1659 = vld [vmem:[#allocation14 + $0xf0] sm:$0xff]
    %v1660 = vld [vmem:[#allocation14 + $0xf8] sm:$0xff]
    %v1661 = vld [vmem:[#allocation16] sm:$0xf]
    %v1663 = vlaneseq
    %v1664 = vshrl.u32 %v1663, 7
    %v1665 = vsub.s32 0, %v1664
    %v1666 = vrot.slane %v1661, %v1665
    %v1667 = vlaneseq
    %v1668 = vshrl.u32 %v1667, 7
    %v1669 = vsub.s32 1, %v1668
    %v1670 = vrot.slane %v1661, %v1669
    %v1671 = vlaneseq
    %v1672 = vshrl.u32 %v1671, 7
    %v1673 = vsub.s32 2, %v1672
    %v1674 = vrot.slane %v1661, %v1673
    %v1675 = vlaneseq
    %v1676 = vshrl.u32 %v1675, 7
    %v1677 = vsub.s32 3, %v1676
    %v1678 = vrot.slane %v1661, %v1677
    %v1715 = vunpack.c.l.b16 %v1629
    %v1716 = vunpack.c.h.b16 %v1629
    %v1717 = vunpack.c.l.b16 %v1630
    %v1718 = vunpack.c.h.b16 %v1630
    %v1719 = vunpack.c.l.b16 %v1631
    %v1720 = vunpack.c.h.b16 %v1631
    %v1721 = vunpack.c.l.b16 %v1632
    %v1722 = vunpack.c.h.b16 %v1632
    %v1723 = vunpack.c.l.b16 %v1633
    %v1724 = vunpack.c.h.b16 %v1633
    %v1725 = vunpack.c.l.b16 %v1634
    %v1726 = vunpack.c.h.b16 %v1634
    %v1727 = vunpack.c.l.b16 %v1635
    %v1728 = vunpack.c.h.b16 %v1635
    %v1729 = vunpack.c.l.b16 %v1636
    %v1730 = vunpack.c.h.b16 %v1636
    %v1731 = vunpack.c.l.b16 %v1637
    %v1732 = vunpack.c.h.b16 %v1637
    %v1733 = vunpack.c.l.b16 %v1638
    %v1734 = vunpack.c.h.b16 %v1638
    %v1735 = vunpack.c.l.b16 %v1639
    %v1736 = vunpack.c.h.b16 %v1639
    %v1737 = vunpack.c.l.b16 %v1640
    %v1738 = vunpack.c.h.b16 %v1640
    %v1739 = vunpack.c.l.b16 %v1641
    %v1740 = vunpack.c.h.b16 %v1641
    %v1741 = vunpack.c.l.b16 %v1642
    %v1742 = vunpack.c.h.b16 %v1642
    %v1743 = vunpack.c.l.b16 %v1643
    %v1744 = vunpack.c.h.b16 %v1643
    %v1745 = vunpack.c.l.b16 %v1644
    %v1746 = vunpack.c.h.b16 %v1644
    %v1747 = vunpack.c.l.b16 %v1645
    %v1748 = vunpack.c.h.b16 %v1645
    %v1749 = vunpack.c.l.b16 %v1646
    %v1750 = vunpack.c.h.b16 %v1646
    %v1751 = vunpack.c.l.b16 %v1647
    %v1752 = vunpack.c.h.b16 %v1647
    %v1753 = vunpack.c.l.b16 %v1648
    %v1754 = vunpack.c.h.b16 %v1648
    %v1755 = vunpack.c.l.b16 %v1649
    %v1756 = vunpack.c.h.b16 %v1649
    %v1757 = vunpack.c.l.b16 %v1650
    %v1758 = vunpack.c.h.b16 %v1650
    %v1759 = vunpack.c.l.b16 %v1651
    %v1760 = vunpack.c.h.b16 %v1651
    %v1761 = vunpack.c.l.b16 %v1652
    %v1762 = vunpack.c.h.b16 %v1652
    %v1763 = vunpack.c.l.b16 %v1653
    %v1764 = vunpack.c.h.b16 %v1653
    %v1765 = vunpack.c.l.b16 %v1654
    %v1766 = vunpack.c.h.b16 %v1654
    %v1767 = vunpack.c.l.b16 %v1655
    %v1768 = vunpack.c.h.b16 %v1655
    %v1769 = vunpack.c.l.b16 %v1656
    %v1770 = vunpack.c.h.b16 %v1656
    %v1771 = vunpack.c.l.b16 %v1657
    %v1772 = vunpack.c.h.b16 %v1657
    %v1773 = vunpack.c.l.b16 %v1658
    %v1774 = vunpack.c.h.b16 %v1658
    %v1775 = vunpack.c.l.b16 %v1659
    %v1776 = vunpack.c.h.b16 %v1659
    %v1777 = vunpack.c.l.b16 %v1660
    %v1778 = vunpack.c.h.b16 %v1660
    %v1779 = vpack.c.b16 %v1719, %v1715
    %v1780 = vpack.c.b16 %v1720, %v1716
    %v1781 = vpack.c.b16 %v1721, %v1717
    %v1782 = vpack.c.b16 %v1722, %v1718
    %v1783 = vpack.c.b16 %v1727, %v1723
    %v1784 = vpack.c.b16 %v1728, %v1724
    %v1785 = vpack.c.b16 %v1729, %v1725
    %v1786 = vpack.c.b16 %v1730, %v1726
    %v1787 = vpack.c.b16 %v1735, %v1731
    %v1788 = vpack.c.b16 %v1736, %v1732
    %v1789 = vpack.c.b16 %v1737, %v1733
    %v1790 = vpack.c.b16 %v1738, %v1734
    %v1791 = vpack.c.b16 %v1743, %v1739
    %v1792 = vpack.c.b16 %v1744, %v1740
    %v1793 = vpack.c.b16 %v1745, %v1741
    %v1794 = vpack.c.b16 %v1746, %v1742
    %v1795 = vpack.c.b16 %v1751, %v1747
    %v1796 = vpack.c.b16 %v1752, %v1748
    %v1797 = vpack.c.b16 %v1753, %v1749
    %v1798 = vpack.c.b16 %v1754, %v1750
    %v1799 = vpack.c.b16 %v1759, %v1755
    %v1800 = vpack.c.b16 %v1760, %v1756
    %v1801 = vpack.c.b16 %v1761, %v1757
    %v1802 = vpack.c.b16 %v1762, %v1758
    %v1803 = vpack.c.b16 %v1767, %v1763
    %v1804 = vpack.c.b16 %v1768, %v1764
    %v1805 = vpack.c.b16 %v1769, %v1765
    %v1806 = vpack.c.b16 %v1770, %v1766
    %v1807 = vpack.c.b16 %v1775, %v1771
    %v1808 = vpack.c.b16 %v1776, %v1772
    %v1809 = vpack.c.b16 %v1777, %v1773
    %v1810 = vpack.c.b16 %v1778, %v1774
    %1843 = vmatprep.subr.bf16.mxu0 %v1780
    %1844 = vmatpush1.bf16.msra.mxu0 %v1779
    %1845 = vmatprep.subr.bf16.mxu0 %v1784
    %1846 = vmatpush1.bf16.msra.mxu0 %v1783
    %1847 = vmatprep.subr.bf16.mxu0 %v1788
    %1848 = vmatpush1.bf16.msra.mxu0 %v1787
    %1849 = vmatprep.subr.bf16.mxu0 %v1792
    %1850 = vmatpush1.bf16.msra.mxu0 %v1791
    %1851 = vmatprep.subr.bf16.mxu0 %v1796
    %1852 = vmatpush1.bf16.msra.mxu0 %v1795
    %1853 = vmatprep.subr.bf16.mxu0 %v1800
    %1854 = vmatpush1.bf16.msra.mxu0 %v1799
    %1855 = vmatprep.subr.bf16.mxu0 %v1804
    %1856 = vmatpush1.bf16.msra.mxu0 %v1803
    %1857 = vmatprep.subr.bf16.mxu0 %v1808
    %1858 = vmatpush1.bf16.msra.mxu0 %v1807
    %1859 = vmatprep.subr.bf16.mxu0 0
    %1860 = vmatpush1.bf16.msra.mxu0 0
    %1861 = vmatprep.subr.bf16.mxu0 0
    %1862 = vmatpush1.bf16.msra.mxu0 0
    %1863 = vmatprep.subr.bf16.mxu0 0
    %1864 = vmatpush1.bf16.msra.mxu0 0
    %1865 = vmatprep.subr.bf16.mxu0 0
    %1866 = vmatpush1.bf16.msra.mxu0 0
    %1867 = vmatprep.subr.bf16.mxu0 0
    %1868 = vmatpush1.bf16.msra.mxu0 0
    %1869 = vmatprep.subr.bf16.mxu0 0
    %1870 = vmatpush1.bf16.msra.mxu0 0
    %1871 = vmatprep.subr.bf16.mxu0 0
    %1872 = vmatpush1.bf16.msra.mxu0 0
    %1873 = vmatprep.subr.bf16.mxu0 0
    %1874 = vmatpush1.bf16.msra.mxu0 0
    %1875 = vmatprep.mubr.bf16.mxu0 0
    %1876 = vmatmul.mubr.bf16.gmra.mrb[0].mxu0 %v1627
    %v1877 = vpop.f32.mrb[0].mxu0
    %v1878 = vadd.f32 %v1666, %v1877
    %v1879 = vpop.f32.mrb[0].mxu0
    %v1880 = vadd.f32 %v1670, %v1879
    %v1881 = vpop.f32.mrb[0].mxu0
    %v1882 = vadd.f32 %v1666, %v1881
    %v1883 = vpop.f32.mrb[0].mxu0
    %v1884 = vadd.f32 %v1670, %v1883
    %1885 = vmatprep.mubr.bf16.mxu0 0
    %1886 = vmatmul.mubr.bf16.gmra.mrb[0].mxu0 %v1628
    %v1887 = vpop.f32.mrb[0].mxu0
    %v1888 = vadd.f32 %v1666, %v1887
    %v1889 = vpop.f32.mrb[0].mxu0
    %v1890 = vadd.f32 %v1670, %v1889
    %v1891 = vpop.f32.mrb[0].mxu0
    %v1892 = vadd.f32 %v1666, %v1891
    %v1893 = vpop.f32.mrb[0].mxu0
    %v1894 = vadd.f32 %v1670, %v1893
    %1895 = vdwg.mxu0
    %1896 = vmatprep.subr.bf16.mxu0 %v1782
    %1897 = vmatpush1.bf16.msra.mxu0 %v1781
    %1898 = vmatprep.subr.bf16.mxu0 %v1786
    %1899 = vmatpush1.bf16.msra.mxu0 %v1785
    %1900 = vmatprep.subr.bf16.mxu0 %v1790
    %1901 = vmatpush1.bf16.msra.mxu0 %v1789
    %1902 = vmatprep.subr.bf16.mxu0 %v1794
    %1903 = vmatpush1.bf16.msra.mxu0 %v1793
    %1904 = vmatprep.subr.bf16.mxu0 %v1798
    %1905 = vmatpush1.bf16.msra.mxu0 %v1797
    %1906 = vmatprep.subr.bf16.mxu0 %v1802
    %1907 = vmatpush1.bf16.msra.mxu0 %v1801
    %1908 = vmatprep.subr.bf16.mxu0 %v1806
    %1909 = vmatpush1.bf16.msra.mxu0 %v1805
    %1910 = vmatprep.subr.bf16.mxu0 %v1810
    %1911 = vmatpush1.bf16.msra.mxu0 %v1809
    %1912 = vmatprep.subr.bf16.mxu0 0
    %1913 = vmatpush1.bf16.msra.mxu0 0
    %1914 = vmatprep.subr.bf16.mxu0 0
    %1915 = vmatpush1.bf16.msra.mxu0 0
    %1916 = vmatprep.subr.bf16.mxu0 0
    %1917 = vmatpush1.bf16.msra.mxu0 0
    %1918 = vmatprep.subr.bf16.mxu0 0
    %1919 = vmatpush1.bf16.msra.mxu0 0
    %1920 = vmatprep.subr.bf16.mxu0 0
    %1921 = vmatpush1.bf16.msra.mxu0 0
    %1922 = vmatprep.subr.bf16.mxu0 0
    %1923 = vmatpush1.bf16.msra.mxu0 0
    %1924 = vmatprep.subr.bf16.mxu0 0
    %1925 = vmatpush1.bf16.msra.mxu0 0
    %1926 = vmatprep.subr.bf16.mxu0 0
    %1927 = vmatpush1.bf16.msra.mxu0 0
    %1928 = vmatprep.mubr.bf16.mxu0 0
    %1929 = vmatmul.mubr.bf16.gmra.mrb[0].mxu0 %v1627
    %v1930 = vpop.f32.mrb[0].mxu0
    %v1931 = vadd.f32 %v1674, %v1930
    %v1932 = vpop.f32.mrb[0].mxu0
    %v1933 = vadd.f32 %v1678, %v1932
    %v1934 = vpop.f32.mrb[0].mxu0
    %v1935 = vadd.f32 %v1674, %v1934
    %v1936 = vpop.f32.mrb[0].mxu0
    %v1937 = vadd.f32 %v1678, %v1936
    %1938 = vmatprep.mubr.bf16.mxu0 0
    %1939 = vmatmul.mubr.bf16.gmra.mrb[0].mxu0 %v1628
    %v1940 = vpop.f32.mrb[0].mxu0
    %v1941 = vadd.f32 %v1674, %v1940
    %v1942 = vpop.f32.mrb[0].mxu0
    %v1943 = vadd.f32 %v1678, %v1942
    %v1944 = vpop.f32.mrb[0].mxu0
    %v1945 = vadd.f32 %v1674, %v1944
    %v1946 = vpop.f32.mrb[0].mxu0
    %v1947 = vadd.f32 %v1678, %v1946
    %1948 = vdwg.mxu0
    %v1949 = vmul.f32 %v1878, 0.5
    %v1950 = vmul.f32 %v1880, 0.5
    %v1951 = vmul.f32 %v1931, 0.5
    %v1952 = vmul.f32 %v1933, 0.5
    %v1953 = vmul.f32 %v1882, 0.5
    %v1954 = vmul.f32 %v1884, 0.5
    %v1955 = vmul.f32 %v1935, 0.5
    %v1956 = vmul.f32 %v1937, 0.5
    %v1957 = vmul.f32 %v1888, 0.5
    %v1958 = vmul.f32 %v1890, 0.5
    %v1959 = vmul.f32 %v1941, 0.5
    %v1960 = vmul.f32 %v1943, 0.5
    %v1961 = vmul.f32 %v1892, 0.5
    %v1962 = vmul.f32 %v1894, 0.5
    %v1963 = vmul.f32 %v1945, 0.5
    %v1964 = vmul.f32 %v1947, 0.5
    %v1965 = vmul.f32 %v1878, 0.044715
    %v1966 = vmul.f32 %v1880, 0.044715
    %v1967 = vmul.f32 %v1931, 0.044715
    %v1968 = vmul.f32 %v1933, 0.044715
    %v1969 = vmul.f32 %v1882, 0.044715
    %v1970 = vmul.f32 %v1884, 0.044715
    %v1971 = vmul.f32 %v1935, 0.044715
    %v1972 = vmul.f32 %v1937, 0.044715
    %v1973 = vmul.f32 %v1888, 0.044715
    %v1974 = vmul.f32 %v1890, 0.044715
    %v1975 = vmul.f32 %v1941, 0.044715
    %v1976 = vmul.f32 %v1943, 0.044715
    %v1977 = vmul.f32 %v1892, 0.044715
    %v1978 = vmul.f32 %v1894, 0.044715
    %v1979 = vmul.f32 %v1945, 0.044715
    %v1980 = vmul.f32 %v1947, 0.044715
    %v1981 = vmul.f32 %v1965, %v1878
    %v1982 = vmul.f32 %v1966, %v1880
    %v1983 = vmul.f32 %v1967, %v1931
    %v1984 = vmul.f32 %v1968, %v1933
    %v1985 = vmul.f32 %v1969, %v1882
    %v1986 = vmul.f32 %v1970, %v1884
    %v1987 = vmul.f32 %v1971, %v1935
    %v1988 = vmul.f32 %v1972, %v1937
    %v1989 = vmul.f32 %v1973, %v1888
    %v1990 = vmul.f32 %v1974, %v1890
    %v1991 = vmul.f32 %v1975, %v1941
    %v1992 = vmul.f32 %v1976, %v1943
    %v1993 = vmul.f32 %v1977, %v1892
    %v1994 = vmul.f32 %v1978, %v1894
    %v1995 = vmul.f32 %v1979, %v1945
    %v1996 = vmul.f32 %v1980, %v1947
    %v1997 = vmul.f32 %v1981, %v1878
    %v1998 = vmul.f32 %v1982, %v1880
    %v1999 = vmul.f32 %v1983, %v1931
    %v2000 = vmul.f32 %v1984, %v1933
    %v2001 = vmul.f32 %v1985, %v1882
    %v2002 = vmul.f32 %v1986, %v1884
    %v2003 = vmul.f32 %v1987, %v1935
    %v2004 = vmul.f32 %v1988, %v1937
    %v2005 = vmul.f32 %v1989, %v1888
    %v2006 = vmul.f32 %v1990, %v1890
    %v2007 = vmul.f32 %v1991, %v1941
    %v2008 = vmul.f32 %v1992, %v1943
    %v2009 = vmul.f32 %v1993, %v1892
    %v2010 = vmul.f32 %v1994, %v1894
    %v2011 = vmul.f32 %v1995, %v1945
    %v2012 = vmul.f32 %v1996, %v1947
    %v2013 = vadd.f32 %v1878, %v1997
    %v2014 = vadd.f32 %v1880, %v1998
    %v2015 = vadd.f32 %v1931, %v1999
    %v2016 = vadd.f32 %v1933, %v2000
    %v2017 = vadd.f32 %v1882, %v2001
    %v2018 = vadd.f32 %v1884, %v2002
    %v2019 = vadd.f32 %v1935, %v2003
    %v2020 = vadd.f32 %v1937, %v2004
    %v2021 = vadd.f32 %v1888, %v2005
    %v2022 = vadd.f32 %v1890, %v2006
    %v2023 = vadd.f32 %v1941, %v2007
    %v2024 = vadd.f32 %v1943, %v2008
    %v2025 = vadd.f32 %v1892, %v2009
    %v2026 = vadd.f32 %v1894, %v2010
    %v2027 = vadd.f32 %v1945, %v2011
    %v2028 = vadd.f32 %v1947, %v2012
    %v2029 = vmul.f32 %v2013, 0.7978846
    %v2030 = vmul.f32 %v2014, 0.7978846
    %v2031 = vmul.f32 %v2015, 0.7978846
    %v2032 = vmul.f32 %v2016, 0.7978846
    %v2033 = vmul.f32 %v2017, 0.7978846
    %v2034 = vmul.f32 %v2018, 0.7978846
    %v2035 = vmul.f32 %v2019, 0.7978846
    %v2036 = vmul.f32 %v2020, 0.7978846
    %v2037 = vmul.f32 %v2021, 0.7978846
    %v2038 = vmul.f32 %v2022, 0.7978846
    %v2039 = vmul.f32 %v2023, 0.7978846
    %v2040 = vmul.f32 %v2024, 0.7978846
    %v2041 = vmul.f32 %v2025, 0.7978846
    %v2042 = vmul.f32 %v2026, 0.7978846
    %v2043 = vmul.f32 %v2027, 0.7978846
    %v2044 = vmul.f32 %v2028, 0.7978846
    %v2045 = vtanh.pop %v2029
    %v2046 = vtanh.pop %v2030
    %v2047 = vtanh.pop %v2031
    %v2048 = vtanh.pop %v2032
    %v2049 = vtanh.pop %v2033
    %v2050 = vtanh.pop %v2034
    %v2051 = vtanh.pop %v2035
    %v2052 = vtanh.pop %v2036
    %v2053 = vtanh.pop %v2037
    %v2054 = vtanh.pop %v2038
    %v2055 = vtanh.pop %v2039
    %v2056 = vtanh.pop %v2040
    %v2057 = vtanh.pop %v2041
    %v2058 = vtanh.pop %v2042
    %v2059 = vtanh.pop %v2043
    %v2060 = vtanh.pop %v2044
    %v2061 = vadd.f32 %v2045, 1.0
    %v2062 = vadd.f32 %v2046, 1.0
    %v2063 = vadd.f32 %v2047, 1.0
    %v2064 = vadd.f32 %v2048, 1.0
    %v2065 = vadd.f32 %v2049, 1.0
    %v2066 = vadd.f32 %v2050, 1.0
    %v2067 = vadd.f32 %v2051, 1.0
    %v2068 = vadd.f32 %v2052, 1.0
    %v2069 = vadd.f32 %v2053, 1.0
    %v2070 = vadd.f32 %v2054, 1.0
    %v2071 = vadd.f32 %v2055, 1.0
    %v2072 = vadd.f32 %v2056, 1.0
    %v2073 = vadd.f32 %v2057, 1.0
    %v2074 = vadd.f32 %v2058, 1.0
    %v2075 = vadd.f32 %v2059, 1.0
    %v2076 = vadd.f32 %v2060, 1.0
    %v2077 = vmul.f32 %v1949, %v2061
    %v2078 = vmul.f32 %v1950, %v2062
    %v2079 = vmul.f32 %v1951, %v2063
    %v2080 = vmul.f32 %v1952, %v2064
    %v2081 = vmul.f32 %v1953, %v2065
    %v2082 = vmul.f32 %v1954, %v2066
    %v2083 = vmul.f32 %v1955, %v2067
    %v2084 = vmul.f32 %v1956, %v2068
    %v2085 = vmul.f32 %v1957, %v2069
    %v2086 = vmul.f32 %v1958, %v2070
    %v2087 = vmul.f32 %v1959, %v2071
    %v2088 = vmul.f32 %v1960, %v2072
    %v2089 = vmul.f32 %v1961, %v2073
    %v2090 = vmul.f32 %v1962, %v2074
    %v2091 = vmul.f32 %v1963, %v2075
    %v2092 = vmul.f32 %v1964, %v2076
    %v2093 = vpack.c.bf16 %v2081, %v2077
    %v2094 = vpack.c.bf16 %v2082, %v2078
    %v2095 = vpack.c.bf16 %v2083, %v2079
    %v2096 = vpack.c.bf16 %v2084, %v2080
    %v2097 = vpack.c.bf16 %v2089, %v2085
    %v2098 = vpack.c.bf16 %v2090, %v2086
    %v2099 = vpack.c.bf16 %v2091, %v2087
    %v2100 = vpack.c.bf16 %v2092, %v2088
    %v2101 = vld [vmem:[#allocation17] sm:$0xf]
    %v2102 = vld [vmem:[#allocation17 + $0x4] sm:$0xf]
    %v2103 = vld [vmem:[#allocation17 + $0x8] sm:$0xf]
    %v2104 = vld [vmem:[#allocation17 + $0xc] sm:$0xf]
    %v2105 = vld [vmem:[#allocation17 + $0x10] sm:$0xf]
    %v2106 = vld [vmem:[#allocation17 + $0x14] sm:$0xf]
    %v2107 = vld [vmem:[#allocation17 + $0x18] sm:$0xf]
    %v2108 = vld [vmem:[#allocation17 + $0x1c] sm:$0xf]
    %v2109 = vld [vmem:[#allocation17 + $0x20] sm:$0xf]
    %v2110 = vld [vmem:[#allocation17 + $0x24] sm:$0xf]
    %v2111 = vld [vmem:[#allocation17 + $0x28] sm:$0xf]
    %v2112 = vld [vmem:[#allocation17 + $0x2c] sm:$0xf]
    %v2113 = vld [vmem:[#allocation17 + $0x30] sm:$0xf]
    %v2114 = vld [vmem:[#allocation17 + $0x34] sm:$0xf]
    %v2115 = vld [vmem:[#allocation17 + $0x38] sm:$0xf]
    %v2116 = vld [vmem:[#allocation17 + $0x3c] sm:$0xf]
    %v2117 = vld [vmem:[#allocation17 + $0x40] sm:$0xf]
    %v2118 = vld [vmem:[#allocation17 + $0x44] sm:$0xf]
    %v2119 = vld [vmem:[#allocation17 + $0x48] sm:$0xf]
    %v2120 = vld [vmem:[#allocation17 + $0x4c] sm:$0xf]
    %v2121 = vld [vmem:[#allocation17 + $0x50] sm:$0xf]
    %v2122 = vld [vmem:[#allocation17 + $0x54] sm:$0xf]
    %v2123 = vld [vmem:[#allocation17 + $0x58] sm:$0xf]
    %v2124 = vld [vmem:[#allocation17 + $0x5c] sm:$0xf]
    %v2125 = vld [vmem:[#allocation17 + $0x60] sm:$0xf]
    %v2126 = vld [vmem:[#allocation17 + $0x64] sm:$0xf]
    %v2127 = vld [vmem:[#allocation17 + $0x68] sm:$0xf]
    %v2128 = vld [vmem:[#allocation17 + $0x6c] sm:$0xf]
    %v2129 = vld [vmem:[#allocation17 + $0x70] sm:$0xf]
    %v2130 = vld [vmem:[#allocation17 + $0x74] sm:$0xf]
    %v2131 = vld [vmem:[#allocation17 + $0x78] sm:$0xf]
    %v2132 = vld [vmem:[#allocation17 + $0x7c] sm:$0xf]
    %v2133 = vld [vmem:[#allocation17 + $0x80] sm:$0xf]
    %v2134 = vld [vmem:[#allocation17 + $0x84] sm:$0xf]
    %v2135 = vld [vmem:[#allocation17 + $0x88] sm:$0xf]
    %v2136 = vld [vmem:[#allocation17 + $0x8c] sm:$0xf]
    %v2137 = vld [vmem:[#allocation17 + $0x90] sm:$0xf]
    %v2138 = vld [vmem:[#allocation17 + $0x94] sm:$0xf]
    %v2139 = vld [vmem:[#allocation17 + $0x98] sm:$0xf]
    %v2140 = vld [vmem:[#allocation17 + $0x9c] sm:$0xf]
    %v2141 = vld [vmem:[#allocation17 + $0xa0] sm:$0xf]
    %v2142 = vld [vmem:[#allocation17 + $0xa4] sm:$0xf]
    %v2143 = vld [vmem:[#allocation17 + $0xa8] sm:$0xf]
    %v2144 = vld [vmem:[#allocation17 + $0xac] sm:$0xf]
    %v2145 = vld [vmem:[#allocation17 + $0xb0] sm:$0xf]
    %v2146 = vld [vmem:[#allocation17 + $0xb4] sm:$0xf]
    %v2147 = vld [vmem:[#allocation17 + $0xb8] sm:$0xf]
    %v2148 = vld [vmem:[#allocation17 + $0xbc] sm:$0xf]
    %v2149 = vld [vmem:[#allocation17 + $0xc0] sm:$0xf]
    %v2150 = vld [vmem:[#allocation17 + $0xc4] sm:$0xf]
    %v2151 = vld [vmem:[#allocation17 + $0xc8] sm:$0xf]
    %v2152 = vld [vmem:[#allocation17 + $0xcc] sm:$0xf]
    %v2153 = vld [vmem:[#allocation17 + $0xd0] sm:$0xf]
    %v2154 = vld [vmem:[#allocation17 + $0xd4] sm:$0xf]
    %v2155 = vld [vmem:[#allocation17 + $0xd8] sm:$0xf]
    %v2156 = vld [vmem:[#allocation17 + $0xdc] sm:$0xf]
    %v2157 = vld [vmem:[#allocation17 + $0xe0] sm:$0xf]
    %v2158 = vld [vmem:[#allocation17 + $0xe4] sm:$0xf]
    %v2159 = vld [vmem:[#allocation17 + $0xe8] sm:$0xf]
    %v2160 = vld [vmem:[#allocation17 + $0xec] sm:$0xf]
    %v2161 = vld [vmem:[#allocation17 + $0xf0] sm:$0xf]
    %v2162 = vld [vmem:[#allocation17 + $0xf4] sm:$0xf]
    %v2163 = vld [vmem:[#allocation17 + $0xf8] sm:$0xf]
    %v2164 = vld [vmem:[#allocation17 + $0xfc] sm:$0xf]
    %v2229 = vunpack.c.l.b16 %v2101
    %v2230 = vunpack.c.l.b16 %v2102
    %v2231 = vunpack.c.l.b16 %v2103
    %v2232 = vunpack.c.l.b16 %v2104
    %v2233 = vunpack.c.l.b16 %v2105
    %v2234 = vunpack.c.l.b16 %v2106
    %v2235 = vunpack.c.l.b16 %v2107
    %v2236 = vunpack.c.l.b16 %v2108
    %v2237 = vunpack.c.l.b16 %v2109
    %v2238 = vunpack.c.l.b16 %v2110
    %v2239 = vunpack.c.l.b16 %v2111
    %v2240 = vunpack.c.l.b16 %v2112
    %v2241 = vunpack.c.l.b16 %v2113
    %v2242 = vunpack.c.l.b16 %v2114
    %v2243 = vunpack.c.l.b16 %v2115
    %v2244 = vunpack.c.l.b16 %v2116
    %v2245 = vunpack.c.l.b16 %v2117
    %v2246 = vunpack.c.l.b16 %v2118
    %v2247 = vunpack.c.l.b16 %v2119
    %v2248 = vunpack.c.l.b16 %v2120
    %v2249 = vunpack.c.l.b16 %v2121
    %v2250 = vunpack.c.l.b16 %v2122
    %v2251 = vunpack.c.l.b16 %v2123
    %v2252 = vunpack.c.l.b16 %v2124
    %v2253 = vunpack.c.l.b16 %v2125
    %v2254 = vunpack.c.l.b16 %v2126
    %v2255 = vunpack.c.l.b16 %v2127
    %v2256 = vunpack.c.l.b16 %v2128
    %v2257 = vunpack.c.l.b16 %v2129
    %v2258 = vunpack.c.l.b16 %v2130
    %v2259 = vunpack.c.l.b16 %v2131
    %v2260 = vunpack.c.l.b16 %v2132
    %v2261 = vunpack.c.l.b16 %v2133
    %v2262 = vunpack.c.l.b16 %v2134
    %v2263 = vunpack.c.l.b16 %v2135
    %v2264 = vunpack.c.l.b16 %v2136
    %v2265 = vunpack.c.l.b16 %v2137
    %v2266 = vunpack.c.l.b16 %v2138
    %v2267 = vunpack.c.l.b16 %v2139
    %v2268 = vunpack.c.l.b16 %v2140
    %v2269 = vunpack.c.l.b16 %v2141
    %v2270 = vunpack.c.l.b16 %v2142
    %v2271 = vunpack.c.l.b16 %v2143
    %v2272 = vunpack.c.l.b16 %v2144
    %v2273 = vunpack.c.l.b16 %v2145
    %v2274 = vunpack.c.l.b16 %v2146
    %v2275 = vunpack.c.l.b16 %v2147
    %v2276 = vunpack.c.l.b16 %v2148
    %v2277 = vunpack.c.l.b16 %v2149
    %v2278 = vunpack.c.l.b16 %v2150
    %v2279 = vunpack.c.l.b16 %v2151
    %v2280 = vunpack.c.l.b16 %v2152
    %v2281 = vunpack.c.l.b16 %v2153
    %v2282 = vunpack.c.l.b16 %v2154
    %v2283 = vunpack.c.l.b16 %v2155
    %v2284 = vunpack.c.l.b16 %v2156
    %v2285 = vunpack.c.l.b16 %v2157
    %v2286 = vunpack.c.l.b16 %v2158
    %v2287 = vunpack.c.l.b16 %v2159
    %v2288 = vunpack.c.l.b16 %v2160
    %v2289 = vunpack.c.l.b16 %v2161
    %v2290 = vunpack.c.l.b16 %v2162
    %v2291 = vunpack.c.l.b16 %v2163
    %v2292 = vunpack.c.l.b16 %v2164
    %v2293 = vpack.c.b16 %v2230, %v2229
    %v2294 = vpack.c.b16 %v2232, %v2231
    %v2295 = vpack.c.b16 %v2234, %v2233
    %v2296 = vpack.c.b16 %v2236, %v2235
    %v2297 = vpack.c.b16 %v2238, %v2237
    %v2298 = vpack.c.b16 %v2240, %v2239
    %v2299 = vpack.c.b16 %v2242, %v2241
    %v2300 = vpack.c.b16 %v2244, %v2243
    %v2301 = vpack.c.b16 %v2246, %v2245
    %v2302 = vpack.c.b16 %v2248, %v2247
    %v2303 = vpack.c.b16 %v2250, %v2249
    %v2304 = vpack.c.b16 %v2252, %v2251
    %v2305 = vpack.c.b16 %v2254, %v2253
    %v2306 = vpack.c.b16 %v2256, %v2255
    %v2307 = vpack.c.b16 %v2258, %v2257
    %v2308 = vpack.c.b16 %v2260, %v2259
    %v2309 = vpack.c.b16 %v2262, %v2261
    %v2310 = vpack.c.b16 %v2264, %v2263
    %v2311 = vpack.c.b16 %v2266, %v2265
    %v2312 = vpack.c.b16 %v2268, %v2267
    %v2313 = vpack.c.b16 %v2270, %v2269
    %v2314 = vpack.c.b16 %v2272, %v2271
    %v2315 = vpack.c.b16 %v2274, %v2273
    %v2316 = vpack.c.b16 %v2276, %v2275
    %v2317 = vpack.c.b16 %v2278, %v2277
    %v2318 = vpack.c.b16 %v2280, %v2279
    %v2319 = vpack.c.b16 %v2282, %v2281
    %v2320 = vpack.c.b16 %v2284, %v2283
    %v2321 = vpack.c.b16 %v2286, %v2285
    %v2322 = vpack.c.b16 %v2288, %v2287
    %v2323 = vpack.c.b16 %v2290, %v2289
    %v2324 = vpack.c.b16 %v2292, %v2291
    %2357 = vmatprep.subr.bf16.mxu0 0
    %2358 = vmatpush1.bf16.msra.mxu0 %v2293
    %2359 = vmatprep.subr.bf16.mxu0 0
    %2360 = vmatpush1.bf16.msra.mxu0 %v2294
    %2361 = vmatprep.subr.bf16.mxu0 0
    %2362 = vmatpush1.bf16.msra.mxu0 %v2295
    %2363 = vmatprep.subr.bf16.mxu0 0
    %2364 = vmatpush1.bf16.msra.mxu0 %v2296
    %2365 = vmatprep.subr.bf16.mxu0 0
    %2366 = vmatpush1.bf16.msra.mxu0 %v2297
    %2367 = vmatprep.subr.bf16.mxu0 0
    %2368 = vmatpush1.bf16.msra.mxu0 %v2298
    %2369 = vmatprep.subr.bf16.mxu0 0
    %2370 = vmatpush1.bf16.msra.mxu0 %v2299
    %2371 = vmatprep.subr.bf16.mxu0 0
    %2372 = vmatpush1.bf16.msra.mxu0 %v2300
    %2373 = vmatprep.subr.bf16.mxu0 0
    %2374 = vmatpush1.bf16.msra.mxu0 %v2301
    %2375 = vmatprep.subr.bf16.mxu0 0
    %2376 = vmatpush1.bf16.msra.mxu0 %v2302
    %2377 = vmatprep.subr.bf16.mxu0 0
    %2378 = vmatpush1.bf16.msra.mxu0 %v2303
    %2379 = vmatprep.subr.bf16.mxu0 0
    %2380 = vmatpush1.bf16.msra.mxu0 %v2304
    %2381 = vmatprep.subr.bf16.mxu0 0
    %2382 = vmatpush1.bf16.msra.mxu0 %v2305
    %2383 = vmatprep.subr.bf16.mxu0 0
    %2384 = vmatpush1.bf16.msra.mxu0 %v2306
    %2385 = vmatprep.subr.bf16.mxu0 0
    %2386 = vmatpush1.bf16.msra.mxu0 %v2307
    %2387 = vmatprep.subr.bf16.mxu0 0
    %2388 = vmatpush1.bf16.msra.mxu0 %v2308
    %2389 = vmatprep.mubr.bf16.mxu0 %v2094
    %2390 = vmatmul.mubr.bf16.gmra.mrb[0].mxu0 %v2093
    %v2391 = vpop.f32.mrb[0].mxu0
    %v2392 = vadd.f32 0.0, %v2391
    %v2393 = vpop.f32.mrb[0].mxu0
    %v2394 = vpop.f32.mrb[0].mxu0
    %v2395 = vadd.f32 0.0, %v2394
    %v2396 = vpop.f32.mrb[0].mxu0
    %2397 = vmatprep.mubr.bf16.mxu0 %v2098
    %2398 = vmatmul.mubr.bf16.gmra.mrb[0].mxu0 %v2097
    %v2399 = vpop.f32.mrb[0].mxu0
    %v2400 = vadd.f32 0.0, %v2399
    %v2401 = vpop.f32.mrb[0].mxu0
    %v2402 = vpop.f32.mrb[0].mxu0
    %v2403 = vadd.f32 0.0, %v2402
    %v2404 = vpop.f32.mrb[0].mxu0
    %2405 = vdwg.mxu0
    %2406 = vmatprep.subr.bf16.mxu0 0
    %2407 = vmatpush1.bf16.msra.mxu0 %v2309
    %2408 = vmatprep.subr.bf16.mxu0 0
    %2409 = vmatpush1.bf16.msra.mxu0 %v2310
    %2410 = vmatprep.subr.bf16.mxu0 0
    %2411 = vmatpush1.bf16.msra.mxu0 %v2311
    %2412 = vmatprep.subr.bf16.mxu0 0
    %2413 = vmatpush1.bf16.msra.mxu0 %v2312
    %2414 = vmatprep.subr.bf16.mxu0 0
    %2415 = vmatpush1.bf16.msra.mxu0 %v2313
    %2416 = vmatprep.subr.bf16.mxu0 0
    %2417 = vmatpush1.bf16.msra.mxu0 %v2314
    %2418 = vmatprep.subr.bf16.mxu0 0
    %2419 = vmatpush1.bf16.msra.mxu0 %v2315
    %2420 = vmatprep.subr.bf16.mxu0 0
    %2421 = vmatpush1.bf16.msra.mxu0 %v2316
    %2422 = vmatprep.subr.bf16.mxu0 0
    %2423 = vmatpush1.bf16.msra.mxu0 %v2317
    %2424 = vmatprep.subr.bf16.mxu0 0
    %2425 = vmatpush1.bf16.msra.mxu0 %v2318
    %2426 = vmatprep.subr.bf16.mxu0 0
    %2427 = vmatpush1.bf16.msra.mxu0 %v2319
    %2428 = vmatprep.subr.bf16.mxu0 0
    %2429 = vmatpush1.bf16.msra.mxu0 %v2320
    %2430 = vmatprep.subr.bf16.mxu0 0
    %2431 = vmatpush1.bf16.msra.mxu0 %v2321
    %2432 = vmatprep.subr.bf16.mxu0 0
    %2433 = vmatpush1.bf16.msra.mxu0 %v2322
    %2434 = vmatprep.subr.bf16.mxu0 0
    %2435 = vmatpush1.bf16.msra.mxu0 %v2323
    %2436 = vmatprep.subr.bf16.mxu0 0
    %2437 = vmatpush1.bf16.msra.mxu0 %v2324
    %2438 = vmatprep.mubr.bf16.mxu0 %v2096
    %2439 = vmatmul.mubr.bf16.gmra.mrb[0].mxu0 %v2095
    %v2440 = vpop.f32.mrb[0].mxu0
    %v2441 = vadd.f32 %v2392, %v2440
    %v2442 = vpop.f32.mrb[0].mxu0
    %v2443 = vpop.f32.mrb[0].mxu0
    %v2444 = vadd.f32 %v2395, %v2443
    %v2445 = vpop.f32.mrb[0].mxu0
    %2446 = vmatprep.mubr.bf16.mxu0 %v2100
    %2447 = vmatmul.mubr.bf16.gmra.mrb[0].mxu0 %v2099
    %v2448 = vpop.f32.mrb[0].mxu0
    %v2449 = vadd.f32 %v2400, %v2448
    %v2450 = vpop.f32.mrb[0].mxu0
    %v2451 = vpop.f32.mrb[0].mxu0
    %v2452 = vadd.f32 %v2403, %v2451
    %v2453 = vpop.f32.mrb[0].mxu0
    %2454 = vdwg.mxu0
    %v2455 = vadd.f32 %v1557, %v2441
    %v2456 = vadd.f32 %v1558, %v2444
    %v2457 = vadd.f32 %v1559, %v2449
    %v2458 = vadd.f32 %v1560, %v2452
    %v2459 = vld [vmem:[#allocation19] sm:$0x1]
    %v2461 = vlaneseq
    %v2462 = vshrl.u32 %v2461, 7
    %v2463 = vsub.s32 0, %v2462
    %v2464 = vrot.slane %v2459, %v2463
    %v2466 = vadd.f32 %v2455, %v2464
    %v2467 = vadd.f32 %v2456, %v2464
    %v2468 = vadd.f32 %v2457, %v2464
    %v2469 = vadd.f32 %v2458, %v2464
    %s2470 = scalar_lea.vmem %s4, 1
    %v2471 = vld [vmem:[%s2470] sm:$0x1]
    %s2472 = scalar_lea.vmem %s5, 1
    %v2473 = vld [vmem:[%s2472] sm:$0x1]
    %2474 = vadd.xlane.f32.xlu0 %v2466
    %v2475 = vpop.xlane.xlu0 %2474
    %2476 = vadd.xlane.f32.xlu0 %v2467
    %v2477 = vpop.xlane.xlu0 %2476
    %2478 = vadd.xlane.f32.xlu0 %v2468
    %v2479 = vpop.xlane.xlu0 %2478
    %2480 = vadd.xlane.f32.xlu0 %v2469
    %v2481 = vpop.xlane.xlu0 %2480
    %v2482 = vmul.f32 %v2475, %v296
    %v2483 = vmul.f32 %v2477, %v296
    %v2484 = vmul.f32 %v2479, %v296
    %v2485 = vmul.f32 %v2481, %v296
    %v2486 = vsub.f32 %v2466, %v2482
    %v2487 = vsub.f32 %v2467, %v2483
    %v2488 = vsub.f32 %v2468, %v2484
    %v2489 = vsub.f32 %v2469, %v2485
    %v2490 = vmul.f32 %v2486, %v2486
    %v2491 = vmul.f32 %v2487, %v2487
    %v2492 = vmul.f32 %v2488, %v2488
    %v2493 = vmul.f32 %v2489, %v2489
    %2494 = vadd.xlane.f32.xlu0 %v2490
    %v2495 = vpop.xlane.xlu0 %2494
    %2496 = vadd.xlane.f32.xlu0 %v2491
    %v2497 = vpop.xlane.xlu0 %2496
    %2498 = vadd.xlane.f32.xlu0 %v2492
    %v2499 = vpop.xlane.xlu0 %2498
    %2500 = vadd.xlane.f32.xlu0 %v2493
    %v2501 = vpop.xlane.xlu0 %2500
    %v2502 = vmul.f32 %v2495, %v296
    %v2503 = vmul.f32 %v2497, %v296
    %v2504 = vmul.f32 %v2499, %v296
    %v2505 = vmul.f32 %v2501, %v296
    %v2506 = vadd.f32 %v2502, 1e-05
    %v2507 = vadd.f32 %v2503, 1e-05
    %v2508 = vadd.f32 %v2504, 1e-05
    %v2509 = vadd.f32 %v2505, 1e-05
    %v2510 = vrsqrt.pop %v2506
    %v2511 = vrsqrt.pop %v2507
    %v2512 = vrsqrt.pop %v2508
    %v2513 = vrsqrt.pop %v2509
    %v2514 = vmul.f32 %v2486, %v2510
    %v2515 = vmul.f32 %v2487, %v2511
    %v2516 = vmul.f32 %v2488, %v2512
    %v2517 = vmul.f32 %v2489, %v2513
    %v2519 = vlaneseq
    %v2520 = vshrl.u32 %v2519, 7
    %v2521 = vsub.s32 0, %v2520
    %v2522 = vrot.slane %v2471, %v2521
    %v2524 = vmul.f32 %v2514, %v2522
    %v2525 = vmul.f32 %v2515, %v2522
    %v2526 = vmul.f32 %v2516, %v2522
    %v2527 = vmul.f32 %v2517, %v2522
    %v2529 = vlaneseq
    %v2530 = vshrl.u32 %v2529, 7
    %v2531 = vsub.s32 0, %v2530
    %v2532 = vrot.slane %v2473, %v2531
    %v2534 = vadd.f32 %v2524, %v2532
    %v2535 = vadd.f32 %v2525, %v2532
    %v2536 = vadd.f32 %v2526, %v2532
    %v2537 = vadd.f32 %v2527, %v2532
    %v2538 = vpack.c.bf16 %v2535, %v2534
    %v2539 = vpack.c.bf16 %v2537, %v2536
    %s2540 = scalar_lea.vmem [#allocation5], 192
    %v2541 = vld [vmem:[%s2540] sm:$0xff]
    %v2542 = vld [vmem:[%s2540 + $0x8] sm:$0xf]
    %v2543 = vld [vmem:[%s2540 + $0xc] sm:$0xff]
    %v2544 = vld [vmem:[%s2540 + $0x14] sm:$0xf]
    %v2545 = vld [vmem:[%s2540 + $0x18] sm:$0xff]
    %v2546 = vld [vmem:[%s2540 + $0x20] sm:$0xf]
    %v2547 = vld [vmem:[%s2540 + $0x24] sm:$0xff]
    %v2548 = vld [vmem:[%s2540 + $0x2c] sm:$0xf]
    %v2549 = vld [vmem:[%s2540 + $0x30] sm:$0xff]
    %v2550 = vld [vmem:[%s2540 + $0x38] sm:$0xf]
    %v2551 = vld [vmem:[%s2540 + $0x3c] sm:$0xff]
    %v2552 = vld [vmem:[%s2540 + $0x44] sm:$0xf]
    %v2553 = vld [vmem:[%s2540 + $0x48] sm:$0xff]
    %v2554 = vld [vmem:[%s2540 + $0x50] sm:$0xf]
    %v2555 = vld [vmem:[%s2540 + $0x54] sm:$0xff]
    %v2556 = vld [vmem:[%s2540 + $0x5c] sm:$0xf]
    %v2557 = vld [vmem:[%s2540 + $0x60] sm:$0xff]
    %v2558 = vld [vmem:[%s2540 + $0x68] sm:$0xf]
    %v2559 = vld [vmem:[%s2540 + $0x6c] sm:$0xff]
    %v2560 = vld [vmem:[%s2540 + $0x74] sm:$0xf]
    %v2561 = vld [vmem:[%s2540 + $0x78] sm:$0xff]
    %v2562 = vld [vmem:[%s2540 + $0x80] sm:$0xf]
    %v2563 = vld [vmem:[%s2540 + $0x84] sm:$0xff]
    %v2564 = vld [vmem:[%s2540 + $0x8c] sm:$0xf]
    %v2565 = vld [vmem:[%s2540 + $0x90] sm:$0xff]
    %v2566 = vld [vmem:[%s2540 + $0x98] sm:$0xf]
    %v2567 = vld [vmem:[%s2540 + $0x9c] sm:$0xff]
    %v2568 = vld [vmem:[%s2540 + $0xa4] sm:$0xf]
    %v2569 = vld [vmem:[%s2540 + $0xa8] sm:$0xff]
    %v2570 = vld [vmem:[%s2540 + $0xb0] sm:$0xf]
    %v2571 = vld [vmem:[%s2540 + $0xb4] sm:$0xff]
    %v2572 = vld [vmem:[%s2540 + $0xbc] sm:$0xf]
    %s2573 = scalar_lea.vmem [#allocation7], 3
    %v2574 = vld [vmem:[%s2573] sm:$0x7]
    %v2576 = vlaneseq
    %v2577 = vshrl.u32 %v2576, 7
    %v2578 = vsub.s32 0, %v2577
    %v2579 = vrot.slane %v2574, %v2578
    %v2580 = vlaneseq
    %v2581 = vshrl.u32 %v2580, 7
    %v2582 = vsub.s32 1, %v2581
    %v2583 = vrot.slane %v2574, %v2582
    %v2584 = vlaneseq
    %v2585 = vshrl.u32 %v2584, 7
    %v2586 = vsub.s32 2, %v2585
    %v2587 = vrot.slane %v2574, %v2586
    %v2623 = vunpack.c.l.b16 %v2541
    %v2624 = vunpack.c.h.b16 %v2541
    %v2625 = vunpack.c.l.b16 %v2542
    %v2626 = vunpack.c.l.b16 %v2543
    %v2627 = vunpack.c.h.b16 %v2543
    %v2628 = vunpack.c.l.b16 %v2544
    %v2629 = vunpack.c.l.b16 %v2545
    %v2630 = vunpack.c.h.b16 %v2545
    %v2631 = vunpack.c.l.b16 %v2546
    %v2632 = vunpack.c.l.b16 %v2547
    %v2633 = vunpack.c.h.b16 %v2547
    %v2634 = vunpack.c.l.b16 %v2548
    %v2635 = vunpack.c.l.b16 %v2549
    %v2636 = vunpack.c.h.b16 %v2549
    %v2637 = vunpack.c.l.b16 %v2550
    %v2638 = vunpack.c.l.b16 %v2551
    %v2639 = vunpack.c.h.b16 %v2551
    %v2640 = vunpack.c.l.b16 %v2552
    %v2641 = vunpack.c.l.b16 %v2553
    %v2642 = vunpack.c.h.b16 %v2553
    %v2643 = vunpack.c.l.b16 %v2554
    %v2644 = vunpack.c.l.b16 %v2555
    %v2645 = vunpack.c.h.b16 %v2555
    %v2646 = vunpack.c.l.b16 %v2556
    %v2647 = vunpack.c.l.b16 %v2557
    %v2648 = vunpack.c.h.b16 %v2557
    %v2649 = vunpack.c.l.b16 %v2558
    %v2650 = vunpack.c.l.b16 %v2559
    %v2651 = vunpack.c.h.b16 %v2559
    %v2652 = vunpack.c.l.b16 %v2560
    %v2653 = vunpack.c.l.b16 %v2561
    %v2654 = vunpack.c.h.b16 %v2561
    %v2655 = vunpack.c.l.b16 %v2562
    %v2656 = vunpack.c.l.b16 %v2563
    %v2657 = vunpack.c.h.b16 %v2563
    %v2658 = vunpack.c.l.b16 %v2564
    %v2659 = vunpack.c.l.b16 %v2565
    %v2660 = vunpack.c.h.b16 %v2565
    %v2661 = vunpack.c.l.b16 %v2566
    %v2662 = vunpack.c.l.b16 %v2567
    %v2663 = vunpack.c.h.b16 %v2567
    %v2664 = vunpack.c.l.b16 %v2568
    %v2665 = vunpack.c.l.b16 %v2569
    %v2666 = vunpack.c.h.b16 %v2569
    %v2667 = vunpack.c.l.b16 %v2570
    %v2668 = vunpack.c.l.b16 %v2571
    %v2669 = vunpack.c.h.b16 %v2571
    %v2670 = vunpack.c.l.b16 %v2572
    %v2671 = vpack.c.b16 %v2626, %v2623
    %v2672 = vpack.c.b16 %v2627, %v2624
    %v2673 = vpack.c.b16 %v2628, %v2625
    %v2674 = vpack.c.b16 %v2632, %v2629
    %v2675 = vpack.c.b16 %v2633, %v2630
    %v2676 = vpack.c.b16 %v2634, %v2631
    %v2677 = vpack.c.b16 %v2638, %v2635
    %v2678 = vpack.c.b16 %v2639, %v2636
    %v2679 = vpack.c.b16 %v2640, %v2637
    %v2680 = vpack.c.b16 %v2644, %v2641
    %v2681 = vpack.c.b16 %v2645, %v2642
    %v2682 = vpack.c.b16 %v2646, %v2643
    %v2683 = vpack.c.b16 %v2650, %v2647
    %v2684 = vpack.c.b16 %v2651, %v2648
    %v2685 = vpack.c.b16 %v2652, %v2649
    %v2686 = vpack.c.b16 %v2656, %v2653
    %v2687 = vpack.c.b16 %v2657, %v2654
    %v2688 = vpack.c.b16 %v2658, %v2655
    %v2689 = vpack.c.b16 %v2662, %v2659
    %v2690 = vpack.c.b16 %v2663, %v2660
    %v2691 = vpack.c.b16 %v2664, %v2661
    %v2692 = vpack.c.b16 %v2668, %v2665
    %v2693 = vpack.c.b16 %v2669, %v2666
    %v2694 = vpack.c.b16 %v2670, %v2667
    %2719 = vmatprep.subr.bf16.mxu0 %v2672
    %2720 = vmatpush1.bf16.msra.mxu0 %v2671
    %2721 = vmatprep.subr.bf16.mxu0 %v2675
    %2722 = vmatpush1.bf16.msra.mxu0 %v2674
    %2723 = vmatprep.subr.bf16.mxu0 %v2678
    %2724 = vmatpush1.bf16.msra.mxu0 %v2677
    %2725 = vmatprep.subr.bf16.mxu0 %v2681
    %2726 = vmatpush1.bf16.msra.mxu0 %v2680
    %2727 = vmatprep.subr.bf16.mxu0 %v2684
    %2728 = vmatpush1.bf16.msra.mxu0 %v2683
    %2729 = vmatprep.subr.bf16.mxu0 %v2687
    %2730 = vmatpush1.bf16.msra.mxu0 %v2686
    %2731 = vmatprep.subr.bf16.mxu0 %v2690
    %2732 = vmatpush1.bf16.msra.mxu0 %v2689
    %2733 = vmatprep.subr.bf16.mxu0 %v2693
    %2734 = vmatpush1.bf16.msra.mxu0 %v2692
    %2735 = vmatprep.subr.bf16.mxu0 0
    %2736 = vmatpush1.bf16.msra.mxu0 0
    %2737 = vmatprep.subr.bf16.mxu0 0
    %2738 = vmatpush1.bf16.msra.mxu0 0
    %2739 = vmatprep.subr.bf16.mxu0 0
    %2740 = vmatpush1.bf16.msra.mxu0 0
    %2741 = vmatprep.subr.bf16.mxu0 0
    %2742 = vmatpush1.bf16.msra.mxu0 0
    %2743 = vmatprep.subr.bf16.mxu0 0
    %2744 = vmatpush1.bf16.msra.mxu0 0
    %2745 = vmatprep.subr.bf16.mxu0 0
    %2746 = vmatpush1.bf16.msra.mxu0 0
    %2747 = vmatprep.subr.bf16.mxu0 0
    %2748 = vmatpush1.bf16.msra.mxu0 0
    %2749 = vmatprep.subr.bf16.mxu0 0
    %2750 = vmatpush1.bf16.msra.mxu0 0
    %2751 = vmatprep.mubr.bf16.mxu0 0
    %2752 = vmatmul.mubr.bf16.gmra.mrb[0].mxu0 %v2538
    %v2753 = vpop.f32.mrb[0].mxu0
    %v2754 = vadd.f32 %v2579, %v2753
    %v2755 = vpop.f32.mrb[0].mxu0
    %v2756 = vadd.f32 %v2583, %v2755
    %v2757 = vpop.f32.mrb[0].mxu0
    %v2758 = vadd.f32 %v2579, %v2757
    %v2759 = vpop.f32.mrb[0].mxu0
    %v2760 = vadd.f32 %v2583, %v2759
    %2761 = vmatprep.mubr.bf16.mxu0 0
    %2762 = vmatmul.mubr.bf16.gmra.mrb[0].mxu0 %v2539
    %v2763 = vpop.f32.mrb[0].mxu0
    %v2764 = vadd.f32 %v2579, %v2763
    %v2765 = vpop.f32.mrb[0].mxu0
    %v2766 = vadd.f32 %v2583, %v2765
    %v2767 = vpop.f32.mrb[0].mxu0
    %v2768 = vadd.f32 %v2579, %v2767
    %v2769 = vpop.f32.mrb[0].mxu0
    %v2770 = vadd.f32 %v2583, %v2769
    %2771 = vdwg.mxu0
    %2772 = vmatprep.subr.bf16.mxu0 0
    %2773 = vmatpush1.bf16.msra.mxu0 %v2673
    %2774 = vmatprep.subr.bf16.mxu0 0
    %2775 = vmatpush1.bf16.msra.mxu0 %v2676
    %2776 = vmatprep.subr.bf16.mxu0 0
    %2777 = vmatpush1.bf16.msra.mxu0 %v2679
    %2778 = vmatprep.subr.bf16.mxu0 0
    %2779 = vmatpush1.bf16.msra.mxu0 %v2682
    %2780 = vmatprep.subr.bf16.mxu0 0
    %2781 = vmatpush1.bf16.msra.mxu0 %v2685
    %2782 = vmatprep.subr.bf16.mxu0 0
    %2783 = vmatpush1.bf16.msra.mxu0 %v2688
    %2784 = vmatprep.subr.bf16.mxu0 0
    %2785 = vmatpush1.bf16.msra.mxu0 %v2691
    %2786 = vmatprep.subr.bf16.mxu0 0
    %2787 = vmatpush1.bf16.msra.mxu0 %v2694
    %2788 = vmatprep.subr.bf16.mxu0 0
    %2789 = vmatpush1.bf16.msra.mxu0 0
    %2790 = vmatprep.subr.bf16.mxu0 0
    %2791 = vmatpush1.bf16.msra.mxu0 0
    %2792 = vmatprep.subr.bf16.mxu0 0
    %2793 = vmatpush1.bf16.msra.mxu0 0
    %2794 = vmatprep.subr.bf16.mxu0 0
    %2795 = vmatpush1.bf16.msra.mxu0 0
    %2796 = vmatprep.subr.bf16.mxu0 0
    %2797 = vmatpush1.bf16.msra.mxu0 0
    %2798 = vmatprep.subr.bf16.mxu0 0
    %2799 = vmatpush1.bf16.msra.mxu0 0
    %2800 = vmatprep.subr.bf16.mxu0 0
    %2801 = vmatpush1.bf16.msra.mxu0 0
    %2802 = vmatprep.subr.bf16.mxu0 0
    %2803 = vmatpush1.bf16.msra.mxu0 0
    %2804 = vmatprep.mubr.bf16.mxu0 0
    %2805 = vmatmul.mubr.bf16.gmra.mrb[0].mxu0 %v2538
    %v2806 = vpop.f32.mrb[0].mxu0
    %v2807 = vadd.f32 %v2587, %v2806
    %v2808 = vpop.f32.mrb[0].mxu0
    %v2809 = vpop.f32.mrb[0].mxu0
    %v2810 = vadd.f32 %v2587, %v2809
    %v2811 = vpop.f32.mrb[0].mxu0
    %2812 = vmatprep.mubr.bf16.mxu0 0
    %2813 = vmatmul.mubr.bf16.gmra.mrb[0].mxu0 %v2539
    %v2814 = vpop.f32.mrb[0].mxu0
    %v2815 = vadd.f32 %v2587, %v2814
    %v2816 = vpop.f32.mrb[0].mxu0
    %v2817 = vpop.f32.mrb[0].mxu0
    %v2818 = vadd.f32 %v2587, %v2817
    %v2819 = vpop.f32.mrb[0].mxu0
    %2820 = vdwg.mxu0
    %v2821 = vpack.c.bf16 %v2758, %v2754
    %v2822 = vpack.c.bf16 %v2768, %v2764
    %v2823 = vpack.c.bf16 %v2760, %v2756
    %v2824 = vpack.c.bf16 %v2770, %v2766
    %v2825 = vpack.c.bf16 %v2810, %v2807
    %v2826 = vpack.c.bf16 %v2818, %v2815
    %v2828 = vsel %vm640, %v2821, 0
    %v2831 = vsel %vm640, %v2822, 0
    %v2834 = vsel %vm640, %v2823, 0
    %v2837 = vsel %vm640, %v2824, 0
    %2839 = vmatprep.subr.bf16.mxu0 0
    %2840 = vmatpush1.bf16.xpose.msra.mxu0 %v2834
    %2841 = vmatprep.subr.bf16.mxu0 0
    %2842 = vmatpush1.bf16.xpose.msra.mxu0 %v2837
    %2843 = vmatprep.subr.bf16.mxu0 0
    %2844 = vmatpush1.bf16.xpose.msra.mxu0 0
    %2845 = vmatprep.subr.bf16.mxu0 0
    %2846 = vmatpush1.bf16.xpose.msra.mxu0 0
    %2847 = vmatprep.subr.bf16.mxu0 0
    %2848 = vmatpush1.bf16.xpose.msra.mxu0 0
    %2849 = vmatprep.subr.bf16.mxu0 0
    %2850 = vmatpush1.bf16.xpose.msra.mxu0 0
    %2851 = vmatprep.subr.bf16.mxu0 0
    %2852 = vmatpush1.bf16.xpose.msra.mxu0 0
    %2853 = vmatprep.subr.bf16.mxu0 0
    %2854 = vmatpush1.bf16.xpose.msra.mxu0 0
    %2855 = vmatprep.subr.bf16.mxu0 0
    %2856 = vmatpush1.bf16.xpose.msra.mxu0 0
    %2857 = vmatprep.subr.bf16.mxu0 0
    %2858 = vmatpush1.bf16.xpose.msra.mxu0 0
    %2859 = vmatprep.subr.bf16.mxu0 0
    %2860 = vmatpush1.bf16.xpose.msra.mxu0 0
    %2861 = vmatprep.subr.bf16.mxu0 0
    %2862 = vmatpush1.bf16.xpose.msra.mxu0 0
    %2863 = vmatprep.subr.bf16.mxu0 0
    %2864 = vmatpush1.bf16.xpose.msra.mxu0 0
    %2865 = vmatprep.subr.bf16.mxu0 0
    %2866 = vmatpush1.bf16.xpose.msra.mxu0 0
    %2867 = vmatprep.subr.bf16.mxu0 0
    %2868 = vmatpush1.bf16.xpose.msra.mxu0 0
    %2869 = vmatprep.subr.bf16.mxu0 0
    %2870 = vmatpush1.bf16.xpose.msra.mxu0 0
    %2871 = vmatprep.mubr.bf16.mxu0 0
    %2872 = vmatmul.mubr.bf16.gmra.mrb[0].mxu0 %v2828
    %v2873 = vpop.f32.mrb[0].mxu0
    %v2874 = vadd.f32 0.0, %v2873
    %v2875 = vpop.f32.mrb[0].mxu0
    %v2876 = vpop.f32.mrb[0].mxu0
    %v2877 = vadd.f32 0.0, %v2876
    %v2878 = vpop.f32.mrb[0].mxu0
    %2879 = vmatprep.mubr.bf16.mxu0 0
    %2880 = vmatmul.mubr.bf16.gmra.mrb[0].mxu0 %v2831
    %v2881 = vpop.f32.mrb[0].mxu0
    %v2882 = vadd.f32 0.0, %v2881
    %v2883 = vpop.f32.mrb[0].mxu0
    %v2884 = vpop.f32.mrb[0].mxu0
    %v2885 = vadd.f32 0.0, %v2884
    %v2886 = vpop.f32.mrb[0].mxu0
    %2887 = vdwg.mxu0
    %v2888 = vmul.f32 %v2874, 0.17677669
    %v2889 = vmul.f32 %v2877, 0.17677669
    %v2890 = vmul.f32 %v2882, 0.17677669
    %v2891 = vmul.f32 %v2885, 0.17677669
    %v2892 = vadd.f32 %v2888, %v282
    %v2893 = vadd.f32 %v2889, %v283
    %v2894 = vadd.f32 %v2890, %v284
    %v2895 = vadd.f32 %v2891, %v285
    %v2896 = vsel %vm640, %v2892, -inf
    %2897 = vmax.xlane.f32.xlu0 %v2896
    %v2898 = vpop.xlane.xlu0 %2897
    %v2899 = vsel %vm640, %v2893, -inf
    %2900 = vmax.xlane.f32.xlu0 %v2899
    %v2901 = vpop.xlane.xlu0 %2900
    %v2902 = vsel %vm640, %v2894, -inf
    %2903 = vmax.xlane.f32.xlu0 %v2902
    %v2904 = vpop.xlane.xlu0 %2903
    %v2905 = vsel %vm640, %v2895, -inf
    %2906 = vmax.xlane.f32.xlu0 %v2905
    %v2907 = vpop.xlane.xlu0 %2906
    %v2908 = vsub.f32 %v2892, %v2898
    %v2909 = vsub.f32 %v2893, %v2901
    %v2910 = vsub.f32 %v2894, %v2904
    %v2911 = vsub.f32 %v2895, %v2907
    %v2912 = vmul.f32 %v2908, 1.442695
    %v2913 = vpow.pop %v2912
    %v2914 = vmul.f32 %v2909, 1.442695
    %v2915 = vpow.pop %v2914
    %v2916 = vmul.f32 %v2910, 1.442695
    %v2917 = vpow.pop %v2916
    %v2918 = vmul.f32 %v2911, 1.442695
    %v2919 = vpow.pop %v2918
    %v2920 = vsel %vm640, %v2913, 0.0
    %2921 = vadd.xlane.f32.xlu0 %v2920
    %v2922 = vpop.xlane.xlu0 %2921
    %v2923 = vsel %vm640, %v2915, 0.0
    %2924 = vadd.xlane.f32.xlu0 %v2923
    %v2925 = vpop.xlane.xlu0 %2924
    %v2926 = vsel %vm640, %v2917, 0.0
    %2927 = vadd.xlane.f32.xlu0 %v2926
    %v2928 = vpop.xlane.xlu0 %2927
    %v2929 = vsel %vm640, %v2919, 0.0
    %2930 = vadd.xlane.f32.xlu0 %v2929
    %v2931 = vpop.xlane.xlu0 %2930
    %v2932 = vrcp.pop %v2922
    %v2933 = vrcp.pop %v2925
    %v2934 = vrcp.pop %v2928
    %v2935 = vrcp.pop %v2931
    %v2936 = vmul.f32 %v2913, %v2932
    %v2937 = vmul.f32 %v2915, %v2933
    %v2938 = vmul.f32 %v2917, %v2934
    %v2939 = vmul.f32 %v2919, %v2935
    %v2940 = vpack.c.bf16 %v2937, %v2936
    %v2941 = vpack.c.bf16 %v2939, %v2938
    %v2943 = vsel %vm640, %v2940, 0
    %v2946 = vsel %vm640, %v2941, 0
    %2948 = vmatprep.subr.bf16.mxu0 0
    %2949 = vmatpush1.bf16.msra.mxu0 %v2825
    %2950 = vmatprep.subr.bf16.mxu0 0
    %2951 = vmatpush1.bf16.msra.mxu0 %v2826
    %2952 = vmatprep.subr.bf16.mxu0 0
    %2953 = vmatpush1.bf16.msra.mxu0 0
    %2954 = vmatprep.subr.bf16.mxu0 0
    %2955 = vmatpush1.bf16.msra.mxu0 0
    %2956 = vmatprep.subr.bf16.mxu0 0
    %2957 = vmatpush1.bf16.msra.mxu0 0
    %2958 = vmatprep.subr.bf16.mxu0 0
    %2959 = vmatpush1.bf16.msra.mxu0 0
    %2960 = vmatprep.subr.bf16.mxu0 0
    %2961 = vmatpush1.bf16.msra.mxu0 0
    %2962 = vmatprep.subr.bf16.mxu0 0
    %2963 = vmatpush1.bf16.msra.mxu0 0
    %2964 = vmatprep.subr.bf16.mxu0 0
    %2965 = vmatpush1.bf16.msra.mxu0 0
    %2966 = vmatprep.subr.bf16.mxu0 0
    %2967 = vmatpush1.bf16.msra.mxu0 0
    %2968 = vmatprep.subr.bf16.mxu0 0
    %2969 = vmatpush1.bf16.msra.mxu0 0
    %2970 = vmatprep.subr.bf16.mxu0 0
    %2971 = vmatpush1.bf16.msra.mxu0 0
    %2972 = vmatprep.subr.bf16.mxu0 0
    %2973 = vmatpush1.bf16.msra.mxu0 0
    %2974 = vmatprep.subr.bf16.mxu0 0
    %2975 = vmatpush1.bf16.msra.mxu0 0
    %2976 = vmatprep.subr.bf16.mxu0 0
    %2977 = vmatpush1.bf16.msra.mxu0 0
    %2978 = vmatprep.subr.bf16.mxu0 0
    %2979 = vmatpush1.bf16.msra.mxu0 0
    %2980 = vmatprep.mubr.bf16.mxu0 0
    %2981 = vmatmul.mubr.bf16.gmra.mrb[0].mxu0 %v2943
    %v2982 = vpop.f32.mrb[0].mxu0
    %v2983 = vadd.f32 0.0, %v2982
    %v2984 = vpop.f32.mrb[0].mxu0
    %v2985 = vpop.f32.mrb[0].mxu0
    %v2986 = vadd.f32 0.0, %v2985
    %v2987 = vpop.f32.mrb[0].mxu0
    %2988 = vmatprep.mubr.bf16.mxu0 0
    %2989 = vmatmul.mubr.bf16.gmra.mrb[0].mxu0 %v2946
    %v2990 = vpop.f32.mrb[0].mxu0
    %v2991 = vadd.f32 0.0, %v2990
    %v2992 = vpop.f32.mrb[0].mxu0
    %v2993 = vpop.f32.mrb[0].mxu0
    %v2994 = vadd.f32 0.0, %v2993
    %v2995 = vpop.f32.mrb[0].mxu0
    %2996 = vdwg.mxu0
    %2999 = vrot.lane.b32.xlu0 %v2821, 96
    %v3000 = vpop.permute.xlu0 %2999
    %3001 = vrot.lane.b32.xlu0 %v2822, 96
    %v3002 = vpop.permute.xlu0 %3001
    %3005 = vrot.lane.b32.xlu0 %v2823, 96
    %v3006 = vpop.permute.xlu0 %3005
    %3007 = vrot.lane.b32.xlu0 %v2824, 96
    %v3008 = vpop.permute.xlu0 %3007
    %v3010 = vsel %vm640, %v3000, 0
    %v3013 = vsel %vm640, %v3002, 0
    %v3016 = vsel %vm640, %v3006, 0
    %v3019 = vsel %vm640, %v3008, 0
    %3021 = vmatprep.subr.bf16.mxu0 0
    %3022 = vmatpush1.bf16.xpose.msra.mxu0 %v3016
    %3023 = vmatprep.subr.bf16.mxu0 0
    %3024 = vmatpush1.bf16.xpose.msra.mxu0 %v3019
    %3025 = vmatprep.subr.bf16.mxu0 0
    %3026 = vmatpush1.bf16.xpose.msra.mxu0 0
    %3027 = vmatprep.subr.bf16.mxu0 0
    %3028 = vmatpush1.bf16.xpose.msra.mxu0 0
    %3029 = vmatprep.subr.bf16.mxu0 0
    %3030 = vmatpush1.bf16.xpose.msra.mxu0 0
    %3031 = vmatprep.subr.bf16.mxu0 0
    %3032 = vmatpush1.bf16.xpose.msra.mxu0 0
    %3033 = vmatprep.subr.bf16.mxu0 0
    %3034 = vmatpush1.bf16.xpose.msra.mxu0 0
    %3035 = vmatprep.subr.bf16.mxu0 0
    %3036 = vmatpush1.bf16.xpose.msra.mxu0 0
    %3037 = vmatprep.subr.bf16.mxu0 0
    %3038 = vmatpush1.bf16.xpose.msra.mxu0 0
    %3039 = vmatprep.subr.bf16.mxu0 0
    %3040 = vmatpush1.bf16.xpose.msra.mxu0 0
    %3041 = vmatprep.subr.bf16.mxu0 0
    %3042 = vmatpush1.bf16.xpose.msra.mxu0 0
    %3043 = vmatprep.subr.bf16.mxu0 0
    %3044 = vmatpush1.bf16.xpose.msra.mxu0 0
    %3045 = vmatprep.subr.bf16.mxu0 0
    %3046 = vmatpush1.bf16.xpose.msra.mxu0 0
    %3047 = vmatprep.subr.bf16.mxu0 0
    %3048 = vmatpush1.bf16.xpose.msra.mxu0 0
    %3049 = vmatprep.subr.bf16.mxu0 0
    %3050 = vmatpush1.bf16.xpose.msra.mxu0 0
    %3051 = vmatprep.subr.bf16.mxu0 0
    %3052 = vmatpush1.bf16.xpose.msra.mxu0 0
    %3053 = vmatprep.mubr.bf16.mxu0 0
    %3054 = vmatmul.mubr.bf16.gmra.mrb[0].mxu0 %v3010
    %v3055 = vpop.f32.mrb[0].mxu0
    %v3056 = vadd.f32 0.0, %v3055
    %v3057 = vpop.f32.mrb[0].mxu0
    %v3058 = vpop.f32.mrb[0].mxu0
    %v3059 = vadd.f32 0.0, %v3058
    %v3060 = vpop.f32.mrb[0].mxu0
    %3061 = vmatprep.mubr.bf16.mxu0 0
    %3062 = vmatmul.mubr.bf16.gmra.mrb[0].mxu0 %v3013
    %v3063 = vpop.f32.mrb[0].mxu0
    %v3064 = vadd.f32 0.0, %v3063
    %v3065 = vpop.f32.mrb[0].mxu0
    %v3066 = vpop.f32.mrb[0].mxu0
    %v3067 = vadd.f32 0.0, %v3066
    %v3068 = vpop.f32.mrb[0].mxu0
    %3069 = vdwg.mxu0
    %v3070 = vmul.f32 %v3056, 0.17677669
    %v3071 = vmul.f32 %v3059, 0.17677669
    %v3072 = vmul.f32 %v3064, 0.17677669
    %v3073 = vmul.f32 %v3067, 0.17677669
    %v3074 = vadd.f32 %v3070, %v282
    %v3075 = vadd.f32 %v3071, %v283
    %v3076 = vadd.f32 %v3072, %v284
    %v3077 = vadd.f32 %v3073, %v285
    %v3078 = vsel %vm640, %v3074, -inf
    %3079 = vmax.xlane.f32.xlu0 %v3078
    %v3080 = vpop.xlane.xlu0 %3079
    %v3081 = vsel %vm640, %v3075, -inf
    %3082 = vmax.xlane.f32.xlu0 %v3081
    %v3083 = vpop.xlane.xlu0 %3082
    %v3084 = vsel %vm640, %v3076, -inf
    %3085 = vmax.xlane.f32.xlu0 %v3084
    %v3086 = vpop.xlane.xlu0 %3085
    %v3087 = vsel %vm640, %v3077, -inf
    %3088 = vmax.xlane.f32.xlu0 %v3087
    %v3089 = vpop.xlane.xlu0 %3088
    %v3090 = vsub.f32 %v3074, %v3080
    %v3091 = vsub.f32 %v3075, %v3083
    %v3092 = vsub.f32 %v3076, %v3086
    %v3093 = vsub.f32 %v3077, %v3089
    %v3094 = vmul.f32 %v3090, 1.442695
    %v3095 = vpow.pop %v3094
    %v3096 = vmul.f32 %v3091, 1.442695
    %v3097 = vpow.pop %v3096
    %v3098 = vmul.f32 %v3092, 1.442695
    %v3099 = vpow.pop %v3098
    %v3100 = vmul.f32 %v3093, 1.442695
    %v3101 = vpow.pop %v3100
    %v3102 = vsel %vm640, %v3095, 0.0
    %3103 = vadd.xlane.f32.xlu0 %v3102
    %v3104 = vpop.xlane.xlu0 %3103
    %v3105 = vsel %vm640, %v3097, 0.0
    %3106 = vadd.xlane.f32.xlu0 %v3105
    %v3107 = vpop.xlane.xlu0 %3106
    %v3108 = vsel %vm640, %v3099, 0.0
    %3109 = vadd.xlane.f32.xlu0 %v3108
    %v3110 = vpop.xlane.xlu0 %3109
    %v3111 = vsel %vm640, %v3101, 0.0
    %3112 = vadd.xlane.f32.xlu0 %v3111
    %v3113 = vpop.xlane.xlu0 %3112
    %v3114 = vrcp.pop %v3104
    %v3115 = vrcp.pop %v3107
    %v3116 = vrcp.pop %v3110
    %v3117 = vrcp.pop %v3113
    %v3118 = vmul.f32 %v3095, %v3114
    %v3119 = vmul.f32 %v3097, %v3115
    %v3120 = vmul.f32 %v3099, %v3116
    %v3121 = vmul.f32 %v3101, %v3117
    %v3122 = vpack.c.bf16 %v3119, %v3118
    %v3123 = vpack.c.bf16 %v3121, %v3120
    %3126 = vrot.lane.b32.xlu0 %v2825, 96
    %v3127 = vpop.permute.xlu0 %3126
    %3128 = vrot.lane.b32.xlu0 %v2826, 96
    %v3129 = vpop.permute.xlu0 %3128
    %v3133 = vsel %vm640, %v3122, 0
    %v3136 = vsel %vm640, %v3123, 0
    %3138 = vmatprep.subr.bf16.mxu0 0
    %3139 = vmatpush1.bf16.msra.mxu0 %v3127
    %3140 = vmatprep.subr.bf16.mxu0 0
    %3141 = vmatpush1.bf16.msra.mxu0 %v3129
    %3142 = vmatprep.subr.bf16.mxu0 0
    %3143 = vmatpush1.bf16.msra.mxu0 0
    %3144 = vmatprep.subr.bf16.mxu0 0
    %3145 = vmatpush1.bf16.msra.mxu0 0
    %3146 = vmatprep.subr.bf16.mxu0 0
    %3147 = vmatpush1.bf16.msra.mxu0 0
    %3148 = vmatprep.subr.bf16.mxu0 0
    %3149 = vmatpush1.bf16.msra.mxu0 0
    %3150 = vmatprep.subr.bf16.mxu0 0
    %3151 = vmatpush1.bf16.msra.mxu0 0
    %3152 = vmatprep.subr.bf16.mxu0 0
    %3153 = vmatpush1.bf16.msra.mxu0 0
    %3154 = vmatprep.subr.bf16.mxu0 0
    %3155 = vmatpush1.bf16.msra.mxu0 0
    %3156 = vmatprep.subr.bf16.mxu0 0
    %3157 = vmatpush1.bf16.msra.mxu0 0
    %3158 = vmatprep.subr.bf16.mxu0 0
    %3159 = vmatpush1.bf16.msra.mxu0 0
    %3160 = vmatprep.subr.bf16.mxu0 0
    %3161 = vmatpush1.bf16.msra.mxu0 0
    %3162 = vmatprep.subr.bf16.mxu0 0
    %3163 = vmatpush1.bf16.msra.mxu0 0
    %3164 = vmatprep.subr.bf16.mxu0 0
    %3165 = vmatpush1.bf16.msra.mxu0 0
    %3166 = vmatprep.subr.bf16.mxu0 0
    %3167 = vmatpush1.bf16.msra.mxu0 0
    %3168 = vmatprep.subr.bf16.mxu0 0
    %3169 = vmatpush1.bf16.msra.mxu0 0
    %3170 = vmatprep.mubr.bf16.mxu0 0
    %3171 = vmatmul.mubr.bf16.gmra.mrb[0].mxu0 %v3133
    %v3172 = vpop.f32.mrb[0].mxu0
    %v3173 = vadd.f32 0.0, %v3172
    %v3174 = vpop.f32.mrb[0].mxu0
    %v3175 = vpop.f32.mrb[0].mxu0
    %v3176 = vadd.f32 0.0, %v3175
    %v3177 = vpop.f32.mrb[0].mxu0
    %3178 = vmatprep.mubr.bf16.mxu0 0
    %3179 = vmatmul.mubr.bf16.gmra.mrb[0].mxu0 %v3136
    %v3180 = vpop.f32.mrb[0].mxu0
    %v3181 = vadd.f32 0.0, %v3180
    %v3182 = vpop.f32.mrb[0].mxu0
    %v3183 = vpop.f32.mrb[0].mxu0
    %v3184 = vadd.f32 0.0, %v3183
    %v3185 = vpop.f32.mrb[0].mxu0
    %3186 = vdwg.mxu0
    %3187 = vrot.lane.b32.xlu0 %v2821, 64
    %v3188 = vpop.permute.xlu0 %3187
    %3189 = vrot.lane.b32.xlu0 %v2822, 64
    %v3190 = vpop.permute.xlu0 %3189
    %3191 = vrot.lane.b32.xlu0 %v2823, 64
    %v3192 = vpop.permute.xlu0 %3191
    %3193 = vrot.lane.b32.xlu0 %v2824, 64
    %v3194 = vpop.permute.xlu0 %3193
    %v3196 = vsel %vm640, %v3188, 0
    %v3199 = vsel %vm640, %v3190, 0
    %v3202 = vsel %vm640, %v3192, 0
    %v3205 = vsel %vm640, %v3194, 0
    %3207 = vmatprep.subr.bf16.mxu0 0
    %3208 = vmatpush1.bf16.xpose.msra.mxu0 %v3202
    %3209 = vmatprep.subr.bf16.mxu0 0
    %3210 = vmatpush1.bf16.xpose.msra.mxu0 %v3205
    %3211 = vmatprep.subr.bf16.mxu0 0
    %3212 = vmatpush1.bf16.xpose.msra.mxu0 0
    %3213 = vmatprep.subr.bf16.mxu0 0
    %3214 = vmatpush1.bf16.xpose.msra.mxu0 0
    %3215 = vmatprep.subr.bf16.mxu0 0
    %3216 = vmatpush1.bf16.xpose.msra.mxu0 0
    %3217 = vmatprep.subr.bf16.mxu0 0
    %3218 = vmatpush1.bf16.xpose.msra.mxu0 0
    %3219 = vmatprep.subr.bf16.mxu0 0
    %3220 = vmatpush1.bf16.xpose.msra.mxu0 0
    %3221 = vmatprep.subr.bf16.mxu0 0
    %3222 = vmatpush1.bf16.xpose.msra.mxu0 0
    %3223 = vmatprep.subr.bf16.mxu0 0
    %3224 = vmatpush1.bf16.xpose.msra.mxu0 0
    %3225 = vmatprep.subr.bf16.mxu0 0
    %3226 = vmatpush1.bf16.xpose.msra.mxu0 0
    %3227 = vmatprep.subr.bf16.mxu0 0
    %3228 = vmatpush1.bf16.xpose.msra.mxu0 0
    %3229 = vmatprep.subr.bf16.mxu0 0
    %3230 = vmatpush1.bf16.xpose.msra.mxu0 0
    %3231 = vmatprep.subr.bf16.mxu0 0
    %3232 = vmatpush1.bf16.xpose.msra.mxu0 0
    %3233 = vmatprep.subr.bf16.mxu0 0
    %3234 = vmatpush1.bf16.xpose.msra.mxu0 0
    %3235 = vmatprep.subr.bf16.mxu0 0
    %3236 = vmatpush1.bf16.xpose.msra.mxu0 0
    %3237 = vmatprep.subr.bf16.mxu0 0
    %3238 = vmatpush1.bf16.xpose.msra.mxu0 0
    %3239 = vmatprep.mubr.bf16.mxu0 0
    %3240 = vmatmul.mubr.bf16.gmra.mrb[0].mxu0 %v3196
    %v3241 = vpop.f32.mrb[0].mxu0
    %v3242 = vadd.f32 0.0, %v3241
    %v3243 = vpop.f32.mrb[0].mxu0
    %v3244 = vpop.f32.mrb[0].mxu0
    %v3245 = vadd.f32 0.0, %v3244
    %v3246 = vpop.f32.mrb[0].mxu0
    %3247 = vmatprep.mubr.bf16.mxu0 0
    %3248 = vmatmul.mubr.bf16.gmra.mrb[0].mxu0 %v3199
    %v3249 = vpop.f32.mrb[0].mxu0
    %v3250 = vadd.f32 0.0, %v3249
    %v3251 = vpop.f32.mrb[0].mxu0
    %v3252 = vpop.f32.mrb[0].mxu0
    %v3253 = vadd.f32 0.0, %v3252
    %v3254 = vpop.f32.mrb[0].mxu0
    %3255 = vdwg.mxu0
    %v3256 = vmul.f32 %v3242, 0.17677669
    %v3257 = vmul.f32 %v3245, 0.17677669
    %v3258 = vmul.f32 %v3250, 0.17677669
    %v3259 = vmul.f32 %v3253, 0.17677669
    %v3260 = vadd.f32 %v3256, %v282
    %v3261 = vadd.f32 %v3257, %v283
    %v3262 = vadd.f32 %v3258, %v284
    %v3263 = vadd.f32 %v3259, %v285
    %v3264 = vsel %vm640, %v3260, -inf
    %3265 = vmax.xlane.f32.xlu0 %v3264
    %v3266 = vpop.xlane.xlu0 %3265
    %v3267 = vsel %vm640, %v3261, -inf
    %3268 = vmax.xlane.f32.xlu0 %v3267
    %v3269 = vpop.xlane.xlu0 %3268
    %v3270 = vsel %vm640, %v3262, -inf
    %3271 = vmax.xlane.f32.xlu0 %v3270
    %v3272 = vpop.xlane.xlu0 %3271
    %v3273 = vsel %vm640, %v3263, -inf
    %3274 = vmax.xlane.f32.xlu0 %v3273
    %v3275 = vpop.xlane.xlu0 %3274
    %v3276 = vsub.f32 %v3260, %v3266
    %v3277 = vsub.f32 %v3261, %v3269
    %v3278 = vsub.f32 %v3262, %v3272
    %v3279 = vsub.f32 %v3263, %v3275
    %v3280 = vmul.f32 %v3276, 1.442695
    %v3281 = vpow.pop %v3280
    %v3282 = vmul.f32 %v3277, 1.442695
    %v3283 = vpow.pop %v3282
    %v3284 = vmul.f32 %v3278, 1.442695
    %v3285 = vpow.pop %v3284
    %v3286 = vmul.f32 %v3279, 1.442695
    %v3287 = vpow.pop %v3286
    %v3288 = vsel %vm640, %v3281, 0.0
    %3289 = vadd.xlane.f32.xlu0 %v3288
    %v3290 = vpop.xlane.xlu0 %3289
    %v3291 = vsel %vm640, %v3283, 0.0
    %3292 = vadd.xlane.f32.xlu0 %v3291
    %v3293 = vpop.xlane.xlu0 %3292
    %v3294 = vsel %vm640, %v3285, 0.0
    %3295 = vadd.xlane.f32.xlu0 %v3294
    %v3296 = vpop.xlane.xlu0 %3295
    %v3297 = vsel %vm640, %v3287, 0.0
    %3298 = vadd.xlane.f32.xlu0 %v3297
    %v3299 = vpop.xlane.xlu0 %3298
    %v3300 = vrcp.pop %v3290
    %v3301 = vrcp.pop %v3293
    %v3302 = vrcp.pop %v3296
    %v3303 = vrcp.pop %v3299
    %v3304 = vmul.f32 %v3281, %v3300
    %v3305 = vmul.f32 %v3283, %v3301
    %v3306 = vmul.f32 %v3285, %v3302
    %v3307 = vmul.f32 %v3287, %v3303
    %v3308 = vpack.c.bf16 %v3305, %v3304
    %v3309 = vpack.c.bf16 %v3307, %v3306
    %3310 = vrot.lane.b32.xlu0 %v2825, 64
    %v3311 = vpop.permute.xlu0 %3310
    %3312 = vrot.lane.b32.xlu0 %v2826, 64
    %v3313 = vpop.permute.xlu0 %3312
    %v3317 = vsel %vm640, %v3308, 0
    %v3320 = vsel %vm640, %v3309, 0
    %3322 = vmatprep.subr.bf16.mxu0 0
    %3323 = vmatpush1.bf16.msra.mxu0 %v3311
    %3324 = vmatprep.subr.bf16.mxu0 0
    %3325 = vmatpush1.bf16.msra.mxu0 %v3313
    %3326 = vmatprep.subr.bf16.mxu0 0
    %3327 = vmatpush1.bf16.msra.mxu0 0
    %3328 = vmatprep.subr.bf16.mxu0 0
    %3329 = vmatpush1.bf16.msra.mxu0 0
    %3330 = vmatprep.subr.bf16.mxu0 0
    %3331 = vmatpush1.bf16.msra.mxu0 0
    %3332 = vmatprep.subr.bf16.mxu0 0
    %3333 = vmatpush1.bf16.msra.mxu0 0
    %3334 = vmatprep.subr.bf16.mxu0 0
    %3335 = vmatpush1.bf16.msra.mxu0 0
    %3336 = vmatprep.subr.bf16.mxu0 0
    %3337 = vmatpush1.bf16.msra.mxu0 0
    %3338 = vmatprep.subr.bf16.mxu0 0
    %3339 = vmatpush1.bf16.msra.mxu0 0
    %3340 = vmatprep.subr.bf16.mxu0 0
    %3341 = vmatpush1.bf16.msra.mxu0 0
    %3342 = vmatprep.subr.bf16.mxu0 0
    %3343 = vmatpush1.bf16.msra.mxu0 0
    %3344 = vmatprep.subr.bf16.mxu0 0
    %3345 = vmatpush1.bf16.msra.mxu0 0
    %3346 = vmatprep.subr.bf16.mxu0 0
    %3347 = vmatpush1.bf16.msra.mxu0 0
    %3348 = vmatprep.subr.bf16.mxu0 0
    %3349 = vmatpush1.bf16.msra.mxu0 0
    %3350 = vmatprep.subr.bf16.mxu0 0
    %3351 = vmatpush1.bf16.msra.mxu0 0
    %3352 = vmatprep.subr.bf16.mxu0 0
    %3353 = vmatpush1.bf16.msra.mxu0 0
    %3354 = vmatprep.mubr.bf16.mxu0 0
    %3355 = vmatmul.mubr.bf16.gmra.mrb[0].mxu0 %v3317
    %v3356 = vpop.f32.mrb[0].mxu0
    %v3357 = vadd.f32 0.0, %v3356
    %v3358 = vpop.f32.mrb[0].mxu0
    %v3359 = vpop.f32.mrb[0].mxu0
    %v3360 = vadd.f32 0.0, %v3359
    %v3361 = vpop.f32.mrb[0].mxu0
    %3362 = vmatprep.mubr.bf16.mxu0 0
    %3363 = vmatmul.mubr.bf16.gmra.mrb[0].mxu0 %v3320
    %v3364 = vpop.f32.mrb[0].mxu0
    %v3365 = vadd.f32 0.0, %v3364
    %v3366 = vpop.f32.mrb[0].mxu0
    %v3367 = vpop.f32.mrb[0].mxu0
    %v3368 = vadd.f32 0.0, %v3367
    %v3369 = vpop.f32.mrb[0].mxu0
    %3370 = vdwg.mxu0
    %3371 = vrot.lane.b32.xlu0 %v2821, 32
    %v3372 = vpop.permute.xlu0 %3371
    %3373 = vrot.lane.b32.xlu0 %v2822, 32
    %v3374 = vpop.permute.xlu0 %3373
    %3375 = vrot.lane.b32.xlu0 %v2823, 32
    %v3376 = vpop.permute.xlu0 %3375
    %3377 = vrot.lane.b32.xlu0 %v2824, 32
    %v3378 = vpop.permute.xlu0 %3377
    %v3380 = vsel %vm640, %v3372, 0
    %v3383 = vsel %vm640, %v3374, 0
    %v3386 = vsel %vm640, %v3376, 0
    %v3389 = vsel %vm640, %v3378, 0
    %3391 = vmatprep.subr.bf16.mxu0 0
    %3392 = vmatpush1.bf16.xpose.msra.mxu0 %v3386
    %3393 = vmatprep.subr.bf16.mxu0 0
    %3394 = vmatpush1.bf16.xpose.msra.mxu0 %v3389
    %3395 = vmatprep.subr.bf16.mxu0 0
    %3396 = vmatpush1.bf16.xpose.msra.mxu0 0
    %3397 = vmatprep.subr.bf16.mxu0 0
    %3398 = vmatpush1.bf16.xpose.msra.mxu0 0
    %3399 = vmatprep.subr.bf16.mxu0 0
    %3400 = vmatpush1.bf16.xpose.msra.mxu0 0
    %3401 = vmatprep.subr.bf16.mxu0 0
    %3402 = vmatpush1.bf16.xpose.msra.mxu0 0
    %3403 = vmatprep.subr.bf16.mxu0 0
    %3404 = vmatpush1.bf16.xpose.msra.mxu0 0
    %3405 = vmatprep.subr.bf16.mxu0 0
    %3406 = vmatpush1.bf16.xpose.msra.mxu0 0
    %3407 = vmatprep.subr.bf16.mxu0 0
    %3408 = vmatpush1.bf16.xpose.msra.mxu0 0
    %3409 = vmatprep.subr.bf16.mxu0 0
    %3410 = vmatpush1.bf16.xpose.msra.mxu0 0
    %3411 = vmatprep.subr.bf16.mxu0 0
    %3412 = vmatpush1.bf16.xpose.msra.mxu0 0
    %3413 = vmatprep.subr.bf16.mxu0 0
    %3414 = vmatpush1.bf16.xpose.msra.mxu0 0
    %3415 = vmatprep.subr.bf16.mxu0 0
    %3416 = vmatpush1.bf16.xpose.msra.mxu0 0
    %3417 = vmatprep.subr.bf16.mxu0 0
    %3418 = vmatpush1.bf16.xpose.msra.mxu0 0
    %3419 = vmatprep.subr.bf16.mxu0 0
    %3420 = vmatpush1.bf16.xpose.msra.mxu0 0
    %3421 = vmatprep.subr.bf16.mxu0 0
    %3422 = vmatpush1.bf16.xpose.msra.mxu0 0
    %3423 = vmatprep.mubr.bf16.mxu0 0
    %3424 = vmatmul.mubr.bf16.gmra.mrb[0].mxu0 %v3380
    %v3425 = vpop.f32.mrb[0].mxu0
    %v3426 = vadd.f32 0.0, %v3425
    %v3427 = vpop.f32.mrb[0].mxu0
    %v3428 = vpop.f32.mrb[0].mxu0
    %v3429 = vadd.f32 0.0, %v3428
    %v3430 = vpop.f32.mrb[0].mxu0
    %3431 = vmatprep.mubr.bf16.mxu0 0
    %3432 = vmatmul.mubr.bf16.gmra.mrb[0].mxu0 %v3383
    %v3433 = vpop.f32.mrb[0].mxu0
    %v3434 = vadd.f32 0.0, %v3433
    %v3435 = vpop.f32.mrb[0].mxu0
    %v3436 = vpop.f32.mrb[0].mxu0
    %v3437 = vadd.f32 0.0, %v3436
    %v3438 = vpop.f32.mrb[0].mxu0
    %3439 = vdwg.mxu0
    %v3440 = vmul.f32 %v3426, 0.17677669
    %v3441 = vmul.f32 %v3429, 0.17677669
    %v3442 = vmul.f32 %v3434, 0.17677669
    %v3443 = vmul.f32 %v3437, 0.17677669
    %v3444 = vadd.f32 %v3440, %v282
    %v3445 = vadd.f32 %v3441, %v283
    %v3446 = vadd.f32 %v3442, %v284
    %v3447 = vadd.f32 %v3443, %v285
    %v3448 = vsel %vm640, %v3444, -inf
    %3449 = vmax.xlane.f32.xlu0 %v3448
    %v3450 = vpop.xlane.xlu0 %3449
    %v3451 = vsel %vm640, %v3445, -inf
    %3452 = vmax.xlane.f32.xlu0 %v3451
    %v3453 = vpop.xlane.xlu0 %3452
    %v3454 = vsel %vm640, %v3446, -inf
    %3455 = vmax.xlane.f32.xlu0 %v3454
    %v3456 = vpop.xlane.xlu0 %3455
    %v3457 = vsel %vm640, %v3447, -inf
    %3458 = vmax.xlane.f32.xlu0 %v3457
    %v3459 = vpop.xlane.xlu0 %3458
    %v3460 = vsub.f32 %v3444, %v3450
    %v3461 = vsub.f32 %v3445, %v3453
    %v3462 = vsub.f32 %v3446, %v3456
    %v3463 = vsub.f32 %v3447, %v3459
    %v3464 = vmul.f32 %v3460, 1.442695
    %v3465 = vpow.pop %v3464
    %v3466 = vmul.f32 %v3461, 1.442695
    %v3467 = vpow.pop %v3466
    %v3468 = vmul.f32 %v3462, 1.442695
    %v3469 = vpow.pop %v3468
    %v3470 = vmul.f32 %v3463, 1.442695
    %v3471 = vpow.pop %v3470
    %v3472 = vsel %vm640, %v3465, 0.0
    %3473 = vadd.xlane.f32.xlu0 %v3472
    %v3474 = vpop.xlane.xlu0 %3473
    %v3475 = vsel %vm640, %v3467, 0.0
    %3476 = vadd.xlane.f32.xlu0 %v3475
    %v3477 = vpop.xlane.xlu0 %3476
    %v3478 = vsel %vm640, %v3469, 0.0
    %3479 = vadd.xlane.f32.xlu0 %v3478
    %v3480 = vpop.xlane.xlu0 %3479
    %v3481 = vsel %vm640, %v3471, 0.0
    %3482 = vadd.xlane.f32.xlu0 %v3481
    %v3483 = vpop.xlane.xlu0 %3482
    %v3484 = vrcp.pop %v3474
    %v3485 = vrcp.pop %v3477
    %v3486 = vrcp.pop %v3480
    %v3487 = vrcp.pop %v3483
    %v3488 = vmul.f32 %v3465, %v3484
    %v3489 = vmul.f32 %v3467, %v3485
    %v3490 = vmul.f32 %v3469, %v3486
    %v3491 = vmul.f32 %v3471, %v3487
    %v3492 = vpack.c.bf16 %v3489, %v3488
    %v3493 = vpack.c.bf16 %v3491, %v3490
    %3494 = vrot.lane.b32.xlu0 %v2825, 32
    %v3495 = vpop.permute.xlu0 %3494
    %3496 = vrot.lane.b32.xlu0 %v2826, 32
    %v3497 = vpop.permute.xlu0 %3496
    %v3501 = vsel %vm640, %v3492, 0
    %v3504 = vsel %vm640, %v3493, 0
    %3506 = vmatprep.subr.bf16.mxu0 0
    %3507 = vmatpush1.bf16.msra.mxu0 %v3495
    %3508 = vmatprep.subr.bf16.mxu0 0
    %3509 = vmatpush1.bf16.msra.mxu0 %v3497
    %3510 = vmatprep.subr.bf16.mxu0 0
    %3511 = vmatpush1.bf16.msra.mxu0 0
    %3512 = vmatprep.subr.bf16.mxu0 0
    %3513 = vmatpush1.bf16.msra.mxu0 0
    %3514 = vmatprep.subr.bf16.mxu0 0
    %3515 = vmatpush1.bf16.msra.mxu0 0
    %3516 = vmatprep.subr.bf16.mxu0 0
    %3517 = vmatpush1.bf16.msra.mxu0 0
    %3518 = vmatprep.subr.bf16.mxu0 0
    %3519 = vmatpush1.bf16.msra.mxu0 0
    %3520 = vmatprep.subr.bf16.mxu0 0
    %3521 = vmatpush1.bf16.msra.mxu0 0
    %3522 = vmatprep.subr.bf16.mxu0 0
    %3523 = vmatpush1.bf16.msra.mxu0 0
    %3524 = vmatprep.subr.bf16.mxu0 0
    %3525 = vmatpush1.bf16.msra.mxu0 0
    %3526 = vmatprep.subr.bf16.mxu0 0
    %3527 = vmatpush1.bf16.msra.mxu0 0
    %3528 = vmatprep.subr.bf16.mxu0 0
    %3529 = vmatpush1.bf16.msra.mxu0 0
    %3530 = vmatprep.subr.bf16.mxu0 0
    %3531 = vmatpush1.bf16.msra.mxu0 0
    %3532 = vmatprep.subr.bf16.mxu0 0
    %3533 = vmatpush1.bf16.msra.mxu0 0
    %3534 = vmatprep.subr.bf16.mxu0 0
    %3535 = vmatpush1.bf16.msra.mxu0 0
    %3536 = vmatprep.subr.bf16.mxu0 0
    %3537 = vmatpush1.bf16.msra.mxu0 0
    %3538 = vmatprep.mubr.bf16.mxu0 0
    %3539 = vmatmul.mubr.bf16.gmra.mrb[0].mxu0 %v3501
    %v3540 = vpop.f32.mrb[0].mxu0
    %v3541 = vadd.f32 0.0, %v3540
    %v3542 = vpop.f32.mrb[0].mxu0
    %v3543 = vpop.f32.mrb[0].mxu0
    %v3544 = vadd.f32 0.0, %v3543
    %v3545 = vpop.f32.mrb[0].mxu0
    %3546 = vmatprep.mubr.bf16.mxu0 0
    %3547 = vmatmul.mubr.bf16.gmra.mrb[0].mxu0 %v3504
    %v3548 = vpop.f32.mrb[0].mxu0
    %v3549 = vadd.f32 0.0, %v3548
    %v3550 = vpop.f32.mrb[0].mxu0
    %v3551 = vpop.f32.mrb[0].mxu0
    %v3552 = vadd.f32 0.0, %v3551
    %v3553 = vpop.f32.mrb[0].mxu0
    %3554 = vdwg.mxu0
    %3559 = vrot.lane.b32.xlu0 %v3173, 32
    %v3560 = vpop.permute.xlu0 %3559
    %3561 = vrot.lane.b32.xlu0 %v3176, 32
    %v3562 = vpop.permute.xlu0 %3561
    %3563 = vrot.lane.b32.xlu0 %v3181, 32
    %v3564 = vpop.permute.xlu0 %3563
    %3565 = vrot.lane.b32.xlu0 %v3184, 32
    %v3566 = vpop.permute.xlu0 %3565
    %3575 = vrot.lane.b32.xlu0 %v3357, 64
    %v3576 = vpop.permute.xlu0 %3575
    %3577 = vrot.lane.b32.xlu0 %v3360, 64
    %v3578 = vpop.permute.xlu0 %3577
    %3579 = vrot.lane.b32.xlu0 %v3365, 64
    %v3580 = vpop.permute.xlu0 %3579
    %3581 = vrot.lane.b32.xlu0 %v3368, 64
    %v3582 = vpop.permute.xlu0 %3581
    %3591 = vrot.lane.b32.xlu0 %v3541, 96
    %v3592 = vpop.permute.xlu0 %3591
    %3593 = vrot.lane.b32.xlu0 %v3544, 96
    %v3594 = vpop.permute.xlu0 %3593
    %3595 = vrot.lane.b32.xlu0 %v3549, 96
    %v3596 = vpop.permute.xlu0 %3595
    %3597 = vrot.lane.b32.xlu0 %v3552, 96
    %v3598 = vpop.permute.xlu0 %3597
    %v3603 = vsel %vm640, %v2983, %v3560
    %v3604 = vsel %vm640, %v2986, %v3562
    %v3605 = vsel %vm640, %v2991, %v3564
    %v3606 = vsel %vm640, %v2994, %v3566
    %v3607 = vsel %vm1421, %v3603, %v3576
    %v3608 = vsel %vm1421, %v3604, %v3578
    %v3609 = vsel %vm1421, %v3605, %v3580
    %v3610 = vsel %vm1421, %v3606, %v3582
    %v3611 = vsel %vm1426, %v3607, %v3592
    %v3612 = vsel %vm1426, %v3608, %v3594
    %v3613 = vsel %vm1426, %v3609, %v3596
    %v3614 = vsel %vm1426, %v3610, %v3598
    %v3615 = vpack.c.bf16 %v3612, %v3611
    %v3616 = vpack.c.bf16 %v3614, %v3613
    %s3617 = scalar_lea.vmem [#allocation8], 64
    %v3618 = vld [vmem:[%s3617] sm:$0xf]
    %v3619 = vld [vmem:[%s3617 + $0x4] sm:$0xf]
    %v3620 = vld [vmem:[%s3617 + $0x8] sm:$0xf]
    %v3621 = vld [vmem:[%s3617 + $0xc] sm:$0xf]
    %v3622 = vld [vmem:[%s3617 + $0x10] sm:$0xf]
    %v3623 = vld [vmem:[%s3617 + $0x14] sm:$0xf]
    %v3624 = vld [vmem:[%s3617 + $0x18] sm:$0xf]
    %v3625 = vld [vmem:[%s3617 + $0x1c] sm:$0xf]
    %v3626 = vld [vmem:[%s3617 + $0x20] sm:$0xf]
    %v3627 = vld [vmem:[%s3617 + $0x24] sm:$0xf]
    %v3628 = vld [vmem:[%s3617 + $0x28] sm:$0xf]
    %v3629 = vld [vmem:[%s3617 + $0x2c] sm:$0xf]
    %v3630 = vld [vmem:[%s3617 + $0x30] sm:$0xf]
    %v3631 = vld [vmem:[%s3617 + $0x34] sm:$0xf]
    %v3632 = vld [vmem:[%s3617 + $0x38] sm:$0xf]
    %v3633 = vld [vmem:[%s3617 + $0x3c] sm:$0xf]
    %v3650 = vunpack.c.l.b16 %v3618
    %v3651 = vunpack.c.l.b16 %v3619
    %v3652 = vunpack.c.l.b16 %v3620
    %v3653 = vunpack.c.l.b16 %v3621
    %v3654 = vunpack.c.l.b16 %v3622
    %v3655 = vunpack.c.l.b16 %v3623
    %v3656 = vunpack.c.l.b16 %v3624
    %v3657 = vunpack.c.l.b16 %v3625
    %v3658 = vunpack.c.l.b16 %v3626
    %v3659 = vunpack.c.l.b16 %v3627
    %v3660 = vunpack.c.l.b16 %v3628
    %v3661 = vunpack.c.l.b16 %v3629
    %v3662 = vunpack.c.l.b16 %v3630
    %v3663 = vunpack.c.l.b16 %v3631
    %v3664 = vunpack.c.l.b16 %v3632
    %v3665 = vunpack.c.l.b16 %v3633
    %v3666 = vpack.c.b16 %v3651, %v3650
    %v3667 = vpack.c.b16 %v3653, %v3652
    %v3668 = vpack.c.b16 %v3655, %v3654
    %v3669 = vpack.c.b16 %v3657, %v3656
    %v3670 = vpack.c.b16 %v3659, %v3658
    %v3671 = vpack.c.b16 %v3661, %v3660
    %v3672 = vpack.c.b16 %v3663, %v3662
    %v3673 = vpack.c.b16 %v3665, %v3664
    %3682 = vmatprep.subr.bf16.mxu0 0
    %3683 = vmatpush1.bf16.msra.mxu0 %v3666
    %3684 = vmatprep.subr.bf16.mxu0 0
    %3685 = vmatpush1.bf16.msra.mxu0 %v3667
    %3686 = vmatprep.subr.bf16.mxu0 0
    %3687 = vmatpush1.bf16.msra.mxu0 %v3668
    %3688 = vmatprep.subr.bf16.mxu0 0
    %3689 = vmatpush1.bf16.msra.mxu0 %v3669
    %3690 = vmatprep.subr.bf16.mxu0 0
    %3691 = vmatpush1.bf16.msra.mxu0 %v3670
    %3692 = vmatprep.subr.bf16.mxu0 0
    %3693 = vmatpush1.bf16.msra.mxu0 %v3671
    %3694 = vmatprep.subr.bf16.mxu0 0
    %3695 = vmatpush1.bf16.msra.mxu0 %v3672
    %3696 = vmatprep.subr.bf16.mxu0 0
    %3697 = vmatpush1.bf16.msra.mxu0 %v3673
    %3698 = vmatprep.subr.bf16.mxu0 0
    %3699 = vmatpush1.bf16.msra.mxu0 0
    %3700 = vmatprep.subr.bf16.mxu0 0
    %3701 = vmatpush1.bf16.msra.mxu0 0
    %3702 = vmatprep.subr.bf16.mxu0 0
    %3703 = vmatpush1.bf16.msra.mxu0 0
    %3704 = vmatprep.subr.bf16.mxu0 0
    %3705 = vmatpush1.bf16.msra.mxu0 0
    %3706 = vmatprep.subr.bf16.mxu0 0
    %3707 = vmatpush1.bf16.msra.mxu0 0
    %3708 = vmatprep.subr.bf16.mxu0 0
    %3709 = vmatpush1.bf16.msra.mxu0 0
    %3710 = vmatprep.subr.bf16.mxu0 0
    %3711 = vmatpush1.bf16.msra.mxu0 0
    %3712 = vmatprep.subr.bf16.mxu0 0
    %3713 = vmatpush1.bf16.msra.mxu0 0
    %3714 = vmatprep.mubr.bf16.mxu0 0
    %3715 = vmatmul.mubr.bf16.gmra.mrb[0].mxu0 %v3615
    %v3716 = vpop.f32.mrb[0].mxu0
    %v3717 = vadd.f32 0.0, %v3716
    %v3718 = vpop.f32.mrb[0].mxu0
    %v3719 = vpop.f32.mrb[0].mxu0
    %v3720 = vadd.f32 0.0, %v3719
    %v3721 = vpop.f32.mrb[0].mxu0
    %3722 = vmatprep.mubr.bf16.mxu0 0
    %3723 = vmatmul.mubr.bf16.gmra.mrb[0].mxu0 %v3616
    %v3724 = vpop.f32.mrb[0].mxu0
    %v3725 = vadd.f32 0.0, %v3724
    %v3726 = vpop.f32.mrb[0].mxu0
    %v3727 = vpop.f32.mrb[0].mxu0
    %v3728 = vadd.f32 0.0, %v3727
    %v3729 = vpop.f32.mrb[0].mxu0
    %3730 = vdwg.mxu0
    %v3731 = vadd.f32 %v2466, %v3717
    %v3732 = vadd.f32 %v2467, %v3720
    %v3733 = vadd.f32 %v2468, %v3725
    %v3734 = vadd.f32 %v2469, %v3728
    %s3735 = scalar_lea.vmem [#allocation10], 1
    %v3736 = vld [vmem:[%s3735] sm:$0x1]
    %v3738 = vlaneseq
    %v3739 = vshrl.u32 %v3738, 7
    %v3740 = vsub.s32 0, %v3739
    %v3741 = vrot.slane %v3736, %v3740
    %v3743 = vadd.f32 %v3731, %v3741
    %v3744 = vadd.f32 %v3732, %v3741
    %v3745 = vadd.f32 %v3733, %v3741
    %v3746 = vadd.f32 %v3734, %v3741
    %s3747 = scalar_lea.vmem [#allocation11], 1
    %v3748 = vld [vmem:[%s3747] sm:$0x1]
    %s3749 = scalar_lea.vmem [#allocation13], 1
    %v3750 = vld [vmem:[%s3749] sm:$0x1]
    %3751 = vadd.xlane.f32.xlu0 %v3743
    %v3752 = vpop.xlane.xlu0 %3751
    %3753 = vadd.xlane.f32.xlu0 %v3744
    %v3754 = vpop.xlane.xlu0 %3753
    %3755 = vadd.xlane.f32.xlu0 %v3745
    %v3756 = vpop.xlane.xlu0 %3755
    %3757 = vadd.xlane.f32.xlu0 %v3746
    %v3758 = vpop.xlane.xlu0 %3757
    %v3759 = vmul.f32 %v3752, %v296
    %v3760 = vmul.f32 %v3754, %v296
    %v3761 = vmul.f32 %v3756, %v296
    %v3762 = vmul.f32 %v3758, %v296
    %v3763 = vsub.f32 %v3743, %v3759
    %v3764 = vsub.f32 %v3744, %v3760
    %v3765 = vsub.f32 %v3745, %v3761
    %v3766 = vsub.f32 %v3746, %v3762
    %v3767 = vmul.f32 %v3763, %v3763
    %v3768 = vmul.f32 %v3764, %v3764
    %v3769 = vmul.f32 %v3765, %v3765
    %v3770 = vmul.f32 %v3766, %v3766
    %3771 = vadd.xlane.f32.xlu0 %v3767
    %v3772 = vpop.xlane.xlu0 %3771
    %3773 = vadd.xlane.f32.xlu0 %v3768
    %v3774 = vpop.xlane.xlu0 %3773
    %3775 = vadd.xlane.f32.xlu0 %v3769
    %v3776 = vpop.xlane.xlu0 %3775
    %3777 = vadd.xlane.f32.xlu0 %v3770
    %v3778 = vpop.xlane.xlu0 %3777
    %v3779 = vmul.f32 %v3772, %v296
    %v3780 = vmul.f32 %v3774, %v296
    %v3781 = vmul.f32 %v3776, %v296
    %v3782 = vmul.f32 %v3778, %v296
    %v3783 = vadd.f32 %v3779, 1e-05
    %v3784 = vadd.f32 %v3780, 1e-05
    %v3785 = vadd.f32 %v3781, 1e-05
    %v3786 = vadd.f32 %v3782, 1e-05
    %v3787 = vrsqrt.pop %v3783
    %v3788 = vrsqrt.pop %v3784
    %v3789 = vrsqrt.pop %v3785
    %v3790 = vrsqrt.pop %v3786
    %v3791 = vmul.f32 %v3763, %v3787
    %v3792 = vmul.f32 %v3764, %v3788
    %v3793 = vmul.f32 %v3765, %v3789
    %v3794 = vmul.f32 %v3766, %v3790
    %v3796 = vlaneseq
    %v3797 = vshrl.u32 %v3796, 7
    %v3798 = vsub.s32 0, %v3797
    %v3799 = vrot.slane %v3748, %v3798
    %v3801 = vmul.f32 %v3791, %v3799
    %v3802 = vmul.f32 %v3792, %v3799
    %v3803 = vmul.f32 %v3793, %v3799
    %v3804 = vmul.f32 %v3794, %v3799
    %v3806 = vlaneseq
    %v3807 = vshrl.u32 %v3806, 7
    %v3808 = vsub.s32 0, %v3807
    %v3809 = vrot.slane %v3750, %v3808
    %v3811 = vadd.f32 %v3801, %v3809
    %v3812 = vadd.f32 %v3802, %v3809
    %v3813 = vadd.f32 %v3803, %v3809
    %v3814 = vadd.f32 %v3804, %v3809
    %v3815 = vpack.c.bf16 %v3812, %v3811
    %v3816 = vpack.c.bf16 %v3814, %v3813
    %s3817 = scalar_lea.vmem [#allocation14], 256
    %v3818 = vld [vmem:[%s3817] sm:$0xff]
    %v3819 = vld [vmem:[%s3817 + $0x8] sm:$0xff]
    %v3820 = vld [vmem:[%s3817 + $0x10] sm:$0xff]
    %v3821 = vld [vmem:[%s3817 + $0x18] sm:$0xff]
    %v3822 = vld [vmem:[%s3817 + $0x20] sm:$0xff]
    %v3823 = vld [vmem:[%s3817 + $0x28] sm:$0xff]
    %v3824 = vld [vmem:[%s3817 + $0x30] sm:$0xff]
    %v3825 = vld [vmem:[%s3817 + $0x38] sm:$0xff]
    %v3826 = vld [vmem:[%s3817 + $0x40] sm:$0xff]
    %v3827 = vld [vmem:[%s3817 + $0x48] sm:$0xff]
    %v3828 = vld [vmem:[%s3817 + $0x50] sm:$0xff]
    %v3829 = vld [vmem:[%s3817 + $0x58] sm:$0xff]
    %v3830 = vld [vmem:[%s3817 + $0x60] sm:$0xff]
    %v3831 = vld [vmem:[%s3817 + $0x68] sm:$0xff]
    %v3832 = vld [vmem:[%s3817 + $0x70] sm:$0xff]
    %v3833 = vld [vmem:[%s3817 + $0x78] sm:$0xff]
    %v3834 = vld [vmem:[%s3817 + $0x80] sm:$0xff]
    %v3835 = vld [vmem:[%s3817 + $0x88] sm:$0xff]
    %v3836 = vld [vmem:[%s3817 + $0x90] sm:$0xff]
    %v3837 = vld [vmem:[%s3817 + $0x98] sm:$0xff]
    %v3838 = vld [vmem:[%s3817 + $0xa0] sm:$0xff]
    %v3839 = vld [vmem:[%s3817 + $0xa8] sm:$0xff]
    %v3840 = vld [vmem:[%s3817 + $0xb0] sm:$0xff]
    %v3841 = vld [vmem:[%s3817 + $0xb8] sm:$0xff]
    %v3842 = vld [vmem:[%s3817 + $0xc0] sm:$0xff]
    %v3843 = vld [vmem:[%s3817 + $0xc8] sm:$0xff]
    %v3844 = vld [vmem:[%s3817 + $0xd0] sm:$0xff]
    %v3845 = vld [vmem:[%s3817 + $0xd8] sm:$0xff]
    %v3846 = vld [vmem:[%s3817 + $0xe0] sm:$0xff]
    %v3847 = vld [vmem:[%s3817 + $0xe8] sm:$0xff]
    %v3848 = vld [vmem:[%s3817 + $0xf0] sm:$0xff]
    %v3849 = vld [vmem:[%s3817 + $0xf8] sm:$0xff]
    %s3850 = scalar_lea.vmem [#allocation16], 4
    %v3851 = vld [vmem:[%s3850] sm:$0xf]
    %v3853 = vlaneseq
    %v3854 = vshrl.u32 %v3853, 7
    %v3855 = vsub.s32 0, %v3854
    %v3856 = vrot.slane %v3851, %v3855
    %v3857 = vlaneseq
    %v3858 = vshrl.u32 %v3857, 7
    %v3859 = vsub.s32 1, %v3858
    %v3860 = vrot.slane %v3851, %v3859
    %v3861 = vlaneseq
    %v3862 = vshrl.u32 %v3861, 7
    %v3863 = vsub.s32 2, %v3862
    %v3864 = vrot.slane %v3851, %v3863
    %v3865 = vlaneseq
    %v3866 = vshrl.u32 %v3865, 7
    %v3867 = vsub.s32 3, %v3866
    %v3868 = vrot.slane %v3851, %v3867
    %v3905 = vunpack.c.l.b16 %v3818
    %v3906 = vunpack.c.h.b16 %v3818
    %v3907 = vunpack.c.l.b16 %v3819
    %v3908 = vunpack.c.h.b16 %v3819
    %v3909 = vunpack.c.l.b16 %v3820
    %v3910 = vunpack.c.h.b16 %v3820
    %v3911 = vunpack.c.l.b16 %v3821
    %v3912 = vunpack.c.h.b16 %v3821
    %v3913 = vunpack.c.l.b16 %v3822
    %v3914 = vunpack.c.h.b16 %v3822
    %v3915 = vunpack.c.l.b16 %v3823
    %v3916 = vunpack.c.h.b16 %v3823
    %v3917 = vunpack.c.l.b16 %v3824
    %v3918 = vunpack.c.h.b16 %v3824
    %v3919 = vunpack.c.l.b16 %v3825
    %v3920 = vunpack.c.h.b16 %v3825
    %v3921 = vunpack.c.l.b16 %v3826
    %v3922 = vunpack.c.h.b16 %v3826
    %v3923 = vunpack.c.l.b16 %v3827
    %v3924 = vunpack.c.h.b16 %v3827
    %v3925 = vunpack.c.l.b16 %v3828
    %v3926 = vunpack.c.h.b16 %v3828
    %v3927 = vunpack.c.l.b16 %v3829
    %v3928 = vunpack.c.h.b16 %v3829
    %v3929 = vunpack.c.l.b16 %v3830
    %v3930 = vunpack.c.h.b16 %v3830
    %v3931 = vunpack.c.l.b16 %v3831
    %v3932 = vunpack.c.h.b16 %v3831
    %v3933 = vunpack.c.l.b16 %v3832
    %v3934 = vunpack.c.h.b16 %v3832
    %v3935 = vunpack.c.l.b16 %v3833
    %v3936 = vunpack.c.h.b16 %v3833
    %v3937 = vunpack.c.l.b16 %v3834
    %v3938 = vunpack.c.h.b16 %v3834
    %v3939 = vunpack.c.l.b16 %v3835
    %v3940 = vunpack.c.h.b16 %v3835
    %v3941 = vunpack.c.l.b16 %v3836
    %v3942 = vunpack.c.h.b16 %v3836
    %v3943 = vunpack.c.l.b16 %v3837
    %v3944 = vunpack.c.h.b16 %v3837
    %v3945 = vunpack.c.l.b16 %v3838
    %v3946 = vunpack.c.h.b16 %v3838
    %v3947 = vunpack.c.l.b16 %v3839
    %v3948 = vunpack.c.h.b16 %v3839
    %v3949 = vunpack.c.l.b16 %v3840
    %v3950 = vunpack.c.h.b16 %v3840
    %v3951 = vunpack.c.l.b16 %v3841
    %v3952 = vunpack.c.h.b16 %v3841
    %v3953 = vunpack.c.l.b16 %v3842
    %v3954 = vunpack.c.h.b16 %v3842
    %v3955 = vunpack.c.l.b16 %v3843
    %v3956 = vunpack.c.h.b16 %v3843
    %v3957 = vunpack.c.l.b16 %v3844
    %v3958 = vunpack.c.h.b16 %v3844
    %v3959 = vunpack.c.l.b16 %v3845
    %v3960 = vunpack.c.h.b16 %v3845
    %v3961 = vunpack.c.l.b16 %v3846
    %v3962 = vunpack.c.h.b16 %v3846
    %v3963 = vunpack.c.l.b16 %v3847
    %v3964 = vunpack.c.h.b16 %v3847
    %v3965 = vunpack.c.l.b16 %v3848
    %v3966 = vunpack.c.h.b16 %v3848
    %v3967 = vunpack.c.l.b16 %v3849
    %v3968 = vunpack.c.h.b16 %v3849
    %v3969 = vpack.c.b16 %v3909, %v3905
    %v3970 = vpack.c.b16 %v3910, %v3906
    %v3971 = vpack.c.b16 %v3911, %v3907
    %v3972 = vpack.c.b16 %v3912, %v3908
    %v3973 = vpack.c.b16 %v3917, %v3913
    %v3974 = vpack.c.b16 %v3918, %v3914
    %v3975 = vpack.c.b16 %v3919, %v3915
    %v3976 = vpack.c.b16 %v3920, %v3916
    %v3977 = vpack.c.b16 %v3925, %v3921
    %v3978 = vpack.c.b16 %v3926, %v3922
    %v3979 = vpack.c.b16 %v3927, %v3923
    %v3980 = vpack.c.b16 %v3928, %v3924
    %v3981 = vpack.c.b16 %v3933, %v3929
    %v3982 = vpack.c.b16 %v3934, %v3930
    %v3983 = vpack.c.b16 %v3935, %v3931
    %v3984 = vpack.c.b16 %v3936, %v3932
    %v3985 = vpack.c.b16 %v3941, %v3937
    %v3986 = vpack.c.b16 %v3942, %v3938
    %v3987 = vpack.c.b16 %v3943, %v3939
    %v3988 = vpack.c.b16 %v3944, %v3940
    %v3989 = vpack.c.b16 %v3949, %v3945
    %v3990 = vpack.c.b16 %v3950, %v3946
    %v3991 = vpack.c.b16 %v3951, %v3947
    %v3992 = vpack.c.b16 %v3952, %v3948
    %v3993 = vpack.c.b16 %v3957, %v3953
    %v3994 = vpack.c.b16 %v3958, %v3954
    %v3995 = vpack.c.b16 %v3959, %v3955
    %v3996 = vpack.c.b16 %v3960, %v3956
    %v3997 = vpack.c.b16 %v3965, %v3961
    %v3998 = vpack.c.b16 %v3966, %v3962
    %v3999 = vpack.c.b16 %v3967, %v3963
    %v4000 = vpack.c.b16 %v3968, %v3964
    %4033 = vmatprep.subr.bf16.mxu0 %v3970
    %4034 = vmatpush1.bf16.msra.mxu0 %v3969
    %4035 = vmatprep.subr.bf16.mxu0 %v3974
    %4036 = vmatpush1.bf16.msra.mxu0 %v3973
    %4037 = vmatprep.subr.bf16.mxu0 %v3978
    %4038 = vmatpush1.bf16.msra.mxu0 %v3977
    %4039 = vmatprep.subr.bf16.mxu0 %v3982
    %4040 = vmatpush1.bf16.msra.mxu0 %v3981
    %4041 = vmatprep.subr.bf16.mxu0 %v3986
    %4042 = vmatpush1.bf16.msra.mxu0 %v3985
    %4043 = vmatprep.subr.bf16.mxu0 %v3990
    %4044 = vmatpush1.bf16.msra.mxu0 %v3989
    %4045 = vmatprep.subr.bf16.mxu0 %v3994
    %4046 = vmatpush1.bf16.msra.mxu0 %v3993
    %4047 = vmatprep.subr.bf16.mxu0 %v3998
    %4048 = vmatpush1.bf16.msra.mxu0 %v3997
    %4049 = vmatprep.subr.bf16.mxu0 0
    %4050 = vmatpush1.bf16.msra.mxu0 0
    %4051 = vmatprep.subr.bf16.mxu0 0
    %4052 = vmatpush1.bf16.msra.mxu0 0
    %4053 = vmatprep.subr.bf16.mxu0 0
    %4054 = vmatpush1.bf16.msra.mxu0 0
    %4055 = vmatprep.subr.bf16.mxu0 0
    %4056 = vmatpush1.bf16.msra.mxu0 0
    %4057 = vmatprep.subr.bf16.mxu0 0
    %4058 = vmatpush1.bf16.msra.mxu0 0
    %4059 = vmatprep.subr.bf16.mxu0 0
    %4060 = vmatpush1.bf16.msra.mxu0 0
    %4061 = vmatprep.subr.bf16.mxu0 0
    %4062 = vmatpush1.bf16.msra.mxu0 0
    %4063 = vmatprep.subr.bf16.mxu0 0
    %4064 = vmatpush1.bf16.msra.mxu0 0
    %4065 = vmatprep.mubr.bf16.mxu0 0
    %4066 = vmatmul.mubr.bf16.gmra.mrb[0].mxu0 %v3815
    %v4067 = vpop.f32.mrb[0].mxu0
    %v4068 = vadd.f32 %v3856, %v4067
    %v4069 = vpop.f32.mrb[0].mxu0
    %v4070 = vadd.f32 %v3860, %v4069
    %v4071 = vpop.f32.mrb[0].mxu0
    %v4072 = vadd.f32 %v3856, %v4071
    %v4073 = vpop.f32.mrb[0].mxu0
    %v4074 = vadd.f32 %v3860, %v4073
    %4075 = vmatprep.mubr.bf16.mxu0 0
    %4076 = vmatmul.mubr.bf16.gmra.mrb[0].mxu0 %v3816
    %v4077 = vpop.f32.mrb[0].mxu0
    %v4078 = vadd.f32 %v3856, %v4077
    %v4079 = vpop.f32.mrb[0].mxu0
    %v4080 = vadd.f32 %v3860, %v4079
    %v4081 = vpop.f32.mrb[0].mxu0
    %v4082 = vadd.f32 %v3856, %v4081
    %v4083 = vpop.f32.mrb[0].mxu0
    %v4084 = vadd.f32 %v3860, %v4083
    %4085 = vdwg.mxu0
    %4086 = vmatprep.subr.bf16.mxu0 %v3972
    %4087 = vmatpush1.bf16.msra.mxu0 %v3971
    %4088 = vmatprep.subr.bf16.mxu0 %v3976
    %4089 = vmatpush1.bf16.msra.mxu0 %v3975
    %4090 = vmatprep.subr.bf16.mxu0 %v3980
    %4091 = vmatpush1.bf16.msra.mxu0 %v3979
    %4092 = vmatprep.subr.bf16.mxu0 %v3984
    %4093 = vmatpush1.bf16.msra.mxu0 %v3983
    %4094 = vmatprep.subr.bf16.mxu0 %v3988
    %4095 = vmatpush1.bf16.msra.mxu0 %v3987
    %4096 = vmatprep.subr.bf16.mxu0 %v3992
    %4097 = vmatpush1.bf16.msra.mxu0 %v3991
    %4098 = vmatprep.subr.bf16.mxu0 %v3996
    %4099 = vmatpush1.bf16.msra.mxu0 %v3995
    %4100 = vmatprep.subr.bf16.mxu0 %v4000
    %4101 = vmatpush1.bf16.msra.mxu0 %v3999
    %4102 = vmatprep.subr.bf16.mxu0 0
    %4103 = vmatpush1.bf16.msra.mxu0 0
    %4104 = vmatprep.subr.bf16.mxu0 0
    %4105 = vmatpush1.bf16.msra.mxu0 0
    %4106 = vmatprep.subr.bf16.mxu0 0
    %4107 = vmatpush1.bf16.msra.mxu0 0
    %4108 = vmatprep.subr.bf16.mxu0 0
    %4109 = vmatpush1.bf16.msra.mxu0 0
    %4110 = vmatprep.subr.bf16.mxu0 0
    %4111 = vmatpush1.bf16.msra.mxu0 0
    %4112 = vmatprep.subr.bf16.mxu0 0
    %4113 = vmatpush1.bf16.msra.mxu0 0
    %4114 = vmatprep.subr.bf16.mxu0 0
    %4115 = vmatpush1.bf16.msra.mxu0 0
    %4116 = vmatprep.subr.bf16.mxu0 0
    %4117 = vmatpush1.bf16.msra.mxu0 0
    %4118 = vmatprep.mubr.bf16.mxu0 0
    %4119 = vmatmul.mubr.bf16.gmra.mrb[0].mxu0 %v3815
    %v4120 = vpop.f32.mrb[0].mxu0
    %v4121 = vadd.f32 %v3864, %v4120
    %v4122 = vpop.f32.mrb[0].mxu0
    %v4123 = vadd.f32 %v3868, %v4122
    %v4124 = vpop.f32.mrb[0].mxu0
    %v4125 = vadd.f32 %v3864, %v4124
    %v4126 = vpop.f32.mrb[0].mxu0
    %v4127 = vadd.f32 %v3868, %v4126
    %4128 = vmatprep.mubr.bf16.mxu0 0
    %4129 = vmatmul.mubr.bf16.gmra.mrb[0].mxu0 %v3816
    %v4130 = vpop.f32.mrb[0].mxu0
    %v4131 = vadd.f32 %v3864, %v4130
    %v4132 = vpop.f32.mrb[0].mxu0
    %v4133 = vadd.f32 %v3868, %v4132
    %v4134 = vpop.f32.mrb[0].mxu0
    %v4135 = vadd.f32 %v3864, %v4134
    %v4136 = vpop.f32.mrb[0].mxu0
    %v4137 = vadd.f32 %v3868, %v4136
    %4138 = vdwg.mxu0
    %v4139 = vmul.f32 %v4068, 0.5
    %v4140 = vmul.f32 %v4070, 0.5
    %v4141 = vmul.f32 %v4121, 0.5
    %v4142 = vmul.f32 %v4123, 0.5
    %v4143 = vmul.f32 %v4072, 0.5
    %v4144 = vmul.f32 %v4074, 0.5
    %v4145 = vmul.f32 %v4125, 0.5
    %v4146 = vmul.f32 %v4127, 0.5
    %v4147 = vmul.f32 %v4078, 0.5
    %v4148 = vmul.f32 %v4080, 0.5
    %v4149 = vmul.f32 %v4131, 0.5
    %v4150 = vmul.f32 %v4133, 0.5
    %v4151 = vmul.f32 %v4082, 0.5
    %v4152 = vmul.f32 %v4084, 0.5
    %v4153 = vmul.f32 %v4135, 0.5
    %v4154 = vmul.f32 %v4137, 0.5
    %v4155 = vmul.f32 %v4068, 0.044715
    %v4156 = vmul.f32 %v4070, 0.044715
    %v4157 = vmul.f32 %v4121, 0.044715
    %v4158 = vmul.f32 %v4123, 0.044715
    %v4159 = vmul.f32 %v4072, 0.044715
    %v4160 = vmul.f32 %v4074, 0.044715
    %v4161 = vmul.f32 %v4125, 0.044715
    %v4162 = vmul.f32 %v4127, 0.044715
    %v4163 = vmul.f32 %v4078, 0.044715
    %v4164 = vmul.f32 %v4080, 0.044715
    %v4165 = vmul.f32 %v4131, 0.044715
    %v4166 = vmul.f32 %v4133, 0.044715
    %v4167 = vmul.f32 %v4082, 0.044715
    %v4168 = vmul.f32 %v4084, 0.044715
    %v4169 = vmul.f32 %v4135, 0.044715
    %v4170 = vmul.f32 %v4137, 0.044715
    %v4171 = vmul.f32 %v4155, %v4068
    %v4172 = vmul.f32 %v4156, %v4070
    %v4173 = vmul.f32 %v4157, %v4121
    %v4174 = vmul.f32 %v4158, %v4123
    %v4175 = vmul.f32 %v4159, %v4072
    %v4176 = vmul.f32 %v4160, %v4074
    %v4177 = vmul.f32 %v4161, %v4125
    %v4178 = vmul.f32 %v4162, %v4127
    %v4179 = vmul.f32 %v4163, %v4078
    %v4180 = vmul.f32 %v4164, %v4080
    %v4181 = vmul.f32 %v4165, %v4131
    %v4182 = vmul.f32 %v4166, %v4133
    %v4183 = vmul.f32 %v4167, %v4082
    %v4184 = vmul.f32 %v4168, %v4084
    %v4185 = vmul.f32 %v4169, %v4135
    %v4186 = vmul.f32 %v4170, %v4137
    %v4187 = vmul.f32 %v4171, %v4068
    %v4188 = vmul.f32 %v4172, %v4070
    %v4189 = vmul.f32 %v4173, %v4121
    %v4190 = vmul.f32 %v4174, %v4123
    %v4191 = vmul.f32 %v4175, %v4072
    %v4192 = vmul.f32 %v4176, %v4074
    %v4193 = vmul.f32 %v4177, %v4125
    %v4194 = vmul.f32 %v4178, %v4127
    %v4195 = vmul.f32 %v4179, %v4078
    %v4196 = vmul.f32 %v4180, %v4080
    %v4197 = vmul.f32 %v4181, %v4131
    %v4198 = vmul.f32 %v4182, %v4133
    %v4199 = vmul.f32 %v4183, %v4082
    %v4200 = vmul.f32 %v4184, %v4084
    %v4201 = vmul.f32 %v4185, %v4135
    %v4202 = vmul.f32 %v4186, %v4137
    %v4203 = vadd.f32 %v4068, %v4187
    %v4204 = vadd.f32 %v4070, %v4188
    %v4205 = vadd.f32 %v4121, %v4189
    %v4206 = vadd.f32 %v4123, %v4190
    %v4207 = vadd.f32 %v4072, %v4191
    %v4208 = vadd.f32 %v4074, %v4192
    %v4209 = vadd.f32 %v4125, %v4193
    %v4210 = vadd.f32 %v4127, %v4194
    %v4211 = vadd.f32 %v4078, %v4195
    %v4212 = vadd.f32 %v4080, %v4196
    %v4213 = vadd.f32 %v4131, %v4197
    %v4214 = vadd.f32 %v4133, %v4198
    %v4215 = vadd.f32 %v4082, %v4199
    %v4216 = vadd.f32 %v4084, %v4200
    %v4217 = vadd.f32 %v4135, %v4201
    %v4218 = vadd.f32 %v4137, %v4202
    %v4219 = vmul.f32 %v4203, 0.7978846
    %v4220 = vmul.f32 %v4204, 0.7978846
    %v4221 = vmul.f32 %v4205, 0.7978846
    %v4222 = vmul.f32 %v4206, 0.7978846
    %v4223 = vmul.f32 %v4207, 0.7978846
    %v4224 = vmul.f32 %v4208, 0.7978846
    %v4225 = vmul.f32 %v4209, 0.7978846
    %v4226 = vmul.f32 %v4210, 0.7978846
    %v4227 = vmul.f32 %v4211, 0.7978846
    %v4228 = vmul.f32 %v4212, 0.7978846
    %v4229 = vmul.f32 %v4213, 0.7978846
    %v4230 = vmul.f32 %v4214, 0.7978846
    %v4231 = vmul.f32 %v4215, 0.7978846
    %v4232 = vmul.f32 %v4216, 0.7978846
    %v4233 = vmul.f32 %v4217, 0.7978846
    %v4234 = vmul.f32 %v4218, 0.7978846
    %v4235 = vtanh.pop %v4219
    %v4236 = vtanh.pop %v4220
    %v4237 = vtanh.pop %v4221
    %v4238 = vtanh.pop %v4222
    %v4239 = vtanh.pop %v4223
    %v4240 = vtanh.pop %v4224
    %v4241 = vtanh.pop %v4225
    %v4242 = vtanh.pop %v4226
    %v4243 = vtanh.pop %v4227
    %v4244 = vtanh.pop %v4228
    %v4245 = vtanh.pop %v4229
    %v4246 = vtanh.pop %v4230
    %v4247 = vtanh.pop %v4231
    %v4248 = vtanh.pop %v4232
    %v4249 = vtanh.pop %v4233
    %v4250 = vtanh.pop %v4234
    %v4251 = vadd.f32 %v4235, 1.0
    %v4252 = vadd.f32 %v4236, 1.0
    %v4253 = vadd.f32 %v4237, 1.0
    %v4254 = vadd.f32 %v4238, 1.0
    %v4255 = vadd.f32 %v4239, 1.0
    %v4256 = vadd.f32 %v4240, 1.0
    %v4257 = vadd.f32 %v4241, 1.0
    %v4258 = vadd.f32 %v4242, 1.0
    %v4259 = vadd.f32 %v4243, 1.0
    %v4260 = vadd.f32 %v4244, 1.0
    %v4261 = vadd.f32 %v4245, 1.0
    %v4262 = vadd.f32 %v4246, 1.0
    %v4263 = vadd.f32 %v4247, 1.0
    %v4264 = vadd.f32 %v4248, 1.0
    %v4265 = vadd.f32 %v4249, 1.0
    %v4266 = vadd.f32 %v4250, 1.0
    %v4267 = vmul.f32 %v4139, %v4251
    %v4268 = vmul.f32 %v4140, %v4252
    %v4269 = vmul.f32 %v4141, %v4253
    %v4270 = vmul.f32 %v4142, %v4254
    %v4271 = vmul.f32 %v4143, %v4255
    %v4272 = vmul.f32 %v4144, %v4256
    %v4273 = vmul.f32 %v4145, %v4257
    %v4274 = vmul.f32 %v4146, %v4258
    %v4275 = vmul.f32 %v4147, %v4259
    %v4276 = vmul.f32 %v4148, %v4260
    %v4277 = vmul.f32 %v4149, %v4261
    %v4278 = vmul.f32 %v4150, %v4262
    %v4279 = vmul.f32 %v4151, %v4263
    %v4280 = vmul.f32 %v4152, %v4264
    %v4281 = vmul.f32 %v4153, %v4265
    %v4282 = vmul.f32 %v4154, %v4266
    %v4283 = vpack.c.bf16 %v4271, %v4267
    %v4284 = vpack.c.bf16 %v4272, %v4268
    %v4285 = vpack.c.bf16 %v4273, %v4269
    %v4286 = vpack.c.bf16 %v4274, %v4270
    %v4287 = vpack.c.bf16 %v4279, %v4275
    %v4288 = vpack.c.bf16 %v4280, %v4276
    %v4289 = vpack.c.bf16 %v4281, %v4277
    %v4290 = vpack.c.bf16 %v4282, %v4278
    %s4291 = scalar_lea.vmem [#allocation17], 256
    %v4292 = vld [vmem:[%s4291] sm:$0xf]
    %v4293 = vld [vmem:[%s4291 + $0x4] sm:$0xf]
    %v4294 = vld [vmem:[%s4291 + $0x8] sm:$0xf]
    %v4295 = vld [vmem:[%s4291 + $0xc] sm:$0xf]
    %v4296 = vld [vmem:[%s4291 + $0x10] sm:$0xf]
    %v4297 = vld [vmem:[%s4291 + $0x14] sm:$0xf]
    %v4298 = vld [vmem:[%s4291 + $0x18] sm:$0xf]
    %v4299 = vld [vmem:[%s4291 + $0x1c] sm:$0xf]
    %v4300 = vld [vmem:[%s4291 + $0x20] sm:$0xf]
    %v4301 = vld [vmem:[%s4291 + $0x24] sm:$0xf]
    %v4302 = vld [vmem:[%s4291 + $0x28] sm:$0xf]
    %v4303 = vld [vmem:[%s4291 + $0x2c] sm:$0xf]
    %v4304 = vld [vmem:[%s4291 + $0x30] sm:$0xf]
    %v4305 = vld [vmem:[%s4291 + $0x34] sm:$0xf]
    %v4306 = vld [vmem:[%s4291 + $0x38] sm:$0xf]
    %v4307 = vld [vmem:[%s4291 + $0x3c] sm:$0xf]
    %v4308 = vld [vmem:[%s4291 + $0x40] sm:$0xf]
    %v4309 = vld [vmem:[%s4291 + $0x44] sm:$0xf]
    %v4310 = vld [vmem:[%s4291 + $0x48] sm:$0xf]
    %v4311 = vld [vmem:[%s4291 + $0x4c] sm:$0xf]
    %v4312 = vld [vmem:[%s4291 + $0x50] sm:$0xf]
    %v4313 = vld [vmem:[%s4291 + $0x54] sm:$0xf]
    %v4314 = vld [vmem:[%s4291 + $0x58] sm:$0xf]
    %v4315 = vld [vmem:[%s4291 + $0x5c] sm:$0xf]
    %v4316 = vld [vmem:[%s4291 + $0x60] sm:$0xf]
    %v4317 = vld [vmem:[%s4291 + $0x64] sm:$0xf]
    %v4318 = vld [vmem:[%s4291 + $0x68] sm:$0xf]
    %v4319 = vld [vmem:[%s4291 + $0x6c] sm:$0xf]
    %v4320 = vld [vmem:[%s4291 + $0x70] sm:$0xf]
    %v4321 = vld [vmem:[%s4291 + $0x74] sm:$0xf]
    %v4322 = vld [vmem:[%s4291 + $0x78] sm:$0xf]
    %v4323 = vld [vmem:[%s4291 + $0x7c] sm:$0xf]
    %v4324 = vld [vmem:[%s4291 + $0x80] sm:$0xf]
    %v4325 = vld [vmem:[%s4291 + $0x84] sm:$0xf]
    %v4326 = vld [vmem:[%s4291 + $0x88] sm:$0xf]
    %v4327 = vld [vmem:[%s4291 + $0x8c] sm:$0xf]
    %v4328 = vld [vmem:[%s4291 + $0x90] sm:$0xf]
    %v4329 = vld [vmem:[%s4291 + $0x94] sm:$0xf]
    %v4330 = vld [vmem:[%s4291 + $0x98] sm:$0xf]
    %v4331 = vld [vmem:[%s4291 + $0x9c] sm:$0xf]
    %v4332 = vld [vmem:[%s4291 + $0xa0] sm:$0xf]
    %v4333 = vld [vmem:[%s4291 + $0xa4] sm:$0xf]
    %v4334 = vld [vmem:[%s4291 + $0xa8] sm:$0xf]
    %v4335 = vld [vmem:[%s4291 + $0xac] sm:$0xf]
    %v4336 = vld [vmem:[%s4291 + $0xb0] sm:$0xf]
    %v4337 = vld [vmem:[%s4291 + $0xb4] sm:$0xf]
    %v4338 = vld [vmem:[%s4291 + $0xb8] sm:$0xf]
    %v4339 = vld [vmem:[%s4291 + $0xbc] sm:$0xf]
    %v4340 = vld [vmem:[%s4291 + $0xc0] sm:$0xf]
    %v4341 = vld [vmem:[%s4291 + $0xc4] sm:$0xf]
    %v4342 = vld [vmem:[%s4291 + $0xc8] sm:$0xf]
    %v4343 = vld [vmem:[%s4291 + $0xcc] sm:$0xf]
    %v4344 = vld [vmem:[%s4291 + $0xd0] sm:$0xf]
    %v4345 = vld [vmem:[%s4291 + $0xd4] sm:$0xf]
    %v4346 = vld [vmem:[%s4291 + $0xd8] sm:$0xf]
    %v4347 = vld [vmem:[%s4291 + $0xdc] sm:$0xf]
    %v4348 = vld [vmem:[%s4291 + $0xe0] sm:$0xf]
    %v4349 = vld [vmem:[%s4291 + $0xe4] sm:$0xf]
    %v4350 = vld [vmem:[%s4291 + $0xe8] sm:$0xf]
    %v4351 = vld [vmem:[%s4291 + $0xec] sm:$0xf]
    %v4352 = vld [vmem:[%s4291 + $0xf0] sm:$0xf]
    %v4353 = vld [vmem:[%s4291 + $0xf4] sm:$0xf]
    %v4354 = vld [vmem:[%s4291 + $0xf8] sm:$0xf]
    %v4355 = vld [vmem:[%s4291 + $0xfc] sm:$0xf]
    %v4420 = vunpack.c.l.b16 %v4292
    %v4421 = vunpack.c.l.b16 %v4293
    %v4422 = vunpack.c.l.b16 %v4294
    %v4423 = vunpack.c.l.b16 %v4295
    %v4424 = vunpack.c.l.b16 %v4296
    %v4425 = vunpack.c.l.b16 %v4297
    %v4426 = vunpack.c.l.b16 %v4298
    %v4427 = vunpack.c.l.b16 %v4299
    %v4428 = vunpack.c.l.b16 %v4300
    %v4429 = vunpack.c.l.b16 %v4301
    %v4430 = vunpack.c.l.b16 %v4302
    %v4431 = vunpack.c.l.b16 %v4303
    %v4432 = vunpack.c.l.b16 %v4304
    %v4433 = vunpack.c.l.b16 %v4305
    %v4434 = vunpack.c.l.b16 %v4306
    %v4435 = vunpack.c.l.b16 %v4307
    %v4436 = vunpack.c.l.b16 %v4308
    %v4437 = vunpack.c.l.b16 %v4309
    %v4438 = vunpack.c.l.b16 %v4310
    %v4439 = vunpack.c.l.b16 %v4311
    %v4440 = vunpack.c.l.b16 %v4312
    %v4441 = vunpack.c.l.b16 %v4313
    %v4442 = vunpack.c.l.b16 %v4314
    %v4443 = vunpack.c.l.b16 %v4315
    %v4444 = vunpack.c.l.b16 %v4316
    %v4445 = vunpack.c.l.b16 %v4317
    %v4446 = vunpack.c.l.b16 %v4318
    %v4447 = vunpack.c.l.b16 %v4319
    %v4448 = vunpack.c.l.b16 %v4320
    %v4449 = vunpack.c.l.b16 %v4321
    %v4450 = vunpack.c.l.b16 %v4322
    %v4451 = vunpack.c.l.b16 %v4323
    %v4452 = vunpack.c.l.b16 %v4324
    %v4453 = vunpack.c.l.b16 %v4325
    %v4454 = vunpack.c.l.b16 %v4326
    %v4455 = vunpack.c.l.b16 %v4327
    %v4456 = vunpack.c.l.b16 %v4328
    %v4457 = vunpack.c.l.b16 %v4329
    %v4458 = vunpack.c.l.b16 %v4330
    %v4459 = vunpack.c.l.b16 %v4331
    %v4460 = vunpack.c.l.b16 %v4332
    %v4461 = vunpack.c.l.b16 %v4333
    %v4462 = vunpack.c.l.b16 %v4334
    %v4463 = vunpack.c.l.b16 %v4335
    %v4464 = vunpack.c.l.b16 %v4336
    %v4465 = vunpack.c.l.b16 %v4337
    %v4466 = vunpack.c.l.b16 %v4338
    %v4467 = vunpack.c.l.b16 %v4339
    %v4468 = vunpack.c.l.b16 %v4340
    %v4469 = vunpack.c.l.b16 %v4341
    %v4470 = vunpack.c.l.b16 %v4342
    %v4471 = vunpack.c.l.b16 %v4343
    %v4472 = vunpack.c.l.b16 %v4344
    %v4473 = vunpack.c.l.b16 %v4345
    %v4474 = vunpack.c.l.b16 %v4346
    %v4475 = vunpack.c.l.b16 %v4347
    %v4476 = vunpack.c.l.b16 %v4348
    %v4477 = vunpack.c.l.b16 %v4349
    %v4478 = vunpack.c.l.b16 %v4350
    %v4479 = vunpack.c.l.b16 %v4351
    %v4480 = vunpack.c.l.b16 %v4352
    %v4481 = vunpack.c.l.b16 %v4353
    %v4482 = vunpack.c.l.b16 %v4354
    %v4483 = vunpack.c.l.b16 %v4355
    %v4484 = vpack.c.b16 %v4421, %v4420
    %v4485 = vpack.c.b16 %v4423, %v4422
    %v4486 = vpack.c.b16 %v4425, %v4424
    %v4487 = vpack.c.b16 %v4427, %v4426
    %v4488 = vpack.c.b16 %v4429, %v4428
    %v4489 = vpack.c.b16 %v4431, %v4430
    %v4490 = vpack.c.b16 %v4433, %v4432
    %v4491 = vpack.c.b16 %v4435, %v4434
    %v4492 = vpack.c.b16 %v4437, %v4436
    %v4493 = vpack.c.b16 %v4439, %v4438
    %v4494 = vpack.c.b16 %v4441, %v4440
    %v4495 = vpack.c.b16 %v4443, %v4442
    %v4496 = vpack.c.b16 %v4445, %v4444
    %v4497 = vpack.c.b16 %v4447, %v4446
    %v4498 = vpack.c.b16 %v4449, %v4448
    %v4499 = vpack.c.b16 %v4451, %v4450
    %v4500 = vpack.c.b16 %v4453, %v4452
    %v4501 = vpack.c.b16 %v4455, %v4454
    %v4502 = vpack.c.b16 %v4457, %v4456
    %v4503 = vpack.c.b16 %v4459, %v4458
    %v4504 = vpack.c.b16 %v4461, %v4460
    %v4505 = vpack.c.b16 %v4463, %v4462
    %v4506 = vpack.c.b16 %v4465, %v4464
    %v4507 = vpack.c.b16 %v4467, %v4466
    %v4508 = vpack.c.b16 %v4469, %v4468
    %v4509 = vpack.c.b16 %v4471, %v4470
    %v4510 = vpack.c.b16 %v4473, %v4472
    %v4511 = vpack.c.b16 %v4475, %v4474
    %v4512 = vpack.c.b16 %v4477, %v4476
    %v4513 = vpack.c.b16 %v4479, %v4478
    %v4514 = vpack.c.b16 %v4481, %v4480
    %v4515 = vpack.c.b16 %v4483, %v4482
    %4548 = vmatprep.subr.bf16.mxu0 0
    %4549 = vmatpush1.bf16.msra.mxu0 %v4484
    %4550 = vmatprep.subr.bf16.mxu0 0
    %4551 = vmatpush1.bf16.msra.mxu0 %v4485
    %4552 = vmatprep.subr.bf16.mxu0 0
    %4553 = vmatpush1.bf16.msra.mxu0 %v4486
    %4554 = vmatprep.subr.bf16.mxu0 0
    %4555 = vmatpush1.bf16.msra.mxu0 %v4487
    %4556 = vmatprep.subr.bf16.mxu0 0
    %4557 = vmatpush1.bf16.msra.mxu0 %v4488
    %4558 = vmatprep.subr.bf16.mxu0 0
    %4559 = vmatpush1.bf16.msra.mxu0 %v4489
    %4560 = vmatprep.subr.bf16.mxu0 0
    %4561 = vmatpush1.bf16.msra.mxu0 %v4490
    %4562 = vmatprep.subr.bf16.mxu0 0
    %4563 = vmatpush1.bf16.msra.mxu0 %v4491
    %4564 = vmatprep.subr.bf16.mxu0 0
    %4565 = vmatpush1.bf16.msra.mxu0 %v4492
    %4566 = vmatprep.subr.bf16.mxu0 0
    %4567 = vmatpush1.bf16.msra.mxu0 %v4493
    %4568 = vmatprep.subr.bf16.mxu0 0
    %4569 = vmatpush1.bf16.msra.mxu0 %v4494
    %4570 = vmatprep.subr.bf16.mxu0 0
    %4571 = vmatpush1.bf16.msra.mxu0 %v4495
    %4572 = vmatprep.subr.bf16.mxu0 0
    %4573 = vmatpush1.bf16.msra.mxu0 %v4496
    %4574 = vmatprep.subr.bf16.mxu0 0
    %4575 = vmatpush1.bf16.msra.mxu0 %v4497
    %4576 = vmatprep.subr.bf16.mxu0 0
    %4577 = vmatpush1.bf16.msra.mxu0 %v4498
    %4578 = vmatprep.subr.bf16.mxu0 0
    %4579 = vmatpush1.bf16.msra.mxu0 %v4499
    %4580 = vmatprep.mubr.bf16.mxu0 %v4284
    %4581 = vmatmul.mubr.bf16.gmra.mrb[0].mxu0 %v4283
    %v4582 = vpop.f32.mrb[0].mxu0
    %v4583 = vadd.f32 0.0, %v4582
    %v4584 = vpop.f32.mrb[0].mxu0
    %v4585 = vpop.f32.mrb[0].mxu0
    %v4586 = vadd.f32 0.0, %v4585
    %v4587 = vpop.f32.mrb[0].mxu0
    %4588 = vmatprep.mubr.bf16.mxu0 %v4288
    %4589 = vmatmul.mubr.bf16.gmra.mrb[0].mxu0 %v4287
    %v4590 = vpop.f32.mrb[0].mxu0
    %v4591 = vadd.f32 0.0, %v4590
    %v4592 = vpop.f32.mrb[0].mxu0
    %v4593 = vpop.f32.mrb[0].mxu0
    %v4594 = vadd.f32 0.0, %v4593
    %v4595 = vpop.f32.mrb[0].mxu0
    %4596 = vdwg.mxu0
    %4597 = vmatprep.subr.bf16.mxu0 0
    %4598 = vmatpush1.bf16.msra.mxu0 %v4500
    %4599 = vmatprep.subr.bf16.mxu0 0
    %4600 = vmatpush1.bf16.msra.mxu0 %v4501
    %4601 = vmatprep.subr.bf16.mxu0 0
    %4602 = vmatpush1.bf16.msra.mxu0 %v4502
    %4603 = vmatprep.subr.bf16.mxu0 0
    %4604 = vmatpush1.bf16.msra.mxu0 %v4503
    %4605 = vmatprep.subr.bf16.mxu0 0
    %4606 = vmatpush1.bf16.msra.mxu0 %v4504
    %4607 = vmatprep.subr.bf16.mxu0 0
    %4608 = vmatpush1.bf16.msra.mxu0 %v4505
    %4609 = vmatprep.subr.bf16.mxu0 0
    %4610 = vmatpush1.bf16.msra.mxu0 %v4506
    %4611 = vmatprep.subr.bf16.mxu0 0
    %4612 = vmatpush1.bf16.msra.mxu0 %v4507
    %4613 = vmatprep.subr.bf16.mxu0 0
    %4614 = vmatpush1.bf16.msra.mxu0 %v4508
    %4615 = vmatprep.subr.bf16.mxu0 0
    %4616 = vmatpush1.bf16.msra.mxu0 %v4509
    %4617 = vmatprep.subr.bf16.mxu0 0
    %4618 = vmatpush1.bf16.msra.mxu0 %v4510
    %4619 = vmatprep.subr.bf16.mxu0 0
    %4620 = vmatpush1.bf16.msra.mxu0 %v4511
    %4621 = vmatprep.subr.bf16.mxu0 0
    %4622 = vmatpush1.bf16.msra.mxu0 %v4512
    %4623 = vmatprep.subr.bf16.mxu0 0
    %4624 = vmatpush1.bf16.msra.mxu0 %v4513
    %4625 = vmatprep.subr.bf16.mxu0 0
    %4626 = vmatpush1.bf16.msra.mxu0 %v4514
    %4627 = vmatprep.subr.bf16.mxu0 0
    %4628 = vmatpush1.bf16.msra.mxu0 %v4515
    %4629 = vmatprep.mubr.bf16.mxu0 %v4286
    %4630 = vmatmul.mubr.bf16.gmra.mrb[0].mxu0 %v4285
    %v4631 = vpop.f32.mrb[0].mxu0
    %v4632 = vadd.f32 %v4583, %v4631
    %v4633 = vpop.f32.mrb[0].mxu0
    %v4634 = vpop.f32.mrb[0].mxu0
    %v4635 = vadd.f32 %v4586, %v4634
    %v4636 = vpop.f32.mrb[0].mxu0
    %4637 = vmatprep.mubr.bf16.mxu0 %v4290
    %4638 = vmatmul.mubr.bf16.gmra.mrb[0].mxu0 %v4289
    %v4639 = vpop.f32.mrb[0].mxu0
    %v4640 = vadd.f32 %v4591, %v4639
    %v4641 = vpop.f32.mrb[0].mxu0
    %v4642 = vpop.f32.mrb[0].mxu0
    %v4643 = vadd.f32 %v4594, %v4642
    %v4644 = vpop.f32.mrb[0].mxu0
    %4645 = vdwg.mxu0
    %v4646 = vadd.f32 %v3743, %v4632
    %v4647 = vadd.f32 %v3744, %v4635
    %v4648 = vadd.f32 %v3745, %v4640
    %v4649 = vadd.f32 %v3746, %v4643
    %s4650 = scalar_lea.vmem [#allocation19], 1
    %v4651 = vld [vmem:[%s4650] sm:$0x1]
    %v4653 = vlaneseq
    %v4654 = vshrl.u32 %v4653, 7
    %v4655 = vsub.s32 0, %v4654
    %v4656 = vrot.slane %v4651, %v4655
    %v4658 = vadd.f32 %v4646, %v4656
    %v4659 = vadd.f32 %v4647, %v4656
    %v4660 = vadd.f32 %v4648, %v4656
    %v4661 = vadd.f32 %v4649, %v4656
    %v4662 = vld [vmem:[#allocation20] sm:$0x1]
    %v4663 = vld [vmem:[#allocation22] sm:$0x1]
    %4664 = vadd.xlane.f32.xlu0 %v4658
    %v4665 = vpop.xlane.xlu0 %4664
    %4666 = vadd.xlane.f32.xlu0 %v4659
    %v4667 = vpop.xlane.xlu0 %4666
    %4668 = vadd.xlane.f32.xlu0 %v4660
    %v4669 = vpop.xlane.xlu0 %4668
    %4670 = vadd.xlane.f32.xlu0 %v4661
    %v4671 = vpop.xlane.xlu0 %4670
    %v4672 = vmul.f32 %v4665, %v296
    %v4673 = vmul.f32 %v4667, %v296
    %v4674 = vmul.f32 %v4669, %v296
    %v4675 = vmul.f32 %v4671, %v296
    %v4676 = vsub.f32 %v4658, %v4672
    %v4677 = vsub.f32 %v4659, %v4673
    %v4678 = vsub.f32 %v4660, %v4674
    %v4679 = vsub.f32 %v4661, %v4675
    %v4680 = vmul.f32 %v4676, %v4676
    %v4681 = vmul.f32 %v4677, %v4677
    %v4682 = vmul.f32 %v4678, %v4678
    %v4683 = vmul.f32 %v4679, %v4679
    %4684 = vadd.xlane.f32.xlu0 %v4680
    %v4685 = vpop.xlane.xlu0 %4684
    %4686 = vadd.xlane.f32.xlu0 %v4681
    %v4687 = vpop.xlane.xlu0 %4686
    %4688 = vadd.xlane.f32.xlu0 %v4682
    %v4689 = vpop.xlane.xlu0 %4688
    %4690 = vadd.xlane.f32.xlu0 %v4683
    %v4691 = vpop.xlane.xlu0 %4690
    %v4692 = vmul.f32 %v4685, %v296
    %v4693 = vmul.f32 %v4687, %v296
    %v4694 = vmul.f32 %v4689, %v296
    %v4695 = vmul.f32 %v4691, %v296
    %v4696 = vadd.f32 %v4692, 1e-05
    %v4697 = vadd.f32 %v4693, 1e-05
    %v4698 = vadd.f32 %v4694, 1e-05
    %v4699 = vadd.f32 %v4695, 1e-05
    %v4700 = vrsqrt.pop %v4696
    %v4701 = vrsqrt.pop %v4697
    %v4702 = vrsqrt.pop %v4698
    %v4703 = vrsqrt.pop %v4699
    %v4704 = vmul.f32 %v4676, %v4700
    %v4705 = vmul.f32 %v4677, %v4701
    %v4706 = vmul.f32 %v4678, %v4702
    %v4707 = vmul.f32 %v4679, %v4703
    %v4709 = vlaneseq
    %v4710 = vshrl.u32 %v4709, 7
    %v4711 = vsub.s32 0, %v4710
    %v4712 = vrot.slane %v4662, %v4711
    %v4714 = vmul.f32 %v4704, %v4712
    %v4715 = vmul.f32 %v4705, %v4712
    %v4716 = vmul.f32 %v4706, %v4712
    %v4717 = vmul.f32 %v4707, %v4712
    %v4719 = vlaneseq
    %v4720 = vshrl.u32 %v4719, 7
    %v4721 = vsub.s32 0, %v4720
    %v4722 = vrot.slane %v4663, %v4721
    %v4724 = vadd.f32 %v4714, %v4722
    %v4725 = vadd.f32 %v4715, %v4722
    %v4726 = vadd.f32 %v4716, %v4722
    %v4727 = vadd.f32 %v4717, %v4722
    %v4728 = vpack.c.bf16 %v4725, %v4724
    %v4729 = vpack.c.bf16 %v4727, %v4726
    %v4730 = vld [vmem:[%s18] sm:$0xf]
    %v4731 = vld [vmem:[%s18 + $0x4] sm:$0xf]
    %v4732 = vld [vmem:[%s18 + $0x8] sm:$0xf]
    %v4733 = vld [vmem:[%s18 + $0xc] sm:$0xf]
    %v4734 = vld [vmem:[%s18 + $0x10] sm:$0xf]
    %v4735 = vld [vmem:[%s18 + $0x14] sm:$0xf]
    %v4736 = vld [vmem:[%s18 + $0x18] sm:$0xf]
    %v4737 = vld [vmem:[%s18 + $0x1c] sm:$0xf]
    %v4738 = vld [vmem:[%s18 + $0x20] sm:$0xf]
    %v4739 = vld [vmem:[%s18 + $0x24] sm:$0xf]
    %v4740 = vld [vmem:[%s18 + $0x28] sm:$0xf]
    %v4741 = vld [vmem:[%s18 + $0x2c] sm:$0xf]
    %v4742 = vld [vmem:[%s18 + $0x30] sm:$0xf]
    %v4743 = vld [vmem:[%s18 + $0x34] sm:$0xf]
    %v4744 = vld [vmem:[%s18 + $0x38] sm:$0xf]
    %v4745 = vld [vmem:[%s18 + $0x3c] sm:$0xf]
    %v4746 = vld [vmem:[%s19] sm:$0x1]
    %v4748 = vlaneseq
    %v4749 = vshrl.u32 %v4748, 7
    %v4750 = vsub.s32 0, %v4749
    %v4751 = vrot.slane %v4746, %v4750
    %v4769 = vunpack.c.l.b16 %v4730
    %v4770 = vunpack.c.l.b16 %v4731
    %v4771 = vunpack.c.l.b16 %v4732
    %v4772 = vunpack.c.l.b16 %v4733
    %v4773 = vunpack.c.l.b16 %v4734
    %v4774 = vunpack.c.l.b16 %v4735
    %v4775 = vunpack.c.l.b16 %v4736
    %v4776 = vunpack.c.l.b16 %v4737
    %v4777 = vunpack.c.l.b16 %v4738
    %v4778 = vunpack.c.l.b16 %v4739
    %v4779 = vunpack.c.l.b16 %v4740
    %v4780 = vunpack.c.l.b16 %v4741
    %v4781 = vunpack.c.l.b16 %v4742
    %v4782 = vunpack.c.l.b16 %v4743
    %v4783 = vunpack.c.l.b16 %v4744
    %v4784 = vunpack.c.l.b16 %v4745
    %v4785 = vpack.c.b16 %v4770, %v4769
    %v4786 = vpack.c.b16 %v4772, %v4771
    %v4787 = vpack.c.b16 %v4774, %v4773
    %v4788 = vpack.c.b16 %v4776, %v4775
    %v4789 = vpack.c.b16 %v4778, %v4777
    %v4790 = vpack.c.b16 %v4780, %v4779
    %v4791 = vpack.c.b16 %v4782, %v4781
    %v4792 = vpack.c.b16 %v4784, %v4783
    %4801 = vmatprep.subr.bf16.mxu0 0
    %4802 = vmatpush1.bf16.msra.mxu0 %v4785
    %4803 = vmatprep.subr.bf16.mxu0 0
    %4804 = vmatpush1.bf16.msra.mxu0 %v4786
    %4805 = vmatprep.subr.bf16.mxu0 0
    %4806 = vmatpush1.bf16.msra.mxu0 %v4787
    %4807 = vmatprep.subr.bf16.mxu0 0
    %4808 = vmatpush1.bf16.msra.mxu0 %v4788
    %4809 = vmatprep.subr.bf16.mxu0 0
    %4810 = vmatpush1.bf16.msra.mxu0 %v4789
    %4811 = vmatprep.subr.bf16.mxu0 0
    %4812 = vmatpush1.bf16.msra.mxu0 %v4790
    %4813 = vmatprep.subr.bf16.mxu0 0
    %4814 = vmatpush1.bf16.msra.mxu0 %v4791
    %4815 = vmatprep.subr.bf16.mxu0 0
    %4816 = vmatpush1.bf16.msra.mxu0 %v4792
    %4817 = vmatprep.subr.bf16.mxu0 0
    %4818 = vmatpush1.bf16.msra.mxu0 0
    %4819 = vmatprep.subr.bf16.mxu0 0
    %4820 = vmatpush1.bf16.msra.mxu0 0
    %4821 = vmatprep.subr.bf16.mxu0 0
    %4822 = vmatpush1.bf16.msra.mxu0 0
    %4823 = vmatprep.subr.bf16.mxu0 0
    %4824 = vmatpush1.bf16.msra.mxu0 0
    %4825 = vmatprep.subr.bf16.mxu0 0
    %4826 = vmatpush1.bf16.msra.mxu0 0
    %4827 = vmatprep.subr.bf16.mxu0 0
    %4828 = vmatpush1.bf16.msra.mxu0 0
    %4829 = vmatprep.subr.bf16.mxu0 0
    %4830 = vmatpush1.bf16.msra.mxu0 0
    %4831 = vmatprep.subr.bf16.mxu0 0
    %4832 = vmatpush1.bf16.msra.mxu0 0
    %4833 = vmatprep.mubr.bf16.mxu0 0
    %4834 = vmatmul.mubr.bf16.gmra.mrb[0].mxu0 %v4728
    %v4835 = vpop.f32.mrb[0].mxu0
    %v4836 = vadd.f32 %v4751, %v4835
    %v4837 = vpop.f32.mrb[0].mxu0
    %v4838 = vpop.f32.mrb[0].mxu0
    %v4839 = vadd.f32 %v4751, %v4838
    %v4840 = vpop.f32.mrb[0].mxu0
    %4841 = vmatprep.mubr.bf16.mxu0 0
    %4842 = vmatmul.mubr.bf16.gmra.mrb[0].mxu0 %v4729
    %v4843 = vpop.f32.mrb[0].mxu0
    %v4844 = vadd.f32 %v4751, %v4843
    %v4845 = vpop.f32.mrb[0].mxu0
    %v4846 = vpop.f32.mrb[0].mxu0
    %v4847 = vadd.f32 %v4751, %v4846
    %v4848 = vpop.f32.mrb[0].mxu0
    %4849 = vdwg.mxu0
    %4850 = vst [vmem:[#allocation23] sm:$0xff] %v4836
    %4851 = vst [vmem:[#allocation23 + $0x8] sm:$0xff] %v4839
    %4852 = vst [vmem:[#allocation23 + $0x10] sm:$0xff] %v4844
    %4853 = vst [vmem:[#allocation23 + $0x18] sm:$0xff] %v4847
    // Predicated region
    $region134: #{tpu_custom_call.1} parent=1 // pred_check
      _
    $region135: #{tpu_custom_call.1} parent=1 // pred_check_branch
      %4855 = sbr.rel (0) target = $region137
    $region136: #{tpu_custom_call.1} parent=1 // pred_region
      %s4857 = ssub.s32 512, 512
      %4858 = vsyncadd [#allocation4], %s4857
      %s4859 = sshll.u32 [#allocation23], 4
      %s4860 = int_to_ptr.vmem [resolvable:$true] %s4859
      %4865 = dma.vmem_to_hbm [thread:$0]  %s4860, 512, %s20, [#allocation4], 128, 128, 8
    $region137: #{tpu_custom_call.1} parent=1 // pred_fallthru
      _
    // Predicated region
    $region138: #{tpu_custom_call.1} parent=1 // pred_check
      _
    $region139: #{tpu_custom_call.1} parent=1 // pred_check_branch
      %4867 = sbr.rel (0) target = $region141
    $region140: #{tpu_custom_call.1} parent=1 // pred_region
      %4868 = dma.done [#allocation4], 512
    $region141: #{tpu_custom_call.1} parent=1 // pred_fallthru
      _
    %4869 = vsyncpa [#allocation3], 1
    %4870 = vsyncpa [#allocation6], 1
    %4871 = vsyncpa [#allocation9], 1
    %4872 = vsyncpa [#allocation12], 1
    %4873 = vsyncpa [#allocation15], 1
    %4874 = vsyncpa [#allocation18], 1
    %4875 = vsyncpa [#allocation21], 1
    %4876 = vsyncpa [#allocation4], 1

</llo_original>
